<compile_context>
chip_gen: v6e
topology: v6e:2x2x1
jax: 0.10.0
libtpu: 0.0.40
codegen_flags: <defaults>
</compile_context>

<pallas_src>
import functools

import jax
import jax.numpy as jnp
import numpy as np
from jax import lax
from jax.experimental import pallas as pl
from jax.experimental.pallas import tpu as pltpu

_EPS = 1e-5

# Static Binarynet geometry: 49x49 input -> conv1(k7,s3) 15x15x8 -> conv2(k7,s2) 5x5x16.
_K1, _S1, _OH1 = 7, 3, 15
_K2, _S2, _OH2 = 7, 2, 5
_C_IN, _C1, _C2 = 3, 8, 16
_PATCH1 = _C_IN * _K1 * _K1            # 147 features per conv1 patch (c, ky, kx)
_ROWK = _OH1 * _PATCH1                 # 2205 = one conv1 output row's worth of patches
_ROWN = _OH1 * _C1                     # 120  = one conv1 output row (x, c)
_FLAT1 = _OH1 * _ROWN                  # 1800 = whole conv1 output map, flattened (y, x, c)
_FLAT2 = _OH2 * _OH2 * _C2             # 400  = conv2 output, lanes ordered (s, oc)
_HID, _OUT = 60, 2


# --------------------------------------------------------------------------
# Fused Pallas kernel: conv1 -> ReLU -> (BN1 folded fwd) -> conv2 -> ReLU ->
#                      (BN2 folded fwd) -> fc1 -> ReLU -> Dropout(eval) -> fc2
# --------------------------------------------------------------------------
def _binarynet_kernel(x1_ref, w1_ref, b1_ref, w2_ref, b2_ref,
                      fw1_ref, fb1_ref, fw2_ref, fb2_ref, o_ref):
    tb = x1_ref.shape[0]
    w1 = w1_ref[...]                                   # (2205, 120) bf16 block-diag conv1
    b1 = b1_ref[...]                                   # (1, 120) f32

    # ---- stage 1: conv1 + bias + ReLU, one lane-dense matmul per image ----
    # x1_ref[bb] row y holds the 15 conv1 patches of output row y; the block-diagonal
    # weight maps them to that row's 15*8 conv1 outputs, so the matmul result is already
    # in the (y-sublane, x*8+c-lane) layout the conv2 matmul consumes.
    rows = []
    for bb in range(tb):
        r1 = jnp.dot(x1_ref[bb], w1, preferred_element_type=jnp.float32)
        r1 = jnp.maximum(r1 + b1, 0.0)                 # (15, 120) f32 epilogue
        # flatten the 15 rows into one 1800-lane row for this image
        rows.append(jnp.concatenate([r1[y:y + 1, :] for y in range(_OH1)], axis=1))
    x2 = jnp.concatenate(rows, axis=0).astype(jnp.bfloat16)        # (tb, 1800)

    # ---- stage 2: conv2 + bias + ReLU as ONE matmul (im2col folded into the weight) ----
    a2 = jnp.dot(x2, w2_ref[...], preferred_element_type=jnp.float32)
    a2 = jnp.maximum(a2 + b2_ref[...], 0.0)            # (tb, 400), lanes (s, oc)

    # ---- stage 3: fc1 (BN2 folded, rows permuted to (s, oc)) + ReLU ----
    # TODO(synk): Dropout(0.5) is identity in eval mode; train-mode masking not implemented.
    h = jnp.dot(a2.astype(jnp.bfloat16), fw1_ref[...], preferred_element_type=jnp.float32)
    h = jnp.maximum(h + fb1_ref[...], 0.0)             # (tb, 60)

    # ---- stage 4: fc2 ----
    o = jnp.dot(h.astype(jnp.bfloat16), fw2_ref[...],
                preferred_element_type=jnp.float32) + fb2_ref[...]  # (tb, 2)
    for bb in range(tb):
        o_ref[bb] = o[bb:bb + 1, :]


# --------------------------------------------------------------------------
# Host-side glue: patches, BN folds, single-matmul weight layouts
# --------------------------------------------------------------------------
@functools.lru_cache(maxsize=None)
def _conv2_scatter_mask():
    """Constant 0/1 mask M[y, x, ky, kx, s]: conv1 output (y, x) feeds conv2 output
    s = oy*5 + ox through kernel tap (ky, kx)."""
    m = np.zeros((_OH1, _OH1, _K2, _K2, _OH2 * _OH2), np.float32)
    for oy in range(_OH2):
        for ox in range(_OH2):
            for ky in range(_K2):
                for kx in range(_K2):
                    m[_S2 * oy + ky, _S2 * ox + kx, ky, kx, oy * _OH2 + ox] = 1.0
    return m


@functools.partial(jax.jit, static_argnames=("tb",))
def binarynet_forward(x, p, tb=1):
    B = x.shape[0]
    assert B % tb == 0, "batch must be divisible by the batch-tile size"

    # ---- im2col (pure data movement): unique conv1 patches only, feature = (c,ky,kx) ----
    patches = lax.conv_general_dilated_patches(
        x, (_K1, _K1), (_S1, _S1), "VALID")            # (B, 147, 15, 15)
    x1 = patches.transpose(0, 2, 3, 1).reshape(B, _OH1, _ROWK).astype(jnp.bfloat16)

    # ---- eval-mode BN folds: BN1 -> conv2, BN2 -> fc1 ----
    s1 = p["g1"] * lax.rsqrt(p["v1"] + _EPS)
    t1 = p["be1"] - p["m1"] * s1
    w2f = p["w2"] * s1[None, :, None, None]                        # (16, 8, 7, 7)
    b2f = p["b2"] + jnp.einsum("ocij,c->o", p["w2"], t1)

    s2 = p["g2"] * lax.rsqrt(p["v2"] + _EPS)
    t2 = p["be2"] - p["m2"] * s2
    oc_of_feat = jnp.repeat(jnp.arange(_C2), _OH2 * _OH2)          # torch flatten: (oc, s)
    fw1f = p["fw1"] * s2[oc_of_feat][:, None]                      # (400, 60)
    fb1f = p["fb1"] + t2[oc_of_feat] @ p["fw1"]
    fw1p = fw1f.reshape(_C2, _OH2 * _OH2, _HID).transpose(1, 0, 2).reshape(_FLAT2, _HID)

    # ---- conv weights in the single-matmul layouts the kernel consumes ----
    w1m = p["w1"].reshape(_C1, _PATCH1).T                          # (147, 8)
    w1blk = jnp.einsum("xz,fc->xfzc", jnp.eye(_OH1, dtype=jnp.float32),
                       w1m).reshape(_ROWK, _ROWN)                  # block-diag (2205, 120)
    b1tile = jnp.tile(p["b1"], _OH1).reshape(1, _ROWN)

    w2big = jnp.einsum("yxuvs,ocuv->yxcso", _conv2_scatter_mask(),
                       w2f).reshape(_FLAT1, _FLAT2)                # (1800, 400)
    b2tile = jnp.tile(b2f, _OH2 * _OH2).reshape(1, _FLAT2)

    flops = 2 * B * (_OH1 * _ROWK * _ROWN + _FLAT1 * _FLAT2 + _FLAT2 * _HID + _HID * _OUT)
    bytes_accessed = (x1.size * 2
                      + (_ROWK * _ROWN + _FLAT1 * _FLAT2 + _FLAT2 * _HID + _HID * _OUT) * 2
                      + (_ROWN + _FLAT2 + _HID + _OUT) * 4
                      + B * _OUT * 4)

    out = pl.pallas_call(
        _binarynet_kernel,
        out_shape=jax.ShapeDtypeStruct((B, 1, _OUT), jnp.float32),
        grid=(B // tb,),
        in_specs=[
            pl.BlockSpec((tb, _OH1, _ROWK), lambda i: (i, 0, 0)),    # per-tile patches
            pl.BlockSpec((_ROWK, _ROWN), lambda i: (0, 0)),          # conv1 block-diag w
            pl.BlockSpec((1, _ROWN), lambda i: (0, 0)),              # conv1 bias (tiled)
            pl.BlockSpec((_FLAT1, _FLAT2), lambda i: (0, 0)),        # conv2 big w
            pl.BlockSpec((1, _FLAT2), lambda i: (0, 0)),             # conv2 bias (tiled)
            pl.BlockSpec((_FLAT2, _HID), lambda i: (0, 0)),          # fc1 w (permuted)
            pl.BlockSpec((1, _HID), lambda i: (0, 0)),               # fc1 bias
            pl.BlockSpec((_HID, _OUT), lambda i: (0, 0)),            # fc2 w
            pl.BlockSpec((1, _OUT), lambda i: (0, 0)),               # fc2 bias
        ],
        out_specs=pl.BlockSpec((tb, 1, _OUT), lambda i: (i, 0, 0)),
        compiler_params=pltpu.CompilerParams(
            dimension_semantics=("parallel",),
            vmem_limit_bytes=32 * 1024 * 1024),
        cost_estimate=pl.CostEstimate(flops=flops, transcendentals=0,
                                      bytes_accessed=bytes_accessed),
    )(x1,
      w1blk.astype(jnp.bfloat16), b1tile,
      w2big.astype(jnp.bfloat16), b2tile,
      fw1p.astype(jnp.bfloat16), fb1f.reshape(1, _HID),
      p["fw2"].astype(jnp.bfloat16), p["fb2"].reshape(1, _OUT))
    return out.reshape(B, _OUT)


# --------------------------------------------------------------------------
# Pure-JAX reference (numerical check)
# --------------------------------------------------------------------------
def binarynet_reference(x, p):
    def stage(x, w, b, g, be, m, v, stride):
        y = lax.conv_general_dilated(
            x, w, (stride, stride), "VALID",
            dimension_numbers=("NCHW", "OIHW", "NCHW"))
        y = jnp.maximum(y + b[None, :, None, None], 0.0)
        s = g / jnp.sqrt(v + _EPS)
        t = be - m * s
        return y * s[None, :, None, None] + t[None, :, None, None]

    x = stage(x, p["w1"], p["b1"], p["g1"], p["be1"], p["m1"], p["v1"], _S1)
    x = stage(x, p["w2"], p["b2"], p["g2"], p["be2"], p["m2"], p["v2"], _S2)
    x = x.reshape(x.shape[0], -1)
    h = jnp.maximum(x @ p["fw1"] + p["fb1"], 0.0)
    return h @ p["fw2"] + p["fb2"]


# --------------------------------------------------------------------------
# Deterministic parameter init + run
# --------------------------------------------------------------------------
def make_params(key):
    ks = jax.random.split(key, 12)
    p = {
        # conv1: Conv2d(3, 8, 7)
        "w1": 0.05 * jax.random.normal(ks[0], (8, 3, 7, 7), jnp.float32),
        "b1": 0.05 * jax.random.normal(ks[1], (8,), jnp.float32),
        "g1": 1.0 + 0.1 * jax.random.normal(ks[2], (8,), jnp.float32),
        "be1": 0.1 * jax.random.normal(ks[3], (8,), jnp.float32),
        "m1": 0.1 * jax.random.normal(ks[4], (8,), jnp.float32),
        "v1": 1.0 + 0.1 * jnp.abs(jax.random.normal(ks[5], (8,), jnp.float32)),
        # conv2: Conv2d(8, 16, 7)
        "w2": 0.05 * jax.random.normal(ks[6], (16, 8, 7, 7), jnp.float32),
        "b2": 0.05 * jax.random.normal(ks[7], (16,), jnp.float32),
        "g2": 1.0 + 0.1 * jax.random.normal(ks[8], (16,), jnp.float32),
        "be2": 0.1 * jax.random.normal(ks[9], (16,), jnp.float32),
        "m2": 0.1 * jax.random.normal(ks[10], (16,), jnp.float32),
        "v2": 1.0 + 0.1 * jnp.abs(jax.random.normal(ks[11], (16,), jnp.float32)),
    }
    kf = jax.random.split(jax.random.fold_in(key, 99), 4)
    p.update({
        # fc: Linear(400, 60), Linear(60, 2) — stored as (in, out)
        "fw1": 0.05 * jax.random.normal(kf[0], (16 * 5 * 5, 60), jnp.float32),
        "fb1": 0.05 * jax.random.normal(kf[1], (60,), jnp.float32),
        "fw2": 0.05 * jax.random.normal(kf[2], (60, 2), jnp.float32),
        "fb2": 0.05 * jax.random.normal(kf[3], (2,), jnp.float32),
    })
    return p


if __name__ == "__main__":
    key = jax.random.PRNGKey(0)
    params = make_params(key)

    # Input spatial size must be 49x49 so conv output is 16x5x5 = 400 (fc input).
    x = jax.random.normal(jax.random.fold_in(key, 7), (2, 3, 49, 49), jnp.float32)

    out = jax.block_until_ready(binarynet_forward(x, params, tb=1))
    assert out.shape == (2, 2), out.shape

    ref = jax.block_until_ready(binarynet_reference(x, params))
    np.testing.assert_allclose(np.asarray(out), np.asarray(ref), rtol=3e-2, atol=3e-2)

    print("KERNEL_OK")
</pallas_src>

<mosaic_0001>
module attributes {stable_mosaic.version = 11 : i64} {
  func.func @_binarynet_kernel(%arg0: i32, %arg1: memref<1x15x2205xbf16, #tpu.memory_space<vmem>>, %arg2: memref<2205x120xbf16, #tpu.memory_space<vmem>>, %arg3: memref<1x120xf32, #tpu.memory_space<vmem>>, %arg4: memref<1800x400xbf16, #tpu.memory_space<vmem>>, %arg5: memref<1x400xf32, #tpu.memory_space<vmem>>, %arg6: memref<400x60xbf16, #tpu.memory_space<vmem>>, %arg7: memref<1x60xf32, #tpu.memory_space<vmem>>, %arg8: memref<60x2xbf16, #tpu.memory_space<vmem>>, %arg9: memref<1x2xf32, #tpu.memory_space<vmem>>, %arg10: memref<1x1x2xf32, #tpu.memory_space<vmem>>) attributes {dimension_semantics = [#tpu.dimension_semantics<parallel>], iteration_bounds = array<i64: 2>, scalar_prefetch = 0 : i64, scratch_operands = 0 : i64, tpu.core_type = #tpu.core_type<tc>, window_params = [{transform_indices = @transform_0, window_bounds = array<i64: 1, 15, 2205>}, {pipeline_mode = #tpu.pipeline_mode<synchronous>, transform_indices = @transform_1, window_bounds = array<i64: 2205, 120>}, {pipeline_mode = #tpu.pipeline_mode<synchronous>, transform_indices = @transform_2, window_bounds = array<i64: 1, 120>}, {pipeline_mode = #tpu.pipeline_mode<synchronous>, transform_indices = @transform_3, window_bounds = array<i64: 1800, 400>}, {pipeline_mode = #tpu.pipeline_mode<synchronous>, transform_indices = @transform_4, window_bounds = array<i64: 1, 400>}, {pipeline_mode = #tpu.pipeline_mode<synchronous>, transform_indices = @transform_5, window_bounds = array<i64: 400, 60>}, {pipeline_mode = #tpu.pipeline_mode<synchronous>, transform_indices = @transform_6, window_bounds = array<i64: 1, 60>}, {pipeline_mode = #tpu.pipeline_mode<synchronous>, transform_indices = @transform_7, window_bounds = array<i64: 60, 2>}, {pipeline_mode = #tpu.pipeline_mode<synchronous>, transform_indices = @transform_8, window_bounds = array<i64: 1, 2>}, {transform_indices = @transform_9, window_bounds = array<i64: 1, 1, 2>}]} {
    %c0 = arith.constant 0 : index
    %c0_0 = arith.constant 0 : index
    %0 = vector.load %arg2[%c0, %c0_0] : memref<2205x120xbf16, #tpu.memory_space<vmem>>, vector<2205x120xbf16>
    %c0_1 = arith.constant 0 : index
    %c0_2 = arith.constant 0 : index
    %1 = vector.load %arg3[%c0_1, %c0_2] : memref<1x120xf32, #tpu.memory_space<vmem>>, vector<1x120xf32>
    %c0_3 = arith.constant 0 : index
    %c0_4 = arith.constant 0 : index
    %c0_5 = arith.constant 0 : index
    %2 = vector.load %arg1[%c0_3, %c0_4, %c0_5] : memref<1x15x2205xbf16, #tpu.memory_space<vmem>>, vector<1x15x2205xbf16>
    %3 = vector.shape_cast %2 : vector<1x15x2205xbf16> to vector<15x2205xbf16>
    %cst = arith.constant dense<0.000000e+00> : vector<15x120xf32>
    %4 = tpu.matmul %3, %0, %cst {dimension_numbers = #tpu.dot_dimension_numbers<[1], [0], [0], [1], [0, 0, 1, 1], [], []>} : vector<15x2205xbf16>, vector<2205x120xbf16>, vector<15x120xf32> -> vector<15x120xf32>
    %5 = vector.broadcast %1 : vector<1x120xf32> to vector<15x120xf32>
    %6 = arith.addf %4, %5 : vector<15x120xf32>
    %cst_6 = arith.constant 0.000000e+00 : f32
    %7 = vector.broadcast %cst_6 : f32 to vector<15x120xf32>
    %8 = arith.maximumf %6, %7 : vector<15x120xf32>
    %9 = vector.extract_strided_slice %8 {offsets = [0, 0], sizes = [1, 120], strides = [1, 1]} : vector<15x120xf32> to vector<1x120xf32>
    %10 = vector.extract_strided_slice %8 {offsets = [1, 0], sizes = [1, 120], strides = [1, 1]} : vector<15x120xf32> to vector<1x120xf32>
    %11 = vector.extract_strided_slice %8 {offsets = [2, 0], sizes = [1, 120], strides = [1, 1]} : vector<15x120xf32> to vector<1x120xf32>
    %12 = vector.extract_strided_slice %8 {offsets = [3, 0], sizes = [1, 120], strides = [1, 1]} : vector<15x120xf32> to vector<1x120xf32>
    %13 = vector.extract_strided_slice %8 {offsets = [4, 0], sizes = [1, 120], strides = [1, 1]} : vector<15x120xf32> to vector<1x120xf32>
    %14 = vector.extract_strided_slice %8 {offsets = [5, 0], sizes = [1, 120], strides = [1, 1]} : vector<15x120xf32> to vector<1x120xf32>
    %15 = vector.extract_strided_slice %8 {offsets = [6, 0], sizes = [1, 120], strides = [1, 1]} : vector<15x120xf32> to vector<1x120xf32>
    %16 = vector.extract_strided_slice %8 {offsets = [7, 0], sizes = [1, 120], strides = [1, 1]} : vector<15x120xf32> to vector<1x120xf32>
    %17 = vector.extract_strided_slice %8 {offsets = [8, 0], sizes = [1, 120], strides = [1, 1]} : vector<15x120xf32> to vector<1x120xf32>
    %18 = vector.extract_strided_slice %8 {offsets = [9, 0], sizes = [1, 120], strides = [1, 1]} : vector<15x120xf32> to vector<1x120xf32>
    %19 = vector.extract_strided_slice %8 {offsets = [10, 0], sizes = [1, 120], strides = [1, 1]} : vector<15x120xf32> to vector<1x120xf32>
    %20 = vector.extract_strided_slice %8 {offsets = [11, 0], sizes = [1, 120], strides = [1, 1]} : vector<15x120xf32> to vector<1x120xf32>
    %21 = vector.extract_strided_slice %8 {offsets = [12, 0], sizes = [1, 120], strides = [1, 1]} : vector<15x120xf32> to vector<1x120xf32>
    %22 = vector.extract_strided_slice %8 {offsets = [13, 0], sizes = [1, 120], strides = [1, 1]} : vector<15x120xf32> to vector<1x120xf32>
    %23 = vector.extract_strided_slice %8 {offsets = [14, 0], sizes = [1, 120], strides = [1, 1]} : vector<15x120xf32> to vector<1x120xf32>
    %24 = tpu.concatenate %9, %10, %11, %12, %13, %14, %15, %16, %17, %18, %19, %20, %21, %22, %23 in 1 : vector<1x120xf32>, vector<1x120xf32>, vector<1x120xf32>, vector<1x120xf32>, vector<1x120xf32>, vector<1x120xf32>, vector<1x120xf32>, vector<1x120xf32>, vector<1x120xf32>, vector<1x120xf32>, vector<1x120xf32>, vector<1x120xf32>, vector<1x120xf32>, vector<1x120xf32>, vector<1x120xf32> -> vector<1x1800xf32>
    %25 = arith.truncf %24 : vector<1x1800xf32> to vector<1x1800xbf16>
    %c0_7 = arith.constant 0 : index
    %c0_8 = arith.constant 0 : index
    %26 = vector.load %arg4[%c0_7, %c0_8] : memref<1800x400xbf16, #tpu.memory_space<vmem>>, vector<1800x400xbf16>
    %cst_9 = arith.constant dense<0.000000e+00> : vector<1x400xf32>
    %27 = tpu.matmul %25, %26, %cst_9 {dimension_numbers = #tpu.dot_dimension_numbers<[1], [0], [0], [1], [0, 0, 1, 1], [], []>} : vector<1x1800xbf16>, vector<1800x400xbf16>, vector<1x400xf32> -> vector<1x400xf32>
    %c0_10 = arith.constant 0 : index
    %c0_11 = arith.constant 0 : index
    %28 = vector.load %arg5[%c0_10, %c0_11] : memref<1x400xf32, #tpu.memory_space<vmem>>, vector<1x400xf32>
    %29 = arith.addf %27, %28 : vector<1x400xf32>
    %cst_12 = arith.constant 0.000000e+00 : f32
    %30 = vector.broadcast %cst_12 : f32 to vector<1x400xf32>
    %31 = arith.maximumf %29, %30 : vector<1x400xf32>
    %32 = arith.truncf %31 : vector<1x400xf32> to vector<1x400xbf16>
    %c0_13 = arith.constant 0 : index
    %c0_14 = arith.constant 0 : index
    %33 = vector.load %arg6[%c0_13, %c0_14] : memref<400x60xbf16, #tpu.memory_space<vmem>>, vector<400x60xbf16>
    %cst_15 = arith.constant dense<0.000000e+00> : vector<1x60xf32>
    %34 = tpu.matmul %32, %33, %cst_15 {dimension_numbers = #tpu.dot_dimension_numbers<[1], [0], [0], [1], [0, 0, 1, 1], [], []>} : vector<1x400xbf16>, vector<400x60xbf16>, vector<1x60xf32> -> vector<1x60xf32>
    %c0_16 = arith.constant 0 : index
    %c0_17 = arith.constant 0 : index
    %35 = vector.load %arg7[%c0_16, %c0_17] : memref<1x60xf32, #tpu.memory_space<vmem>>, vector<1x60xf32>
    %36 = arith.addf %34, %35 : vector<1x60xf32>
    %cst_18 = arith.constant 0.000000e+00 : f32
    %37 = vector.broadcast %cst_18 : f32 to vector<1x60xf32>
    %38 = arith.maximumf %36, %37 : vector<1x60xf32>
    %39 = arith.truncf %38 : vector<1x60xf32> to vector<1x60xbf16>
    %c0_19 = arith.constant 0 : index
    %c0_20 = arith.constant 0 : index
    %40 = vector.load %arg8[%c0_19, %c0_20] : memref<60x2xbf16, #tpu.memory_space<vmem>>, vector<60x2xbf16>
    %cst_21 = arith.constant dense<0.000000e+00> : vector<1x2xf32>
    %41 = tpu.matmul %39, %40, %cst_21 {dimension_numbers = #tpu.dot_dimension_numbers<[1], [0], [0], [1], [0, 0, 1, 1], [], []>} : vector<1x60xbf16>, vector<60x2xbf16>, vector<1x2xf32> -> vector<1x2xf32>
    %c0_22 = arith.constant 0 : index
    %c0_23 = arith.constant 0 : index
    %42 = vector.load %arg9[%c0_22, %c0_23] : memref<1x2xf32, #tpu.memory_space<vmem>>, vector<1x2xf32>
    %43 = arith.addf %41, %42 : vector<1x2xf32>
    %c0_24 = arith.constant 0 : index
    %c0_25 = arith.constant 0 : index
    %c0_26 = arith.constant 0 : index
    %44 = vector.load %arg10[%c0_24, %c0_25, %c0_26] : memref<1x1x2xf32, #tpu.memory_space<vmem>>, vector<1x1x2xf32>
    %45 = vector.shape_cast %44 : vector<1x1x2xf32> to vector<1x2xf32>
    %46 = vector.shape_cast %43 : vector<1x2xf32> to vector<1x1x2xf32>
    tpu.vector_store %arg10[%c0_24, %c0_25, %c0_26], %46 {strides = array<i32>} : memref<1x1x2xf32, #tpu.memory_space<vmem>>, vector<1x1x2xf32>,
    return
  }
  func.func @transform_0(%arg0: i32) -> (i32, i32, i32) {
    %c0_i32 = arith.constant 0 : i32
    %c0_i32_0 = arith.constant 0 : i32
    %c0_i32_1 = arith.constant 0 : i32
    return %arg0, %c0_i32, %c0_i32_0 : i32, i32, i32
  }
  func.func @transform_1(%arg0: i32) -> (i32, i32) {
    %c0_i32 = arith.constant 0 : i32
    %c0_i32_0 = arith.constant 0 : i32
    %c0_i32_1 = arith.constant 0 : i32
    return %c0_i32, %c0_i32_0 : i32, i32
  }
  func.func @transform_2(%arg0: i32) -> (i32, i32) {
    %c0_i32 = arith.constant 0 : i32
    %c0_i32_0 = arith.constant 0 : i32
    %c0_i32_1 = arith.constant 0 : i32
    return %c0_i32, %c0_i32_0 : i32, i32
  }
  func.func @transform_3(%arg0: i32) -> (i32, i32) {
    %c0_i32 = arith.constant 0 : i32
    %c0_i32_0 = arith.constant 0 : i32
    %c0_i32_1 = arith.constant 0 : i32
    return %c0_i32, %c0_i32_0 : i32, i32
  }
  func.func @transform_4(%arg0: i32) -> (i32, i32) {
    %c0_i32 = arith.constant 0 : i32
    %c0_i32_0 = arith.constant 0 : i32
    %c0_i32_1 = arith.constant 0 : i32
    return %c0_i32, %c0_i32_0 : i32, i32
  }
  func.func @transform_5(%arg0: i32) -> (i32, i32) {
    %c0_i32 = arith.constant 0 : i32
    %c0_i32_0 = arith.constant 0 : i32
    %c0_i32_1 = arith.constant 0 : i32
    return %c0_i32, %c0_i32_0 : i32, i32
  }
  func.func @transform_6(%arg0: i32) -> (i32, i32) {
    %c0_i32 = arith.constant 0 : i32
    %c0_i32_0 = arith.constant 0 : i32
    %c0_i32_1 = arith.constant 0 : i32
    return %c0_i32, %c0_i32_0 : i32, i32
  }
  func.func @transform_7(%arg0: i32) -> (i32, i32) {
    %c0_i32 = arith.constant 0 : i32
    %c0_i32_0 = arith.constant 0 : i32
    %c0_i32_1 = arith.constant 0 : i32
    return %c0_i32, %c0_i32_0 : i32, i32
  }
  func.func @transform_8(%arg0: i32) -> (i32, i32) {
    %c0_i32 = arith.constant 0 : i32
    %c0_i32_0 = arith.constant 0 : i32
    %c0_i32_1 = arith.constant 0 : i32
    return %c0_i32, %c0_i32_0 : i32, i32
  }
  func.func @transform_9(%arg0: i32) -> (i32, i32, i32) {
    %c0_i32 = arith.constant 0 : i32
    %c0_i32_0 = arith.constant 0 : i32
    %c0_i32_1 = arith.constant 0 : i32
    return %arg0, %c0_i32, %c0_i32_0 : i32, i32, i32
  }
}

</mosaic_0001>

<llo_original>
// kernel: tile.18
$region0: #{tile.18}
  #allocation0 [shape = 's32[1]{0}', space=sflag, size = 0x4, scoped, tag = 'scoped memory for tile.18']
  %s0 = inlined_call_operand.vmem [shape: f32[16], index: 0, kind: input, shape index: {}]
  %s1 = inlined_call_operand.vmem [shape: f32[25,16], index: 1, kind: output, shape index: {}]
  // Predicated region
  $region2: #{tile.18} parent=0 // pred_check
    _
  $region3: #{tile.18} parent=0 // pred_check_branch
    %3 = sbr.rel (0) target = $region5
  $region4: #{tile.18} parent=0 // pred_region
    _
  $region5: #{tile.18} parent=0 // pred_fallthru
    _
  %v4 = vld [vmem:[%s0] ss:$0 sm:$0xff]
  %5 = vst [vmem:[%s1] sm:$0xff] %v4
  %s6 = scalar_lea.vmem %s1, 8
  %7 = vst [vmem:[%s6] sm:$0xff] %v4
  %s8 = scalar_lea.vmem %s1, 16
  %9 = vst [vmem:[%s8] sm:$0xff] %v4
  %s10 = scalar_lea.vmem %s1, 24
  %11 = vst [vmem:[%s10] sm:$0xff] %v4

// kernel: tile.19
$region0: #{tile.19}
  %s0 = inlined_call_operand.vmem [shape: f32[25,16], index: 0, kind: input, shape index: {}]
  %s1 = inlined_call_operand.vmem [shape: f32[1,400], index: 1, kind: output, shape index: {}]
  $region1: #{tile.19} parent=0
    #allocation0 [shape = 'u8[16384]{0}', space=vmem, size = 0x4000, scoped, tag = 'scoped mem for output reshape']
    %v2 = vld [vmem:[%s0] ss:$8 sm:$0xf]
    %vm3 = vcmask 130048
    %4 = vst.msk [vmem:[#allocation0] ss:$8 sm:$0xf] %vm3, %v2
    %s5 = scalar_lea.vmem %s0, 7
    %v6 = vld [vmem:[%s5] ss:$8 sm:$0x7]
    %7 = vrot.lane.b32.xlu0 %v6, 112
    %v8 = vpop.permute.xlu0 %7
    %vm9 = vcmask 1048448
    %10 = vst.msk [vmem:[#allocation0] ss:$8 sm:$0x7] %vm9, %v8
    %s11 = scalar_lea.vmem %s0, 6
    %v12 = vld [vmem:[%s11] ss:$8 sm:$0x7]
    %13 = vrot.lane.b32.xlu0 %v12, 96
    %v14 = vpop.permute.xlu0 %13
    %vm15 = vcmask 917248
    %16 = vst.msk [vmem:[#allocation0] ss:$8 sm:$0x7] %vm15, %v14
    %s17 = scalar_lea.vmem %s0, 5
    %v18 = vld [vmem:[%s17] ss:$8 sm:$0x7]
    %19 = vrot.lane.b32.xlu0 %v18, 80
    %v20 = vpop.permute.xlu0 %19
    %vm21 = vcmask 786048
    %22 = vst.msk [vmem:[#allocation0] ss:$8 sm:$0x7] %vm21, %v20
    %s23 = scalar_lea.vmem %s0, 4
    %v24 = vld [vmem:[%s23] ss:$8 sm:$0x7]
    %25 = vrot.lane.b32.xlu0 %v24, 64
    %v26 = vpop.permute.xlu0 %25
    %vm27 = vcmask 654848
    %28 = vst.msk [vmem:[#allocation0] ss:$8 sm:$0x7] %vm27, %v26
    %s29 = scalar_lea.vmem %s0, 3
    %v30 = vld [vmem:[%s29] ss:$8 sm:$0x7]
    %31 = vrot.lane.b32.xlu0 %v30, 48
    %v32 = vpop.permute.xlu0 %31
    %vm33 = vcmask 523648
    %34 = vst.msk [vmem:[#allocation0] ss:$8 sm:$0x7] %vm33, %v32
    %s35 = scalar_lea.vmem %s0, 2
    %v36 = vld [vmem:[%s35] ss:$8 sm:$0x7]
    %37 = vrot.lane.b32.xlu0 %v36, 32
    %v38 = vpop.permute.xlu0 %37
    %vm39 = vcmask 392448
    %40 = vst.msk [vmem:[#allocation0] ss:$8 sm:$0x7] %vm39, %v38
    %s41 = scalar_lea.vmem %s0, 1
    %v42 = vld [vmem:[%s41] ss:$8 sm:$0x7]
    %43 = vrot.lane.b32.xlu0 %v42, 16
    %v44 = vpop.permute.xlu0 %43
    %vm45 = vcmask 261248
    %46 = vst.msk [vmem:[#allocation0] ss:$8 sm:$0x7] %vm45, %v44
    %s48 = sshll.u32 1, 1
    %s49 = ssub.s32 %s48, 1
    %v51 = vld [vmem:[#allocation0] sm:%s49]
    %s52 = sshll.u32 1, 1
    %s53 = ssub.s32 %s52, 1
    %54 = vst [vmem:[%s1] sm:%s53] %v51
    %s55 = scalar_lea.vmem [#allocation0], 8
    %v56 = vld [vmem:[%s55] sm:%s49]
    %s57 = sshll.u32 1, 1
    %s58 = ssub.s32 %s57, 1
    %s59 = scalar_lea.vmem %s1, 1
    %60 = vst [vmem:[%s59] sm:%s58] %v56
    %s61 = scalar_lea.vmem [#allocation0], 16
    %v62 = vld [vmem:[%s61] sm:%s49]
    %s63 = sshll.u32 1, 1
    %s64 = ssub.s32 %s63, 1
    %s65 = smul.addr 1, 2
    %s66 = scalar_lea.vmem %s1, %s65
    %67 = vst [vmem:[%s66] sm:%s64] %v62
    %s68 = scalar_lea.vmem [#allocation0], 24
    %v69 = vld [vmem:[%s68] sm:%s49]
    %s70 = sshll.u32 1, 1
    %s71 = ssub.s32 %s70, 1
    %s72 = smul.addr 1, 3
    %s73 = scalar_lea.vmem %s1, %s72
    %74 = vst [vmem:[%s73] sm:%s71] %v69

// kernel: tile.13
$region0: #{tile.13}
  #allocation0 [shape = 's32[1]{0}', space=sflag, size = 0x4, scoped, tag = 'scoped memory for tile.13']
  %s0 = inlined_call_operand.vmem [shape: f32[8], index: 0, kind: input, shape index: {}]
  %s1 = inlined_call_operand.vmem [shape: f32[15,8], index: 1, kind: output, shape index: {}]
  // Predicated region
  $region2: #{tile.13} parent=0 // pred_check
    _
  $region3: #{tile.13} parent=0 // pred_check_branch
    %3 = sbr.rel (0) target = $region5
  $region4: #{tile.13} parent=0 // pred_region
    _
  $region5: #{tile.13} parent=0 // pred_fallthru
    _
  %v4 = vld [vmem:[%s0] ss:$0 sm:$0xff]
  %5 = vst [vmem:[%s1] sm:$0xff] %v4
  %s6 = scalar_lea.vmem %s1, 8
  %7 = vst [vmem:[%s6] sm:$0xff] %v4

// kernel: tile.14
$region0: #{tile.14}
  %s0 = inlined_call_operand.vmem [shape: f32[15,8], index: 0, kind: input, shape index: {}]
  %s1 = inlined_call_operand.vmem [shape: f32[1,120], index: 1, kind: output, shape index: {}]
  $region1: #{tile.14} parent=0
    #allocation0 [shape = 'u8[4096]{0}', space=vmem, size = 0x1000, scoped, tag = 'scoped mem for output reshape']
    %v2 = vld [vmem:[%s0] sm:$0x1]
    %vm3 = vcmask 64512
    %4 = vst.msk [vmem:[#allocation0] sm:$0x1] %vm3, %v2
    %s5 = scalar_lea.vmem %s0, 14
    %v6 = vld [vmem:[%s5] sm:$0x1]
    %7 = vrot.lane.b32.xlu0 %v6, 112
    %v8 = vpop.permute.xlu0 %7
    %vm9 = vcmask 982912
    %10 = vst.msk [vmem:[#allocation0] sm:$0x1] %vm9, %v8
    %s11 = scalar_lea.vmem %s0, 13
    %v12 = vld [vmem:[%s11] sm:$0x1]
    %13 = vrot.lane.b32.xlu0 %v12, 104
    %v14 = vpop.permute.xlu0 %13
    %vm15 = vcmask 917312
    %16 = vst.msk [vmem:[#allocation0] sm:$0x1] %vm15, %v14
    %s17 = scalar_lea.vmem %s0, 12
    %v18 = vld [vmem:[%s17] sm:$0x1]
    %19 = vrot.lane.b32.xlu0 %v18, 96
    %v20 = vpop.permute.xlu0 %19
    %vm21 = vcmask 851712
    %22 = vst.msk [vmem:[#allocation0] sm:$0x1] %vm21, %v20
    %s23 = scalar_lea.vmem %s0, 11
    %v24 = vld [vmem:[%s23] sm:$0x1]
    %25 = vrot.lane.b32.xlu0 %v24, 88
    %v26 = vpop.permute.xlu0 %25
    %vm27 = vcmask 786112
    %28 = vst.msk [vmem:[#allocation0] sm:$0x1] %vm27, %v26
    %s29 = scalar_lea.vmem %s0, 10
    %v30 = vld [vmem:[%s29] sm:$0x1]
    %31 = vrot.lane.b32.xlu0 %v30, 80
    %v32 = vpop.permute.xlu0 %31
    %vm33 = vcmask 720512
    %34 = vst.msk [vmem:[#allocation0] sm:$0x1] %vm33, %v32
    %s35 = scalar_lea.vmem %s0, 9
    %v36 = vld [vmem:[%s35] sm:$0x1]
    %37 = vrot.lane.b32.xlu0 %v36, 72
    %v38 = vpop.permute.xlu0 %37
    %vm39 = vcmask 654912
    %40 = vst.msk [vmem:[#allocation0] sm:$0x1] %vm39, %v38
    %s41 = scalar_lea.vmem %s0, 8
    %v42 = vld [vmem:[%s41] sm:$0x1]
    %43 = vrot.lane.b32.xlu0 %v42, 64
    %v44 = vpop.permute.xlu0 %43
    %vm45 = vcmask 589312
    %46 = vst.msk [vmem:[#allocation0] sm:$0x1] %vm45, %v44
    %s47 = scalar_lea.vmem %s0, 7
    %v48 = vld [vmem:[%s47] sm:$0x1]
    %49 = vrot.lane.b32.xlu0 %v48, 56
    %v50 = vpop.permute.xlu0 %49
    %vm51 = vcmask 523712
    %52 = vst.msk [vmem:[#allocation0] sm:$0x1] %vm51, %v50
    %s53 = scalar_lea.vmem %s0, 6
    %v54 = vld [vmem:[%s53] sm:$0x1]
    %55 = vrot.lane.b32.xlu0 %v54, 48
    %v56 = vpop.permute.xlu0 %55
    %vm57 = vcmask 458112
    %58 = vst.msk [vmem:[#allocation0] sm:$0x1] %vm57, %v56
    %s59 = scalar_lea.vmem %s0, 5
    %v60 = vld [vmem:[%s59] sm:$0x1]
    %61 = vrot.lane.b32.xlu0 %v60, 40
    %v62 = vpop.permute.xlu0 %61
    %vm63 = vcmask 392512
    %64 = vst.msk [vmem:[#allocation0] sm:$0x1] %vm63, %v62
    %s65 = scalar_lea.vmem %s0, 4
    %v66 = vld [vmem:[%s65] sm:$0x1]
    %67 = vrot.lane.b32.xlu0 %v66, 32
    %v68 = vpop.permute.xlu0 %67
    %vm69 = vcmask 326912
    %70 = vst.msk [vmem:[#allocation0] sm:$0x1] %vm69, %v68
    %s71 = scalar_lea.vmem %s0, 3
    %v72 = vld [vmem:[%s71] sm:$0x1]
    %73 = vrot.lane.b32.xlu0 %v72, 24
    %v74 = vpop.permute.xlu0 %73
    %vm75 = vcmask 261312
    %76 = vst.msk [vmem:[#allocation0] sm:$0x1] %vm75, %v74
    %s77 = scalar_lea.vmem %s0, 2
    %v78 = vld [vmem:[%s77] sm:$0x1]
    %79 = vrot.lane.b32.xlu0 %v78, 16
    %v80 = vpop.permute.xlu0 %79
    %vm81 = vcmask 195712
    %82 = vst.msk [vmem:[#allocation0] sm:$0x1] %vm81, %v80
    %s83 = scalar_lea.vmem %s0, 1
    %v84 = vld [vmem:[%s83] sm:$0x1]
    %85 = vrot.lane.b32.xlu0 %v84, 8
    %v86 = vpop.permute.xlu0 %85
    %vm87 = vcmask 130112
    %88 = vst.msk [vmem:[#allocation0] sm:$0x1] %vm87, %v86
    %s90 = sshll.u32 1, 1
    %s91 = ssub.s32 %s90, 1
    %v93 = vld [vmem:[#allocation0] sm:%s91]
    %s94 = sshll.u32 1, 1
    %s95 = ssub.s32 %s94, 1
    %96 = vst [vmem:[%s1] sm:%s95] %v93

// kernel: binarynet_forward.1
$region0: #{binarynet_forward.1}
  #allocation0 [shape = 'u32[]', space=smem, size = 0x4, offset = 0x4, fixed_abs, tag = 'smem constant byte address 0x4 - core index']
  #allocation1 [shape = 'u32[144,128]{1,0:T(1,128)}', space=vmem, size = 0x12000, scoped, tag = 'internal scratch']
  %s0 = inlined_call_operand.vmem [shape: bf16[2,15,2205], index: 0, kind: input, shape index: {}]
  %s1 = inlined_call_operand.vmem [shape: bf16[2205,120], index: 1, kind: input, shape index: {}]
  %s2 = inlined_call_operand.vmem [shape: f32[1,120], index: 2, kind: input, shape index: {}]
  %s3 = inlined_call_operand.vmem [shape: bf16[1800,400], index: 3, kind: input, shape index: {}]
  %s4 = inlined_call_operand.vmem [shape: f32[1,400], index: 4, kind: input, shape index: {}]
  %s5 = inlined_call_operand.vmem [shape: bf16[400,60], index: 5, kind: input, shape index: {}]
  %s6 = inlined_call_operand.vmem [shape: f32[1,60], index: 6, kind: input, shape index: {}]
  %s7 = inlined_call_operand.vmem [shape: bf16[60,2], index: 7, kind: input, shape index: {}]
  %s8 = inlined_call_operand.vmem [shape: f32[1,2], index: 8, kind: input, shape index: {}]
  %s9 = inlined_call_operand.hbm [shape: f32[2,1,2], index: 9, kind: output, shape index: {}]
  %s10 = sld [smem:[#allocation0]]
  $region69: #{binarynet_forward.1} parent=0
    _
  %s12 = ssub.s32 1, %s10
  %s13 = scalar_select 0, %s12, %s10
  $region1: #{binarynet_forward.1} parent=0
    #allocation2 [shape = 'u8[1024]{0}', space=vmem, size = 0x400, scoped, tag = 'output window, operand 0']
    #allocation3 [shape = 's32[2]{0}', space=sflag, size = 0x8, scoped, tag = 'scoped memory for binarynet_forward.1']
    %14 = vsyncpa [#allocation3], 0
    %s15 = scalar_lea.sflag [#allocation3], 1
    %16 = vsyncpa %s15, 0
    loop: start=0, step=1, limit=4
    $region2: #{binarynet_forward.1} parent=1 // loop_pre_header
      _
    $region3: #{binarynet_forward.1} parent=1 // loop_header
      %s18 = sphi 0, %s22
      %p19 = scmp.ge.s32.totalorder %s18, 4
      %s28 = sphi 0, %s30
      %s31 = sphi 0, %s28
      %s32 = sphi 0, %s31
      %s48 = sphi 0, %s32
      %s52 = sphi 0, %s52
      %s54 = sphi 0, %s52
      %s55 = sphi 0, %s54
      %s69 = sphi 0, %s55
      %s73 = sphi 0, %s73
      %s75 = sphi 0, %s73
      %s76 = sphi 0, %s75
      %s90 = sphi 0, %s76
      %s94 = sphi 0, %s94
      %s96 = sphi 0, %s94
      %s97 = sphi 0, %s96
      %s111 = sphi 0, %s97
      %s115 = sphi 0, %s115
      %s117 = sphi 0, %s115
      %s118 = sphi 0, %s117
      %s132 = sphi 0, %s118
      %s136 = sphi 0, %s136
      %s138 = sphi 0, %s136
      %s139 = sphi 0, %s138
      %s153 = sphi 0, %s139
      %s157 = sphi 0, %s157
      %s159 = sphi 0, %s157
      %s160 = sphi 0, %s159
      %s174 = sphi 0, %s160
      %s178 = sphi 0, %s178
      %s180 = sphi 0, %s178
      %s181 = sphi 0, %s180
      %s195 = sphi 0, %s181
      %s199 = sphi 0, %s199
      %s201 = sphi 0, %s199
      %s202 = sphi 0, %s201
      %s216 = sphi 0, %s202
      %s222 = sphi 0, %s224
      %s225 = sphi 0, %s222
      %s226 = sphi 0, %s225
      %s242 = sphi 0, %s226
    $region4: #{binarynet_forward.1} parent=1 // loop_header_branch
      %21 = sbr.rel (%p19) target = $region8
    $region5: #{binarynet_forward.1} parent=1 // loop_body
      %s23 = ssub.s32 %s18, 1
      %s24 = ssub.s32 %s18, 2
      %s25 = sadd.s32 %s18, 1
      %s26 = ssub.s32 %s18, %s25
      %p27 = scmp.eq.s32.totalorder %s26, 0
      %s29 = sadd.s32 %s28, 1
      %s30 = scalar_select %p27, %s28, %s29
      %p33 = pneg %p27
      %p34 = scmp.eq.s32.totalorder %s18, 1
      %p35 = por %p33, %p34
      %p36 = scmp.ne.s32.totalorder %s28, %s31
      %p37 = scmp.eq.s32.totalorder %s18, 0
      %p38 = por %p36, %p37
      %p39 = scmp.ne.s32.totalorder %s28, %s31
      %p40 = scmp.eq.s32.totalorder %s23, 1
      %p41 = por %p39, %p40
      %p42 = scmp.ne.s32.totalorder %s31, %s32
      %p43 = scmp.eq.s32.totalorder %s23, 0
      %p44 = por %p42, %p43
      %p45 = scmp.ne.s32.totalorder %s31, %s32
      %p46 = scmp.eq.s32.totalorder %s24, 1
      %p47 = por %p45, %p46
      %p49 = scmp.ne.s32.totalorder %s32, %s48
      %p50 = scmp.eq.s32.totalorder %s24, 0
      %p51 = por %p49, %p50
      %s53 = sadd.s32 %s52, 1
      %p56 = scmp.eq.s32.totalorder %s18, 1
      %p57 = scmp.ne.s32.totalorder %s52, %s54
      %p58 = scmp.eq.s32.totalorder %s18, 0
      %p59 = por %p57, %p58
      %p60 = scmp.ne.s32.totalorder %s52, %s54
      %p61 = scmp.eq.s32.totalorder %s23, 1
      %p62 = por %p60, %p61
      %p63 = scmp.ne.s32.totalorder %s54, %s55
      %p64 = scmp.eq.s32.totalorder %s23, 0
      %p65 = por %p63, %p64
      %p66 = scmp.ne.s32.totalorder %s54, %s55
      %p67 = scmp.eq.s32.totalorder %s24, 1
      %p68 = por %p66, %p67
      %p70 = scmp.ne.s32.totalorder %s55, %s69
      %p71 = scmp.eq.s32.totalorder %s24, 0
      %p72 = por %p70, %p71
      %s74 = sadd.s32 %s73, 1
      %p77 = scmp.eq.s32.totalorder %s18, 1
      %p78 = scmp.ne.s32.totalorder %s73, %s75
      %p79 = scmp.eq.s32.totalorder %s18, 0
      %p80 = por %p78, %p79
      %p81 = scmp.ne.s32.totalorder %s73, %s75
      %p82 = scmp.eq.s32.totalorder %s23, 1
      %p83 = por %p81, %p82
      %p84 = scmp.ne.s32.totalorder %s75, %s76
      %p85 = scmp.eq.s32.totalorder %s23, 0
      %p86 = por %p84, %p85
      %p87 = scmp.ne.s32.totalorder %s75, %s76
      %p88 = scmp.eq.s32.totalorder %s24, 1
      %p89 = por %p87, %p88
      %p91 = scmp.ne.s32.totalorder %s76, %s90
      %p92 = scmp.eq.s32.totalorder %s24, 0
      %p93 = por %p91, %p92
      %s95 = sadd.s32 %s94, 1
      %p98 = scmp.eq.s32.totalorder %s18, 1
      %p99 = scmp.ne.s32.totalorder %s94, %s96
      %p100 = scmp.eq.s32.totalorder %s18, 0
      %p101 = por %p99, %p100
      %p102 = scmp.ne.s32.totalorder %s94, %s96
      %p103 = scmp.eq.s32.totalorder %s23, 1
      %p104 = por %p102, %p103
      %p105 = scmp.ne.s32.totalorder %s96, %s97
      %p106 = scmp.eq.s32.totalorder %s23, 0
      %p107 = por %p105, %p106
      %p108 = scmp.ne.s32.totalorder %s96, %s97
      %p109 = scmp.eq.s32.totalorder %s24, 1
      %p110 = por %p108, %p109
      %p112 = scmp.ne.s32.totalorder %s97, %s111
      %p113 = scmp.eq.s32.totalorder %s24, 0
      %p114 = por %p112, %p113
      %s116 = sadd.s32 %s115, 1
      %p119 = scmp.eq.s32.totalorder %s18, 1
      %p120 = scmp.ne.s32.totalorder %s115, %s117
      %p121 = scmp.eq.s32.totalorder %s18, 0
      %p122 = por %p120, %p121
      %p123 = scmp.ne.s32.totalorder %s115, %s117
      %p124 = scmp.eq.s32.totalorder %s23, 1
      %p125 = por %p123, %p124
      %p126 = scmp.ne.s32.totalorder %s117, %s118
      %p127 = scmp.eq.s32.totalorder %s23, 0
      %p128 = por %p126, %p127
      %p129 = scmp.ne.s32.totalorder %s117, %s118
      %p130 = scmp.eq.s32.totalorder %s24, 1
      %p131 = por %p129, %p130
      %p133 = scmp.ne.s32.totalorder %s118, %s132
      %p134 = scmp.eq.s32.totalorder %s24, 0
      %p135 = por %p133, %p134
      %s137 = sadd.s32 %s136, 1
      %p140 = scmp.eq.s32.totalorder %s18, 1
      %p141 = scmp.ne.s32.totalorder %s136, %s138
      %p142 = scmp.eq.s32.totalorder %s18, 0
      %p143 = por %p141, %p142
      %p144 = scmp.ne.s32.totalorder %s136, %s138
      %p145 = scmp.eq.s32.totalorder %s23, 1
      %p146 = por %p144, %p145
      %p147 = scmp.ne.s32.totalorder %s138, %s139
      %p148 = scmp.eq.s32.totalorder %s23, 0
      %p149 = por %p147, %p148
      %p150 = scmp.ne.s32.totalorder %s138, %s139
      %p151 = scmp.eq.s32.totalorder %s24, 1
      %p152 = por %p150, %p151
      %p154 = scmp.ne.s32.totalorder %s139, %s153
      %p155 = scmp.eq.s32.totalorder %s24, 0
      %p156 = por %p154, %p155
      %s158 = sadd.s32 %s157, 1
      %p161 = scmp.eq.s32.totalorder %s18, 1
      %p162 = scmp.ne.s32.totalorder %s157, %s159
      %p163 = scmp.eq.s32.totalorder %s18, 0
      %p164 = por %p162, %p163
      %p165 = scmp.ne.s32.totalorder %s157, %s159
      %p166 = scmp.eq.s32.totalorder %s23, 1
      %p167 = por %p165, %p166
      %p168 = scmp.ne.s32.totalorder %s159, %s160
      %p169 = scmp.eq.s32.totalorder %s23, 0
      %p170 = por %p168, %p169
      %p171 = scmp.ne.s32.totalorder %s159, %s160
      %p172 = scmp.eq.s32.totalorder %s24, 1
      %p173 = por %p171, %p172
      %p175 = scmp.ne.s32.totalorder %s160, %s174
      %p176 = scmp.eq.s32.totalorder %s24, 0
      %p177 = por %p175, %p176
      %s179 = sadd.s32 %s178, 1
      %p182 = scmp.eq.s32.totalorder %s18, 1
      %p183 = scmp.ne.s32.totalorder %s178, %s180
      %p184 = scmp.eq.s32.totalorder %s18, 0
      %p185 = por %p183, %p184
      %p186 = scmp.ne.s32.totalorder %s178, %s180
      %p187 = scmp.eq.s32.totalorder %s23, 1
      %p188 = por %p186, %p187
      %p189 = scmp.ne.s32.totalorder %s180, %s181
      %p190 = scmp.eq.s32.totalorder %s23, 0
      %p191 = por %p189, %p190
      %p192 = scmp.ne.s32.totalorder %s180, %s181
      %p193 = scmp.eq.s32.totalorder %s24, 1
      %p194 = por %p192, %p193
      %p196 = scmp.ne.s32.totalorder %s181, %s195
      %p197 = scmp.eq.s32.totalorder %s24, 0
      %p198 = por %p196, %p197
      %s200 = sadd.s32 %s199, 1
      %p203 = scmp.eq.s32.totalorder %s18, 1
      %p204 = scmp.ne.s32.totalorder %s199, %s201
      %p205 = scmp.eq.s32.totalorder %s18, 0
      %p206 = por %p204, %p205
      %p207 = scmp.ne.s32.totalorder %s199, %s201
      %p208 = scmp.eq.s32.totalorder %s23, 1
      %p209 = por %p207, %p208
      %p210 = scmp.ne.s32.totalorder %s201, %s202
      %p211 = scmp.eq.s32.totalorder %s23, 0
      %p212 = por %p210, %p211
      %p213 = scmp.ne.s32.totalorder %s201, %s202
      %p214 = scmp.eq.s32.totalorder %s24, 1
      %p215 = por %p213, %p214
      %p217 = scmp.ne.s32.totalorder %s202, %s216
      %p218 = scmp.eq.s32.totalorder %s24, 0
      %p219 = por %p217, %p218
      %s220 = ssub.s32 %s18, %s25
      %p221 = scmp.eq.s32.totalorder %s220, 0
      %s223 = sadd.s32 %s222, 1
      %s224 = scalar_select %p221, %s222, %s223
      %p227 = pneg %p221
      %p228 = scmp.eq.s32.totalorder %s18, 1
      %p229 = por %p227, %p228
      %p230 = scmp.ne.s32.totalorder %s222, %s225
      %p231 = scmp.eq.s32.totalorder %s18, 0
      %p232 = por %p230, %p231
      %p233 = scmp.ne.s32.totalorder %s222, %s225
      %p234 = scmp.eq.s32.totalorder %s23, 1
      %p235 = por %p233, %p234
      %p236 = scmp.ne.s32.totalorder %s225, %s226
      %p237 = scmp.eq.s32.totalorder %s23, 0
      %p238 = por %p236, %p237
      %p239 = scmp.ne.s32.totalorder %s225, %s226
      %p240 = scmp.eq.s32.totalorder %s24, 1
      %p241 = por %p239, %p240
      %p243 = scmp.ne.s32.totalorder %s226, %s242
      %p244 = scmp.eq.s32.totalorder %s24, 0
      %p245 = por %p243, %p244
      %p246 = scmp.le.s32.totalorder 1, %s18
      %p247 = scmp.lt.s32.totalorder %s18, 3
      %p248 = pnand %p246, %p247
      %p249 = pneg %p248
      // Predicated region
      $region9: #{binarynet_forward.1} parent=5 // pred_check
        _
      $region10: #{binarynet_forward.1} parent=5 // pred_check_branch
        %251 = sbr.rel (%p248) target = $region12
      $region11: #{binarynet_forward.1} parent=5 // pred_region
        %s252 = ssub.s32 %s18, 1
        // Predicated region
        $region13: #{binarynet_forward.1} parent=11 // pred_check
          %p253 = pneg %p65
        $region14: #{binarynet_forward.1} parent=11 // pred_check_branch
          %255 = sbr.rel (%p253) target = $region16
        $region15: #{binarynet_forward.1} parent=11 // pred_region
          _
        $region16: #{binarynet_forward.1} parent=11 // pred_fallthru
          _
        // Predicated region
        $region17: #{binarynet_forward.1} parent=11 // pred_check
          %p256 = pneg %p86
        $region18: #{binarynet_forward.1} parent=11 // pred_check_branch
          %258 = sbr.rel (%p256) target = $region20
        $region19: #{binarynet_forward.1} parent=11 // pred_region
          _
        $region20: #{binarynet_forward.1} parent=11 // pred_fallthru
          _
        // Predicated region
        $region21: #{binarynet_forward.1} parent=11 // pred_check
          %p259 = pneg %p107
        $region22: #{binarynet_forward.1} parent=11 // pred_check_branch
          %261 = sbr.rel (%p259) target = $region24
        $region23: #{binarynet_forward.1} parent=11 // pred_region
          _
        $region24: #{binarynet_forward.1} parent=11 // pred_fallthru
          _
        // Predicated region
        $region25: #{binarynet_forward.1} parent=11 // pred_check
          %p262 = pneg %p128
        $region26: #{binarynet_forward.1} parent=11 // pred_check_branch
          %264 = sbr.rel (%p262) target = $region28
        $region27: #{binarynet_forward.1} parent=11 // pred_region
          _
        $region28: #{binarynet_forward.1} parent=11 // pred_fallthru
          _
        // Predicated region
        $region29: #{binarynet_forward.1} parent=11 // pred_check
          %p265 = pneg %p149
        $region30: #{binarynet_forward.1} parent=11 // pred_check_branch
          %267 = sbr.rel (%p265) target = $region32
        $region31: #{binarynet_forward.1} parent=11 // pred_region
          _
        $region32: #{binarynet_forward.1} parent=11 // pred_fallthru
          _
        // Predicated region
        $region33: #{binarynet_forward.1} parent=11 // pred_check
          %p268 = pneg %p170
        $region34: #{binarynet_forward.1} parent=11 // pred_check_branch
          %270 = sbr.rel (%p268) target = $region36
        $region35: #{binarynet_forward.1} parent=11 // pred_region
          _
        $region36: #{binarynet_forward.1} parent=11 // pred_fallthru
          _
        // Predicated region
        $region37: #{binarynet_forward.1} parent=11 // pred_check
          %p271 = pneg %p191
        $region38: #{binarynet_forward.1} parent=11 // pred_check_branch
          %273 = sbr.rel (%p271) target = $region40
        $region39: #{binarynet_forward.1} parent=11 // pred_region
          _
        $region40: #{binarynet_forward.1} parent=11 // pred_fallthru
          _
        // Predicated region
        $region41: #{binarynet_forward.1} parent=11 // pred_check
          %p274 = pneg %p212
        $region42: #{binarynet_forward.1} parent=11 // pred_check_branch
          %276 = sbr.rel (%p274) target = $region44
        $region43: #{binarynet_forward.1} parent=11 // pred_region
          _
        $region44: #{binarynet_forward.1} parent=11 // pred_fallthru
          _
      $region12: #{binarynet_forward.1} parent=5 // pred_fallthru
        _
      %p277 = scmp.lt.s32.totalorder %s18, 2
      // Predicated region
      $region45: #{binarynet_forward.1} parent=5 // pred_check
        %p278 = pneg %p277
      $region46: #{binarynet_forward.1} parent=5 // pred_check_branch
        %280 = sbr.rel (%p278) target = $region48
      $region47: #{binarynet_forward.1} parent=5 // pred_region
        // Predicated region
        $region49: #{binarynet_forward.1} parent=47 // pred_check
          %p281 = pneg %p38
        $region50: #{binarynet_forward.1} parent=47 // pred_check_branch
          %283 = sbr.rel (%p281) target = $region52
        $region51: #{binarynet_forward.1} parent=47 // pred_region
          %p284 = scmp.lt.s32.totalorder %s18, 1
          %s285 = scalar_select %p284, %s18, 1
          %s286 = smul.addr %s285, 36
          %s287 = smul.addr %s286, 4
          %s288 = scalar_lea.vmem %s0, %s287
        $region52: #{binarynet_forward.1} parent=47 // pred_fallthru
          _
      $region48: #{binarynet_forward.1} parent=5 // pred_fallthru
        _
      %p289 = scmp.le.s32.totalorder 1, %s18
      %p290 = scmp.lt.s32.totalorder %s18, 3
      %p291 = pnand %p289, %p290
      %p292 = pneg %p291
      // Predicated region
      $region53: #{binarynet_forward.1} parent=5 // pred_check
        _
      $region54: #{binarynet_forward.1} parent=5 // pred_check_branch
        %294 = sbr.rel (%p291) target = $region56
      $region55: #{binarynet_forward.1} parent=5 // pred_region
        %s295 = ssub.s32 %s18, 1
        %p296 = scmp.lt.s32.totalorder %s23, 1
        %s297 = scalar_select %p296, %s23, 1
        %s298 = smul.addr %s297, 36
        %s299 = smul.addr %s298, 4
        %s300 = scalar_lea.vmem %s0, %s299
        %p301 = pneg %p44
        %p302 = pneg %p41
        %p303 = pneg %p65
        %p304 = pneg %p62
        %p305 = pneg %p86
        %p306 = pneg %p83
        %p307 = pneg %p107
        %p308 = pneg %p104
        %p309 = pneg %p128
        %p310 = pneg %p125
        %p311 = pneg %p149
        %p312 = pneg %p146
        %p313 = pneg %p170
        %p314 = pneg %p167
        %p315 = pneg %p191
        %p316 = pneg %p188
        %p317 = pneg %p212
        %p318 = pneg %p209
        %p319 = pneg %p238
        %p320 = pneg %p235
        %s321 = sand.u32 %s225, 1
        %s322 = scalar_lea.sflag [#allocation3], %s321
        %s323 = sand.u32 %s225, 1
        %s324 = scalar_lea.vmem [#allocation2], %s323
        %p325 = scmp.lt.s32.totalorder %s23, 1
        %s326 = scalar_select %p325, %s23, 1
        %s327 = smul.addr %s326, 36
        %s328 = smul.addr %s327, 4
        %s329 = scalar_lea.vmem %s0, %s328
        %v331 = vld [vmem:[%s1] sm:$0xf]
        %v332 = vld [vmem:[%s1 + $0x4] sm:$0xf]
        %v333 = vld [vmem:[%s1 + $0x8] sm:$0xf]
        %v334 = vld [vmem:[%s1 + $0xc] sm:$0xf]
        %v335 = vld [vmem:[%s1 + $0x10] sm:$0xf]
        %v336 = vld [vmem:[%s1 + $0x14] sm:$0xf]
        %v337 = vld [vmem:[%s1 + $0x18] sm:$0xf]
        %v338 = vld [vmem:[%s1 + $0x1c] sm:$0xf]
        %v339 = vld [vmem:[%s1 + $0x20] sm:$0xf]
        %v340 = vld [vmem:[%s1 + $0x24] sm:$0xf]
        %v341 = vld [vmem:[%s1 + $0x28] sm:$0xf]
        %v342 = vld [vmem:[%s1 + $0x2c] sm:$0xf]
        %v343 = vld [vmem:[%s1 + $0x30] sm:$0xf]
        %v344 = vld [vmem:[%s1 + $0x34] sm:$0xf]
        %v345 = vld [vmem:[%s1 + $0x38] sm:$0xf]
        %v346 = vld [vmem:[%s1 + $0x3c] sm:$0xf]
        %v347 = vld [vmem:[%s1 + $0x40] sm:$0xf]
        %v348 = vld [vmem:[%s1 + $0x44] sm:$0xf]
        %v349 = vld [vmem:[%s1 + $0x48] sm:$0xf]
        %v350 = vld [vmem:[%s1 + $0x4c] sm:$0xf]
        %v351 = vld [vmem:[%s1 + $0x50] sm:$0xf]
        %v352 = vld [vmem:[%s1 + $0x54] sm:$0xf]
        %v353 = vld [vmem:[%s1 + $0x58] sm:$0xf]
        %v354 = vld [vmem:[%s1 + $0x5c] sm:$0xf]
        %v355 = vld [vmem:[%s1 + $0x60] sm:$0xf]
        %v356 = vld [vmem:[%s1 + $0x64] sm:$0xf]
        %v357 = vld [vmem:[%s1 + $0x68] sm:$0xf]
        %v358 = vld [vmem:[%s1 + $0x6c] sm:$0xf]
        %v359 = vld [vmem:[%s1 + $0x70] sm:$0xf]
        %v360 = vld [vmem:[%s1 + $0x74] sm:$0xf]
        %v361 = vld [vmem:[%s1 + $0x78] sm:$0xf]
        %v362 = vld [vmem:[%s1 + $0x7c] sm:$0xf]
        %v363 = vld [vmem:[%s1 + $0x80] sm:$0xf]
        %v364 = vld [vmem:[%s1 + $0x84] sm:$0xf]
        %v365 = vld [vmem:[%s1 + $0x88] sm:$0xf]
        %v366 = vld [vmem:[%s1 + $0x8c] sm:$0xf]
        %v367 = vld [vmem:[%s1 + $0x90] sm:$0xf]
        %v368 = vld [vmem:[%s1 + $0x94] sm:$0xf]
        %v369 = vld [vmem:[%s1 + $0x98] sm:$0xf]
        %v370 = vld [vmem:[%s1 + $0x9c] sm:$0xf]
        %v371 = vld [vmem:[%s1 + $0xa0] sm:$0xf]
        %v372 = vld [vmem:[%s1 + $0xa4] sm:$0xf]
        %v373 = vld [vmem:[%s1 + $0xa8] sm:$0xf]
        %v374 = vld [vmem:[%s1 + $0xac] sm:$0xf]
        %v375 = vld [vmem:[%s1 + $0xb0] sm:$0xf]
        %v376 = vld [vmem:[%s1 + $0xb4] sm:$0xf]
        %v377 = vld [vmem:[%s1 + $0xb8] sm:$0xf]
        %v378 = vld [vmem:[%s1 + $0xbc] sm:$0xf]
        %v379 = vld [vmem:[%s1 + $0xc0] sm:$0xf]
        %v380 = vld [vmem:[%s1 + $0xc4] sm:$0xf]
        %v381 = vld [vmem:[%s1 + $0xc8] sm:$0xf]
        %v382 = vld [vmem:[%s1 + $0xcc] sm:$0xf]
        %v383 = vld [vmem:[%s1 + $0xd0] sm:$0xf]
        %v384 = vld [vmem:[%s1 + $0xd4] sm:$0xf]
        %v385 = vld [vmem:[%s1 + $0xd8] sm:$0xf]
        %v386 = vld [vmem:[%s1 + $0xdc] sm:$0xf]
        %v387 = vld [vmem:[%s1 + $0xe0] sm:$0xf]
        %v388 = vld [vmem:[%s1 + $0xe4] sm:$0xf]
        %v389 = vld [vmem:[%s1 + $0xe8] sm:$0xf]
        %v390 = vld [vmem:[%s1 + $0xec] sm:$0xf]
        %v391 = vld [vmem:[%s1 + $0xf0] sm:$0xf]
        %v392 = vld [vmem:[%s1 + $0xf4] sm:$0xf]
        %v393 = vld [vmem:[%s1 + $0xf8] sm:$0xf]
        %v394 = vld [vmem:[%s1 + $0xfc] sm:$0xf]
        %v395 = vld [vmem:[%s1 + $0x100] sm:$0xf]
        %v396 = vld [vmem:[%s1 + $0x104] sm:$0xf]
        %v397 = vld [vmem:[%s1 + $0x108] sm:$0xf]
        %v398 = vld [vmem:[%s1 + $0x10c] sm:$0xf]
        %v399 = vld [vmem:[%s1 + $0x110] sm:$0xf]
        %v400 = vld [vmem:[%s1 + $0x114] sm:$0xf]
        %v401 = vld [vmem:[%s1 + $0x118] sm:$0xf]
        %v402 = vld [vmem:[%s1 + $0x11c] sm:$0xf]
        %v403 = vld [vmem:[%s1 + $0x120] sm:$0xf]
        %v404 = vld [vmem:[%s1 + $0x124] sm:$0xf]
        %v405 = vld [vmem:[%s1 + $0x128] sm:$0xf]
        %v406 = vld [vmem:[%s1 + $0x12c] sm:$0xf]
        %v407 = vld [vmem:[%s1 + $0x130] sm:$0xf]
        %v408 = vld [vmem:[%s1 + $0x134] sm:$0xf]
        %v409 = vld [vmem:[%s1 + $0x138] sm:$0xf]
        %v410 = vld [vmem:[%s1 + $0x13c] sm:$0xf]
        %v411 = vld [vmem:[%s1 + $0x140] sm:$0xf]
        %v412 = vld [vmem:[%s1 + $0x144] sm:$0xf]
        %v413 = vld [vmem:[%s1 + $0x148] sm:$0xf]
        %v414 = vld [vmem:[%s1 + $0x14c] sm:$0xf]
        %v415 = vld [vmem:[%s1 + $0x150] sm:$0xf]
        %v416 = vld [vmem:[%s1 + $0x154] sm:$0xf]
        %v417 = vld [vmem:[%s1 + $0x158] sm:$0xf]
        %v418 = vld [vmem:[%s1 + $0x15c] sm:$0xf]
        %v419 = vld [vmem:[%s1 + $0x160] sm:$0xf]
        %v420 = vld [vmem:[%s1 + $0x164] sm:$0xf]
        %v421 = vld [vmem:[%s1 + $0x168] sm:$0xf]
        %v422 = vld [vmem:[%s1 + $0x16c] sm:$0xf]
        %v423 = vld [vmem:[%s1 + $0x170] sm:$0xf]
        %v424 = vld [vmem:[%s1 + $0x174] sm:$0xf]
        %v425 = vld [vmem:[%s1 + $0x178] sm:$0xf]
        %v426 = vld [vmem:[%s1 + $0x17c] sm:$0xf]
        %v427 = vld [vmem:[%s1 + $0x180] sm:$0xf]
        %v428 = vld [vmem:[%s1 + $0x184] sm:$0xf]
        %v429 = vld [vmem:[%s1 + $0x188] sm:$0xf]
        %v430 = vld [vmem:[%s1 + $0x18c] sm:$0xf]
        %v431 = vld [vmem:[%s1 + $0x190] sm:$0xf]
        %v432 = vld [vmem:[%s1 + $0x194] sm:$0xf]
        %v433 = vld [vmem:[%s1 + $0x198] sm:$0xf]
        %v434 = vld [vmem:[%s1 + $0x19c] sm:$0xf]
        %v435 = vld [vmem:[%s1 + $0x1a0] sm:$0xf]
        %v436 = vld [vmem:[%s1 + $0x1a4] sm:$0xf]
        %v437 = vld [vmem:[%s1 + $0x1a8] sm:$0xf]
        %v438 = vld [vmem:[%s1 + $0x1ac] sm:$0xf]
        %v439 = vld [vmem:[%s1 + $0x1b0] sm:$0xf]
        %v440 = vld [vmem:[%s1 + $0x1b4] sm:$0xf]
        %v441 = vld [vmem:[%s1 + $0x1b8] sm:$0xf]
        %v442 = vld [vmem:[%s1 + $0x1bc] sm:$0xf]
        %v443 = vld [vmem:[%s1 + $0x1c0] sm:$0xf]
        %v444 = vld [vmem:[%s1 + $0x1c4] sm:$0xf]
        %v445 = vld [vmem:[%s1 + $0x1c8] sm:$0xf]
        %v446 = vld [vmem:[%s1 + $0x1cc] sm:$0xf]
        %v447 = vld [vmem:[%s1 + $0x1d0] sm:$0xf]
        %v448 = vld [vmem:[%s1 + $0x1d4] sm:$0xf]
        %v449 = vld [vmem:[%s1 + $0x1d8] sm:$0xf]
        %v450 = vld [vmem:[%s1 + $0x1dc] sm:$0xf]
        %v451 = vld [vmem:[%s1 + $0x1e0] sm:$0xf]
        %v452 = vld [vmem:[%s1 + $0x1e4] sm:$0xf]
        %v453 = vld [vmem:[%s1 + $0x1e8] sm:$0xf]
        %v454 = vld [vmem:[%s1 + $0x1ec] sm:$0xf]
        %v455 = vld [vmem:[%s1 + $0x1f0] sm:$0xf]
        %v456 = vld [vmem:[%s1 + $0x1f4] sm:$0xf]
        %v457 = vld [vmem:[%s1 + $0x1f8] sm:$0xf]
        %v458 = vld [vmem:[%s1 + $0x1fc] sm:$0xf]
        %v459 = vld [vmem:[%s1 + $0x200] sm:$0xf]
        %v460 = vld [vmem:[%s1 + $0x204] sm:$0xf]
        %v461 = vld [vmem:[%s1 + $0x208] sm:$0xf]
        %v462 = vld [vmem:[%s1 + $0x20c] sm:$0xf]
        %v463 = vld [vmem:[%s1 + $0x210] sm:$0xf]
        %v464 = vld [vmem:[%s1 + $0x214] sm:$0xf]
        %v465 = vld [vmem:[%s1 + $0x218] sm:$0xf]
        %v466 = vld [vmem:[%s1 + $0x21c] sm:$0xf]
        %v467 = vld [vmem:[%s1 + $0x220] sm:$0xf]
        %v468 = vld [vmem:[%s1 + $0x224] sm:$0xf]
        %v469 = vld [vmem:[%s1 + $0x228] sm:$0xf]
        %v470 = vld [vmem:[%s1 + $0x22c] sm:$0xf]
        %v471 = vld [vmem:[%s1 + $0x230] sm:$0xf]
        %v472 = vld [vmem:[%s1 + $0x234] sm:$0xf]
        %v473 = vld [vmem:[%s1 + $0x238] sm:$0xf]
        %v474 = vld [vmem:[%s1 + $0x23c] sm:$0xf]
        %v475 = vld [vmem:[%s1 + $0x240] sm:$0xf]
        %v476 = vld [vmem:[%s1 + $0x244] sm:$0xf]
        %v477 = vld [vmem:[%s1 + $0x248] sm:$0xf]
        %v478 = vld [vmem:[%s1 + $0x24c] sm:$0xf]
        %v479 = vld [vmem:[%s1 + $0x250] sm:$0xf]
        %v480 = vld [vmem:[%s1 + $0x254] sm:$0xf]
        %v481 = vld [vmem:[%s1 + $0x258] sm:$0xf]
        %v482 = vld [vmem:[%s1 + $0x25c] sm:$0xf]
        %v483 = vld [vmem:[%s1 + $0x260] sm:$0xf]
        %v484 = vld [vmem:[%s1 + $0x264] sm:$0xf]
        %v485 = vld [vmem:[%s1 + $0x268] sm:$0xf]
        %v486 = vld [vmem:[%s1 + $0x26c] sm:$0xf]
        %v487 = vld [vmem:[%s1 + $0x270] sm:$0xf]
        %v488 = vld [vmem:[%s1 + $0x274] sm:$0xf]
        %v489 = vld [vmem:[%s1 + $0x278] sm:$0xf]
        %v490 = vld [vmem:[%s1 + $0x27c] sm:$0xf]
        %v491 = vld [vmem:[%s1 + $0x280] sm:$0xf]
        %v492 = vld [vmem:[%s1 + $0x284] sm:$0xf]
        %v493 = vld [vmem:[%s1 + $0x288] sm:$0xf]
        %v494 = vld [vmem:[%s1 + $0x28c] sm:$0xf]
        %v495 = vld [vmem:[%s1 + $0x290] sm:$0xf]
        %v496 = vld [vmem:[%s1 + $0x294] sm:$0xf]
        %v497 = vld [vmem:[%s1 + $0x298] sm:$0xf]
        %v498 = vld [vmem:[%s1 + $0x29c] sm:$0xf]
        %v499 = vld [vmem:[%s1 + $0x2a0] sm:$0xf]
        %v500 = vld [vmem:[%s1 + $0x2a4] sm:$0xf]
        %v501 = vld [vmem:[%s1 + $0x2a8] sm:$0xf]
        %v502 = vld [vmem:[%s1 + $0x2ac] sm:$0xf]
        %v503 = vld [vmem:[%s1 + $0x2b0] sm:$0xf]
        %v504 = vld [vmem:[%s1 + $0x2b4] sm:$0xf]
        %v505 = vld [vmem:[%s1 + $0x2b8] sm:$0xf]
        %v506 = vld [vmem:[%s1 + $0x2bc] sm:$0xf]
        %v507 = vld [vmem:[%s1 + $0x2c0] sm:$0xf]
        %v508 = vld [vmem:[%s1 + $0x2c4] sm:$0xf]
        %v509 = vld [vmem:[%s1 + $0x2c8] sm:$0xf]
        %v510 = vld [vmem:[%s1 + $0x2cc] sm:$0xf]
        %v511 = vld [vmem:[%s1 + $0x2d0] sm:$0xf]
        %v512 = vld [vmem:[%s1 + $0x2d4] sm:$0xf]
        %v513 = vld [vmem:[%s1 + $0x2d8] sm:$0xf]
        %v514 = vld [vmem:[%s1 + $0x2dc] sm:$0xf]
        %v515 = vld [vmem:[%s1 + $0x2e0] sm:$0xf]
        %v516 = vld [vmem:[%s1 + $0x2e4] sm:$0xf]
        %v517 = vld [vmem:[%s1 + $0x2e8] sm:$0xf]
        %v518 = vld [vmem:[%s1 + $0x2ec] sm:$0xf]
        %v519 = vld [vmem:[%s1 + $0x2f0] sm:$0xf]
        %v520 = vld [vmem:[%s1 + $0x2f4] sm:$0xf]
        %v521 = vld [vmem:[%s1 + $0x2f8] sm:$0xf]
        %v522 = vld [vmem:[%s1 + $0x2fc] sm:$0xf]
        %v523 = vld [vmem:[%s1 + $0x300] sm:$0xf]
        %v524 = vld [vmem:[%s1 + $0x304] sm:$0xf]
        %v525 = vld [vmem:[%s1 + $0x308] sm:$0xf]
        %v526 = vld [vmem:[%s1 + $0x30c] sm:$0xf]
        %v527 = vld [vmem:[%s1 + $0x310] sm:$0xf]
        %v528 = vld [vmem:[%s1 + $0x314] sm:$0xf]
        %v529 = vld [vmem:[%s1 + $0x318] sm:$0xf]
        %v530 = vld [vmem:[%s1 + $0x31c] sm:$0xf]
        %v531 = vld [vmem:[%s1 + $0x320] sm:$0xf]
        %v532 = vld [vmem:[%s1 + $0x324] sm:$0xf]
        %v533 = vld [vmem:[%s1 + $0x328] sm:$0xf]
        %v534 = vld [vmem:[%s1 + $0x32c] sm:$0xf]
        %v535 = vld [vmem:[%s1 + $0x330] sm:$0xf]
        %v536 = vld [vmem:[%s1 + $0x334] sm:$0xf]
        %v537 = vld [vmem:[%s1 + $0x338] sm:$0xf]
        %v538 = vld [vmem:[%s1 + $0x33c] sm:$0xf]
        %v539 = vld [vmem:[%s1 + $0x340] sm:$0xf]
        %v540 = vld [vmem:[%s1 + $0x344] sm:$0xf]
        %v541 = vld [vmem:[%s1 + $0x348] sm:$0xf]
        %v542 = vld [vmem:[%s1 + $0x34c] sm:$0xf]
        %v543 = vld [vmem:[%s1 + $0x350] sm:$0xf]
        %v544 = vld [vmem:[%s1 + $0x354] sm:$0xf]
        %v545 = vld [vmem:[%s1 + $0x358] sm:$0xf]
        %v546 = vld [vmem:[%s1 + $0x35c] sm:$0xf]
        %v547 = vld [vmem:[%s1 + $0x360] sm:$0xf]
        %v548 = vld [vmem:[%s1 + $0x364] sm:$0xf]
        %v549 = vld [vmem:[%s1 + $0x368] sm:$0xf]
        %v550 = vld [vmem:[%s1 + $0x36c] sm:$0xf]
        %v551 = vld [vmem:[%s1 + $0x370] sm:$0xf]
        %v552 = vld [vmem:[%s1 + $0x374] sm:$0xf]
        %v553 = vld [vmem:[%s1 + $0x378] sm:$0xf]
        %v554 = vld [vmem:[%s1 + $0x37c] sm:$0xf]
        %v555 = vld [vmem:[%s1 + $0x380] sm:$0xf]
        %v556 = vld [vmem:[%s1 + $0x384] sm:$0xf]
        %v557 = vld [vmem:[%s1 + $0x388] sm:$0xf]
        %v558 = vld [vmem:[%s1 + $0x38c] sm:$0xf]
        %v559 = vld [vmem:[%s1 + $0x390] sm:$0xf]
        %v560 = vld [vmem:[%s1 + $0x394] sm:$0xf]
        %v561 = vld [vmem:[%s1 + $0x398] sm:$0xf]
        %v562 = vld [vmem:[%s1 + $0x39c] sm:$0xf]
        %v563 = vld [vmem:[%s1 + $0x3a0] sm:$0xf]
        %v564 = vld [vmem:[%s1 + $0x3a4] sm:$0xf]
        %v565 = vld [vmem:[%s1 + $0x3a8] sm:$0xf]
        %v566 = vld [vmem:[%s1 + $0x3ac] sm:$0xf]
        %v567 = vld [vmem:[%s1 + $0x3b0] sm:$0xf]
        %v568 = vld [vmem:[%s1 + $0x3b4] sm:$0xf]
        %v569 = vld [vmem:[%s1 + $0x3b8] sm:$0xf]
        %v570 = vld [vmem:[%s1 + $0x3bc] sm:$0xf]
        %v571 = vld [vmem:[%s1 + $0x3c0] sm:$0xf]
        %v572 = vld [vmem:[%s1 + $0x3c4] sm:$0xf]
        %v573 = vld [vmem:[%s1 + $0x3c8] sm:$0xf]
        %v574 = vld [vmem:[%s1 + $0x3cc] sm:$0xf]
        %v575 = vld [vmem:[%s1 + $0x3d0] sm:$0xf]
        %v576 = vld [vmem:[%s1 + $0x3d4] sm:$0xf]
        %v577 = vld [vmem:[%s1 + $0x3d8] sm:$0xf]
        %v578 = vld [vmem:[%s1 + $0x3dc] sm:$0xf]
        %v579 = vld [vmem:[%s1 + $0x3e0] sm:$0xf]
        %v580 = vld [vmem:[%s1 + $0x3e4] sm:$0xf]
        %v581 = vld [vmem:[%s1 + $0x3e8] sm:$0xf]
        %v582 = vld [vmem:[%s1 + $0x3ec] sm:$0xf]
        %v583 = vld [vmem:[%s1 + $0x3f0] sm:$0xf]
        %v584 = vld [vmem:[%s1 + $0x3f4] sm:$0xf]
        %v585 = vld [vmem:[%s1 + $0x3f8] sm:$0xf]
        %v586 = vld [vmem:[%s1 + $0x3fc] sm:$0xf]
        %v587 = vld [vmem:[%s1 + $0x400] sm:$0xf]
        %v588 = vld [vmem:[%s1 + $0x404] sm:$0xf]
        %v589 = vld [vmem:[%s1 + $0x408] sm:$0xf]
        %v590 = vld [vmem:[%s1 + $0x40c] sm:$0xf]
        %v591 = vld [vmem:[%s1 + $0x410] sm:$0xf]
        %v592 = vld [vmem:[%s1 + $0x414] sm:$0xf]
        %v593 = vld [vmem:[%s1 + $0x418] sm:$0xf]
        %v594 = vld [vmem:[%s1 + $0x41c] sm:$0xf]
        %v595 = vld [vmem:[%s1 + $0x420] sm:$0xf]
        %v596 = vld [vmem:[%s1 + $0x424] sm:$0xf]
        %v597 = vld [vmem:[%s1 + $0x428] sm:$0xf]
        %v598 = vld [vmem:[%s1 + $0x42c] sm:$0xf]
        %v599 = vld [vmem:[%s1 + $0x430] sm:$0xf]
        %v600 = vld [vmem:[%s1 + $0x434] sm:$0xf]
        %v601 = vld [vmem:[%s1 + $0x438] sm:$0xf]
        %v602 = vld [vmem:[%s1 + $0x43c] sm:$0xf]
        %v603 = vld [vmem:[%s1 + $0x440] sm:$0xf]
        %v604 = vld [vmem:[%s1 + $0x444] sm:$0xf]
        %v605 = vld [vmem:[%s1 + $0x448] sm:$0xf]
        %v606 = vld [vmem:[%s1 + $0x44c] sm:$0x7]
        %v607 = vld [vmem:[%s2] sm:$0x1]
        %v608 = vld [vmem:[%s329] sm:$0xff]
        %v609 = vld [vmem:[%s329 + $0x8] sm:$0xff]
        %v610 = vld [vmem:[%s329 + $0x10] sm:$0xff]
        %v611 = vld [vmem:[%s329 + $0x18] sm:$0xff]
        %v612 = vld [vmem:[%s329 + $0x20] sm:$0xff]
        %v613 = vld [vmem:[%s329 + $0x28] sm:$0xff]
        %v614 = vld [vmem:[%s329 + $0x30] sm:$0xff]
        %v615 = vld [vmem:[%s329 + $0x38] sm:$0xff]
        %v616 = vld [vmem:[%s329 + $0x40] sm:$0xff]
        %v617 = vld [vmem:[%s329 + $0x48] sm:$0xff]
        %v618 = vld [vmem:[%s329 + $0x50] sm:$0xff]
        %v619 = vld [vmem:[%s329 + $0x58] sm:$0xff]
        %v620 = vld [vmem:[%s329 + $0x60] sm:$0xff]
        %v621 = vld [vmem:[%s329 + $0x68] sm:$0xff]
        %v622 = vld [vmem:[%s329 + $0x70] sm:$0xff]
        %v623 = vld [vmem:[%s329 + $0x78] sm:$0xff]
        %v624 = vld [vmem:[%s329 + $0x80] sm:$0xff]
        %v625 = vld [vmem:[%s329 + $0x88] sm:$0xff]
        %v627 = vlaneseq
        %v628 = vshrl.u32 %v627, 7
        %v629 = vsub.s32 0, %v628
        %v630 = vrot.slane %v607, %v629
        %v650 = vunpack.c.l.b16 %v608
        %v651 = vunpack.c.h.b16 %v608
        %v652 = vunpack.c.l.b16 %v609
        %v653 = vunpack.c.h.b16 %v609
        %v654 = vunpack.c.l.b16 %v610
        %v655 = vunpack.c.h.b16 %v610
        %v656 = vunpack.c.l.b16 %v611
        %v657 = vunpack.c.h.b16 %v611
        %v658 = vunpack.c.l.b16 %v612
        %v659 = vunpack.c.h.b16 %v612
        %v660 = vunpack.c.l.b16 %v613
        %v661 = vunpack.c.h.b16 %v613
        %v662 = vunpack.c.l.b16 %v614
        %v663 = vunpack.c.h.b16 %v614
        %v664 = vunpack.c.l.b16 %v615
        %v665 = vunpack.c.h.b16 %v615
        %v666 = vunpack.c.l.b16 %v616
        %v667 = vunpack.c.h.b16 %v616
        %v668 = vunpack.c.l.b16 %v617
        %v669 = vunpack.c.h.b16 %v617
        %v670 = vunpack.c.l.b16 %v618
        %v671 = vunpack.c.h.b16 %v618
        %v672 = vunpack.c.l.b16 %v619
        %v673 = vunpack.c.h.b16 %v619
        %v674 = vunpack.c.l.b16 %v620
        %v675 = vunpack.c.h.b16 %v620
        %v676 = vunpack.c.l.b16 %v621
        %v677 = vunpack.c.h.b16 %v621
        %v678 = vunpack.c.l.b16 %v622
        %v679 = vunpack.c.h.b16 %v622
        %v680 = vunpack.c.l.b16 %v623
        %v681 = vunpack.c.h.b16 %v623
        %v682 = vunpack.c.l.b16 %v624
        %v683 = vunpack.c.h.b16 %v624
        %v684 = vunpack.c.l.b16 %v625
        %v685 = vunpack.c.h.b16 %v625
        %v686 = vpack.c.b16 %v668, %v650
        %v687 = vpack.c.b16 %v669, %v651
        %v688 = vpack.c.b16 %v670, %v652
        %v689 = vpack.c.b16 %v671, %v653
        %v690 = vpack.c.b16 %v672, %v654
        %v691 = vpack.c.b16 %v673, %v655
        %v692 = vpack.c.b16 %v674, %v656
        %v693 = vpack.c.b16 %v675, %v657
        %v694 = vpack.c.b16 %v676, %v658
        %v695 = vpack.c.b16 %v677, %v659
        %v696 = vpack.c.b16 %v678, %v660
        %v697 = vpack.c.b16 %v679, %v661
        %v698 = vpack.c.b16 %v680, %v662
        %v699 = vpack.c.b16 %v681, %v663
        %v700 = vpack.c.b16 %v682, %v664
        %v701 = vpack.c.b16 %v683, %v665
        %v702 = vpack.c.b16 %v684, %v666
        %v703 = vpack.c.b16 %v685, %v667
        %v997 = vunpack.c.l.b16 %v331
        %v998 = vunpack.c.l.b16 %v332
        %v999 = vunpack.c.l.b16 %v333
        %v1000 = vunpack.c.l.b16 %v334
        %v1001 = vunpack.c.l.b16 %v335
        %v1002 = vunpack.c.l.b16 %v336
        %v1003 = vunpack.c.l.b16 %v337
        %v1004 = vunpack.c.l.b16 %v338
        %v1005 = vunpack.c.l.b16 %v339
        %v1006 = vunpack.c.l.b16 %v340
        %v1007 = vunpack.c.l.b16 %v341
        %v1008 = vunpack.c.l.b16 %v342
        %v1009 = vunpack.c.l.b16 %v343
        %v1010 = vunpack.c.l.b16 %v344
        %v1011 = vunpack.c.l.b16 %v345
        %v1012 = vunpack.c.l.b16 %v346
        %v1013 = vunpack.c.l.b16 %v347
        %v1014 = vunpack.c.l.b16 %v348
        %v1015 = vunpack.c.l.b16 %v349
        %v1016 = vunpack.c.l.b16 %v350
        %v1017 = vunpack.c.l.b16 %v351
        %v1018 = vunpack.c.l.b16 %v352
        %v1019 = vunpack.c.l.b16 %v353
        %v1020 = vunpack.c.l.b16 %v354
        %v1021 = vunpack.c.l.b16 %v355
        %v1022 = vunpack.c.l.b16 %v356
        %v1023 = vunpack.c.l.b16 %v357
        %v1024 = vunpack.c.l.b16 %v358
        %v1025 = vunpack.c.l.b16 %v359
        %v1026 = vunpack.c.l.b16 %v360
        %v1027 = vunpack.c.l.b16 %v361
        %v1028 = vunpack.c.l.b16 %v362
        %v1029 = vunpack.c.l.b16 %v363
        %v1030 = vunpack.c.l.b16 %v364
        %v1031 = vunpack.c.l.b16 %v365
        %v1032 = vunpack.c.l.b16 %v366
        %v1033 = vunpack.c.l.b16 %v367
        %v1034 = vunpack.c.l.b16 %v368
        %v1035 = vunpack.c.l.b16 %v369
        %v1036 = vunpack.c.l.b16 %v370
        %v1037 = vunpack.c.l.b16 %v371
        %v1038 = vunpack.c.l.b16 %v372
        %v1039 = vunpack.c.l.b16 %v373
        %v1040 = vunpack.c.l.b16 %v374
        %v1041 = vunpack.c.l.b16 %v375
        %v1042 = vunpack.c.l.b16 %v376
        %v1043 = vunpack.c.l.b16 %v377
        %v1044 = vunpack.c.l.b16 %v378
        %v1045 = vunpack.c.l.b16 %v379
        %v1046 = vunpack.c.l.b16 %v380
        %v1047 = vunpack.c.l.b16 %v381
        %v1048 = vunpack.c.l.b16 %v382
        %v1049 = vunpack.c.l.b16 %v383
        %v1050 = vunpack.c.l.b16 %v384
        %v1051 = vunpack.c.l.b16 %v385
        %v1052 = vunpack.c.l.b16 %v386
        %v1053 = vunpack.c.l.b16 %v387
        %v1054 = vunpack.c.l.b16 %v388
        %v1055 = vunpack.c.l.b16 %v389
        %v1056 = vunpack.c.l.b16 %v390
        %v1057 = vunpack.c.l.b16 %v391
        %v1058 = vunpack.c.l.b16 %v392
        %v1059 = vunpack.c.l.b16 %v393
        %v1060 = vunpack.c.l.b16 %v394
        %v1061 = vunpack.c.l.b16 %v395
        %v1062 = vunpack.c.l.b16 %v396
        %v1063 = vunpack.c.l.b16 %v397
        %v1064 = vunpack.c.l.b16 %v398
        %v1065 = vunpack.c.l.b16 %v399
        %v1066 = vunpack.c.l.b16 %v400
        %v1067 = vunpack.c.l.b16 %v401
        %v1068 = vunpack.c.l.b16 %v402
        %v1069 = vunpack.c.l.b16 %v403
        %v1070 = vunpack.c.l.b16 %v404
        %v1071 = vunpack.c.l.b16 %v405
        %v1072 = vunpack.c.l.b16 %v406
        %v1073 = vunpack.c.l.b16 %v407
        %v1074 = vunpack.c.l.b16 %v408
        %v1075 = vunpack.c.l.b16 %v409
        %v1076 = vunpack.c.l.b16 %v410
        %v1077 = vunpack.c.l.b16 %v411
        %v1078 = vunpack.c.l.b16 %v412
        %v1079 = vunpack.c.l.b16 %v413
        %v1080 = vunpack.c.l.b16 %v414
        %v1081 = vunpack.c.l.b16 %v415
        %v1082 = vunpack.c.l.b16 %v416
        %v1083 = vunpack.c.l.b16 %v417
        %v1084 = vunpack.c.l.b16 %v418
        %v1085 = vunpack.c.l.b16 %v419
        %v1086 = vunpack.c.l.b16 %v420
        %v1087 = vunpack.c.l.b16 %v421
        %v1088 = vunpack.c.l.b16 %v422
        %v1089 = vunpack.c.l.b16 %v423
        %v1090 = vunpack.c.l.b16 %v424
        %v1091 = vunpack.c.l.b16 %v425
        %v1092 = vunpack.c.l.b16 %v426
        %v1093 = vunpack.c.l.b16 %v427
        %v1094 = vunpack.c.l.b16 %v428
        %v1095 = vunpack.c.l.b16 %v429
        %v1096 = vunpack.c.l.b16 %v430
        %v1097 = vunpack.c.l.b16 %v431
        %v1098 = vunpack.c.l.b16 %v432
        %v1099 = vunpack.c.l.b16 %v433
        %v1100 = vunpack.c.l.b16 %v434
        %v1101 = vunpack.c.l.b16 %v435
        %v1102 = vunpack.c.l.b16 %v436
        %v1103 = vunpack.c.l.b16 %v437
        %v1104 = vunpack.c.l.b16 %v438
        %v1105 = vunpack.c.l.b16 %v439
        %v1106 = vunpack.c.l.b16 %v440
        %v1107 = vunpack.c.l.b16 %v441
        %v1108 = vunpack.c.l.b16 %v442
        %v1109 = vunpack.c.l.b16 %v443
        %v1110 = vunpack.c.l.b16 %v444
        %v1111 = vunpack.c.l.b16 %v445
        %v1112 = vunpack.c.l.b16 %v446
        %v1113 = vunpack.c.l.b16 %v447
        %v1114 = vunpack.c.l.b16 %v448
        %v1115 = vunpack.c.l.b16 %v449
        %v1116 = vunpack.c.l.b16 %v450
        %v1117 = vunpack.c.l.b16 %v451
        %v1118 = vunpack.c.l.b16 %v452
        %v1119 = vunpack.c.l.b16 %v453
        %v1120 = vunpack.c.l.b16 %v454
        %v1121 = vunpack.c.l.b16 %v455
        %v1122 = vunpack.c.l.b16 %v456
        %v1123 = vunpack.c.l.b16 %v457
        %v1124 = vunpack.c.l.b16 %v458
        %v1125 = vunpack.c.l.b16 %v459
        %v1126 = vunpack.c.l.b16 %v460
        %v1127 = vunpack.c.l.b16 %v461
        %v1128 = vunpack.c.l.b16 %v462
        %v1129 = vunpack.c.l.b16 %v463
        %v1130 = vunpack.c.l.b16 %v464
        %v1131 = vunpack.c.l.b16 %v465
        %v1132 = vunpack.c.l.b16 %v466
        %v1133 = vunpack.c.l.b16 %v467
        %v1134 = vunpack.c.l.b16 %v468
        %v1135 = vunpack.c.l.b16 %v469
        %v1136 = vunpack.c.l.b16 %v470
        %v1137 = vunpack.c.l.b16 %v471
        %v1138 = vunpack.c.l.b16 %v472
        %v1139 = vunpack.c.l.b16 %v473
        %v1140 = vunpack.c.l.b16 %v474
        %v1141 = vunpack.c.l.b16 %v475
        %v1142 = vunpack.c.l.b16 %v476
        %v1143 = vunpack.c.l.b16 %v477
        %v1144 = vunpack.c.l.b16 %v478
        %v1145 = vunpack.c.l.b16 %v479
        %v1146 = vunpack.c.l.b16 %v480
        %v1147 = vunpack.c.l.b16 %v481
        %v1148 = vunpack.c.l.b16 %v482
        %v1149 = vunpack.c.l.b16 %v483
        %v1150 = vunpack.c.l.b16 %v484
        %v1151 = vunpack.c.l.b16 %v485
        %v1152 = vunpack.c.l.b16 %v486
        %v1153 = vunpack.c.l.b16 %v487
        %v1154 = vunpack.c.l.b16 %v488
        %v1155 = vunpack.c.l.b16 %v489
        %v1156 = vunpack.c.l.b16 %v490
        %v1157 = vunpack.c.l.b16 %v491
        %v1158 = vunpack.c.l.b16 %v492
        %v1159 = vunpack.c.l.b16 %v493
        %v1160 = vunpack.c.l.b16 %v494
        %v1161 = vunpack.c.l.b16 %v495
        %v1162 = vunpack.c.l.b16 %v496
        %v1163 = vunpack.c.l.b16 %v497
        %v1164 = vunpack.c.l.b16 %v498
        %v1165 = vunpack.c.l.b16 %v499
        %v1166 = vunpack.c.l.b16 %v500
        %v1167 = vunpack.c.l.b16 %v501
        %v1168 = vunpack.c.l.b16 %v502
        %v1169 = vunpack.c.l.b16 %v503
        %v1170 = vunpack.c.l.b16 %v504
        %v1171 = vunpack.c.l.b16 %v505
        %v1172 = vunpack.c.l.b16 %v506
        %v1173 = vunpack.c.l.b16 %v507
        %v1174 = vunpack.c.l.b16 %v508
        %v1175 = vunpack.c.l.b16 %v509
        %v1176 = vunpack.c.l.b16 %v510
        %v1177 = vunpack.c.l.b16 %v511
        %v1178 = vunpack.c.l.b16 %v512
        %v1179 = vunpack.c.l.b16 %v513
        %v1180 = vunpack.c.l.b16 %v514
        %v1181 = vunpack.c.l.b16 %v515
        %v1182 = vunpack.c.l.b16 %v516
        %v1183 = vunpack.c.l.b16 %v517
        %v1184 = vunpack.c.l.b16 %v518
        %v1185 = vunpack.c.l.b16 %v519
        %v1186 = vunpack.c.l.b16 %v520
        %v1187 = vunpack.c.l.b16 %v521
        %v1188 = vunpack.c.l.b16 %v522
        %v1189 = vunpack.c.l.b16 %v523
        %v1190 = vunpack.c.l.b16 %v524
        %v1191 = vunpack.c.l.b16 %v525
        %v1192 = vunpack.c.l.b16 %v526
        %v1193 = vunpack.c.l.b16 %v527
        %v1194 = vunpack.c.l.b16 %v528
        %v1195 = vunpack.c.l.b16 %v529
        %v1196 = vunpack.c.l.b16 %v530
        %v1197 = vunpack.c.l.b16 %v531
        %v1198 = vunpack.c.l.b16 %v532
        %v1199 = vunpack.c.l.b16 %v533
        %v1200 = vunpack.c.l.b16 %v534
        %v1201 = vunpack.c.l.b16 %v535
        %v1202 = vunpack.c.l.b16 %v536
        %v1203 = vunpack.c.l.b16 %v537
        %v1204 = vunpack.c.l.b16 %v538
        %v1205 = vunpack.c.l.b16 %v539
        %v1206 = vunpack.c.l.b16 %v540
        %v1207 = vunpack.c.l.b16 %v541
        %v1208 = vunpack.c.l.b16 %v542
        %v1209 = vunpack.c.l.b16 %v543
        %v1210 = vunpack.c.l.b16 %v544
        %v1211 = vunpack.c.l.b16 %v545
        %v1212 = vunpack.c.l.b16 %v546
        %v1213 = vunpack.c.l.b16 %v547
        %v1214 = vunpack.c.l.b16 %v548
        %v1215 = vunpack.c.l.b16 %v549
        %v1216 = vunpack.c.l.b16 %v550
        %v1217 = vunpack.c.l.b16 %v551
        %v1218 = vunpack.c.l.b16 %v552
        %v1219 = vunpack.c.l.b16 %v553
        %v1220 = vunpack.c.l.b16 %v554
        %v1221 = vunpack.c.l.b16 %v555
        %v1222 = vunpack.c.l.b16 %v556
        %v1223 = vunpack.c.l.b16 %v557
        %v1224 = vunpack.c.l.b16 %v558
        %v1225 = vunpack.c.l.b16 %v559
        %v1226 = vunpack.c.l.b16 %v560
        %v1227 = vunpack.c.l.b16 %v561
        %v1228 = vunpack.c.l.b16 %v562
        %v1229 = vunpack.c.l.b16 %v563
        %v1230 = vunpack.c.l.b16 %v564
        %v1231 = vunpack.c.l.b16 %v565
        %v1232 = vunpack.c.l.b16 %v566
        %v1233 = vunpack.c.l.b16 %v567
        %v1234 = vunpack.c.l.b16 %v568
        %v1235 = vunpack.c.l.b16 %v569
        %v1236 = vunpack.c.l.b16 %v570
        %v1237 = vunpack.c.l.b16 %v571
        %v1238 = vunpack.c.l.b16 %v572
        %v1239 = vunpack.c.l.b16 %v573
        %v1240 = vunpack.c.l.b16 %v574
        %v1241 = vunpack.c.l.b16 %v575
        %v1242 = vunpack.c.l.b16 %v576
        %v1243 = vunpack.c.l.b16 %v577
        %v1244 = vunpack.c.l.b16 %v578
        %v1245 = vunpack.c.l.b16 %v579
        %v1246 = vunpack.c.l.b16 %v580
        %v1247 = vunpack.c.l.b16 %v581
        %v1248 = vunpack.c.l.b16 %v582
        %v1249 = vunpack.c.l.b16 %v583
        %v1250 = vunpack.c.l.b16 %v584
        %v1251 = vunpack.c.l.b16 %v585
        %v1252 = vunpack.c.l.b16 %v586
        %v1253 = vunpack.c.l.b16 %v587
        %v1254 = vunpack.c.l.b16 %v588
        %v1255 = vunpack.c.l.b16 %v589
        %v1256 = vunpack.c.l.b16 %v590
        %v1257 = vunpack.c.l.b16 %v591
        %v1258 = vunpack.c.l.b16 %v592
        %v1259 = vunpack.c.l.b16 %v593
        %v1260 = vunpack.c.l.b16 %v594
        %v1261 = vunpack.c.l.b16 %v595
        %v1262 = vunpack.c.l.b16 %v596
        %v1263 = vunpack.c.l.b16 %v597
        %v1264 = vunpack.c.l.b16 %v598
        %v1265 = vunpack.c.l.b16 %v599
        %v1266 = vunpack.c.l.b16 %v600
        %v1267 = vunpack.c.l.b16 %v601
        %v1268 = vunpack.c.l.b16 %v602
        %v1269 = vunpack.c.l.b16 %v603
        %v1270 = vunpack.c.l.b16 %v604
        %v1271 = vunpack.c.l.b16 %v605
        %v1272 = vunpack.c.l.b16 %v606
        %v1273 = vpack.c.b16 %v998, %v997
        %v1274 = vpack.c.b16 %v1000, %v999
        %v1275 = vpack.c.b16 %v1002, %v1001
        %v1276 = vpack.c.b16 %v1004, %v1003
        %v1277 = vpack.c.b16 %v1006, %v1005
        %v1278 = vpack.c.b16 %v1008, %v1007
        %v1279 = vpack.c.b16 %v1010, %v1009
        %v1280 = vpack.c.b16 %v1012, %v1011
        %v1281 = vpack.c.b16 %v1014, %v1013
        %v1282 = vpack.c.b16 %v1016, %v1015
        %v1283 = vpack.c.b16 %v1018, %v1017
        %v1284 = vpack.c.b16 %v1020, %v1019
        %v1285 = vpack.c.b16 %v1022, %v1021
        %v1286 = vpack.c.b16 %v1024, %v1023
        %v1287 = vpack.c.b16 %v1026, %v1025
        %v1288 = vpack.c.b16 %v1028, %v1027
        %v1289 = vpack.c.b16 %v1030, %v1029
        %v1290 = vpack.c.b16 %v1032, %v1031
        %v1291 = vpack.c.b16 %v1034, %v1033
        %v1292 = vpack.c.b16 %v1036, %v1035
        %v1293 = vpack.c.b16 %v1038, %v1037
        %v1294 = vpack.c.b16 %v1040, %v1039
        %v1295 = vpack.c.b16 %v1042, %v1041
        %v1296 = vpack.c.b16 %v1044, %v1043
        %v1297 = vpack.c.b16 %v1046, %v1045
        %v1298 = vpack.c.b16 %v1048, %v1047
        %v1299 = vpack.c.b16 %v1050, %v1049
        %v1300 = vpack.c.b16 %v1052, %v1051
        %v1301 = vpack.c.b16 %v1054, %v1053
        %v1302 = vpack.c.b16 %v1056, %v1055
        %v1303 = vpack.c.b16 %v1058, %v1057
        %v1304 = vpack.c.b16 %v1060, %v1059
        %v1305 = vpack.c.b16 %v1062, %v1061
        %v1306 = vpack.c.b16 %v1064, %v1063
        %v1307 = vpack.c.b16 %v1066, %v1065
        %v1308 = vpack.c.b16 %v1068, %v1067
        %v1309 = vpack.c.b16 %v1070, %v1069
        %v1310 = vpack.c.b16 %v1072, %v1071
        %v1311 = vpack.c.b16 %v1074, %v1073
        %v1312 = vpack.c.b16 %v1076, %v1075
        %v1313 = vpack.c.b16 %v1078, %v1077
        %v1314 = vpack.c.b16 %v1080, %v1079
        %v1315 = vpack.c.b16 %v1082, %v1081
        %v1316 = vpack.c.b16 %v1084, %v1083
        %v1317 = vpack.c.b16 %v1086, %v1085
        %v1318 = vpack.c.b16 %v1088, %v1087
        %v1319 = vpack.c.b16 %v1090, %v1089
        %v1320 = vpack.c.b16 %v1092, %v1091
        %v1321 = vpack.c.b16 %v1094, %v1093
        %v1322 = vpack.c.b16 %v1096, %v1095
        %v1323 = vpack.c.b16 %v1098, %v1097
        %v1324 = vpack.c.b16 %v1100, %v1099
        %v1325 = vpack.c.b16 %v1102, %v1101
        %v1326 = vpack.c.b16 %v1104, %v1103
        %v1327 = vpack.c.b16 %v1106, %v1105
        %v1328 = vpack.c.b16 %v1108, %v1107
        %v1329 = vpack.c.b16 %v1110, %v1109
        %v1330 = vpack.c.b16 %v1112, %v1111
        %v1331 = vpack.c.b16 %v1114, %v1113
        %v1332 = vpack.c.b16 %v1116, %v1115
        %v1333 = vpack.c.b16 %v1118, %v1117
        %v1334 = vpack.c.b16 %v1120, %v1119
        %v1335 = vpack.c.b16 %v1122, %v1121
        %v1336 = vpack.c.b16 %v1124, %v1123
        %v1337 = vpack.c.b16 %v1126, %v1125
        %v1338 = vpack.c.b16 %v1128, %v1127
        %v1339 = vpack.c.b16 %v1130, %v1129
        %v1340 = vpack.c.b16 %v1132, %v1131
        %v1341 = vpack.c.b16 %v1134, %v1133
        %v1342 = vpack.c.b16 %v1136, %v1135
        %v1343 = vpack.c.b16 %v1138, %v1137
        %v1344 = vpack.c.b16 %v1140, %v1139
        %v1345 = vpack.c.b16 %v1142, %v1141
        %v1346 = vpack.c.b16 %v1144, %v1143
        %v1347 = vpack.c.b16 %v1146, %v1145
        %v1348 = vpack.c.b16 %v1148, %v1147
        %v1349 = vpack.c.b16 %v1150, %v1149
        %v1350 = vpack.c.b16 %v1152, %v1151
        %v1351 = vpack.c.b16 %v1154, %v1153
        %v1352 = vpack.c.b16 %v1156, %v1155
        %v1353 = vpack.c.b16 %v1158, %v1157
        %v1354 = vpack.c.b16 %v1160, %v1159
        %v1355 = vpack.c.b16 %v1162, %v1161
        %v1356 = vpack.c.b16 %v1164, %v1163
        %v1357 = vpack.c.b16 %v1166, %v1165
        %v1358 = vpack.c.b16 %v1168, %v1167
        %v1359 = vpack.c.b16 %v1170, %v1169
        %v1360 = vpack.c.b16 %v1172, %v1171
        %v1361 = vpack.c.b16 %v1174, %v1173
        %v1362 = vpack.c.b16 %v1176, %v1175
        %v1363 = vpack.c.b16 %v1178, %v1177
        %v1364 = vpack.c.b16 %v1180, %v1179
        %v1365 = vpack.c.b16 %v1182, %v1181
        %v1366 = vpack.c.b16 %v1184, %v1183
        %v1367 = vpack.c.b16 %v1186, %v1185
        %v1368 = vpack.c.b16 %v1188, %v1187
        %v1369 = vpack.c.b16 %v1190, %v1189
        %v1370 = vpack.c.b16 %v1192, %v1191
        %v1371 = vpack.c.b16 %v1194, %v1193
        %v1372 = vpack.c.b16 %v1196, %v1195
        %v1373 = vpack.c.b16 %v1198, %v1197
        %v1374 = vpack.c.b16 %v1200, %v1199
        %v1375 = vpack.c.b16 %v1202, %v1201
        %v1376 = vpack.c.b16 %v1204, %v1203
        %v1377 = vpack.c.b16 %v1206, %v1205
        %v1378 = vpack.c.b16 %v1208, %v1207
        %v1379 = vpack.c.b16 %v1210, %v1209
        %v1380 = vpack.c.b16 %v1212, %v1211
        %v1381 = vpack.c.b16 %v1214, %v1213
        %v1382 = vpack.c.b16 %v1216, %v1215
        %v1383 = vpack.c.b16 %v1218, %v1217
        %v1384 = vpack.c.b16 %v1220, %v1219
        %v1385 = vpack.c.b16 %v1222, %v1221
        %v1386 = vpack.c.b16 %v1224, %v1223
        %v1387 = vpack.c.b16 %v1226, %v1225
        %v1388 = vpack.c.b16 %v1228, %v1227
        %v1389 = vpack.c.b16 %v1230, %v1229
        %v1390 = vpack.c.b16 %v1232, %v1231
        %v1391 = vpack.c.b16 %v1234, %v1233
        %v1392 = vpack.c.b16 %v1236, %v1235
        %v1393 = vpack.c.b16 %v1238, %v1237
        %v1394 = vpack.c.b16 %v1240, %v1239
        %v1395 = vpack.c.b16 %v1242, %v1241
        %v1396 = vpack.c.b16 %v1244, %v1243
        %v1397 = vpack.c.b16 %v1246, %v1245
        %v1398 = vpack.c.b16 %v1248, %v1247
        %v1399 = vpack.c.b16 %v1250, %v1249
        %v1400 = vpack.c.b16 %v1252, %v1251
        %v1401 = vpack.c.b16 %v1254, %v1253
        %v1402 = vpack.c.b16 %v1256, %v1255
        %v1403 = vpack.c.b16 %v1258, %v1257
        %v1404 = vpack.c.b16 %v1260, %v1259
        %v1405 = vpack.c.b16 %v1262, %v1261
        %v1406 = vpack.c.b16 %v1264, %v1263
        %v1407 = vpack.c.b16 %v1266, %v1265
        %v1408 = vpack.c.b16 %v1268, %v1267
        %v1409 = vpack.c.b16 %v1270, %v1269
        %v1410 = vpack.c.b16 %v1272, %v1271
        %vm1548 = vcmask 236544
        %v1550 = vsel %vm1548, %v703, 0
        %vm1552 = vcmask 1045504
        %vm1553 = vcmask 1046528
        %v1554 = vsel %vm1552, 4294967295, 65535
        %v1555 = vsel %vm1553, %v1554, 0
        %v1557 = vand.u32 %v1410, %v1555
        %1559 = vmatprep.subr.bf16.mxu0 0
        %1560 = vmatpush1.bf16.msra.mxu0 %v1280
        %1561 = vmatprep.subr.bf16.mxu0 0
        %1562 = vmatpush1.bf16.msra.mxu0 %v1279
        %1563 = vmatprep.subr.bf16.mxu0 0
        %1564 = vmatpush1.bf16.msra.mxu0 %v1278
        %1565 = vmatprep.subr.bf16.mxu0 0
        %1566 = vmatpush1.bf16.msra.mxu0 %v1277
        %1567 = vmatprep.subr.bf16.mxu0 0
        %1568 = vmatpush1.bf16.msra.mxu0 %v1276
        %1569 = vmatprep.subr.bf16.mxu0 0
        %1570 = vmatpush1.bf16.msra.mxu0 %v1275
        %1571 = vmatprep.subr.bf16.mxu0 0
        %1572 = vmatpush1.bf16.msra.mxu0 %v1274
        %1573 = vmatprep.subr.bf16.mxu0 0
        %1574 = vmatpush1.bf16.msra.mxu0 %v1273
        %1575 = vmatprep.subr.bf16.mxu0 0
        %1576 = vmatpush2.bf16.msra.mxu0 %v1288
        %1577 = vmatprep.subr.bf16.mxu0 0
        %1578 = vmatpush2.bf16.msra.mxu0 %v1287
        %1579 = vmatprep.subr.bf16.mxu0 0
        %1580 = vmatpush2.bf16.msra.mxu0 %v1286
        %1581 = vmatprep.subr.bf16.mxu0 0
        %1582 = vmatpush2.bf16.msra.mxu0 %v1285
        %1583 = vmatprep.subr.bf16.mxu0 0
        %1584 = vmatpush2.bf16.msra.mxu0 %v1284
        %1585 = vmatprep.subr.bf16.mxu0 0
        %1586 = vmatpush2.bf16.msra.mxu0 %v1283
        %1587 = vmatprep.subr.bf16.mxu0 0
        %1588 = vmatpush2.bf16.msra.mxu0 %v1282
        %1589 = vmatprep.subr.bf16.mxu0 0
        %1590 = vmatpush2.bf16.msra.mxu0 %v1281
        %1591 = vmatprep.mubr.bf16.mxu0 %v687
        %1592 = vmatmul.mubr.bf16.gmra.mxu0 %v686
        %v1593 = vpop.f32.mrf.mxu0
        %v1594 = vadd.f32 %v630, %v1593
        %v1595 = vpop.f32.mrf.mxu0
        %v1596 = vpop.f32.mrf.mxu0
        %v1597 = vadd.f32 %v630, %v1596
        %v1598 = vpop.f32.mrf.mxu0
        %1599 = vdwg.mxu0
        %1600 = vmatprep.subr.bf16.mxu0 0
        %1601 = vmatpush1.bf16.msra.mxu0 %v1296
        %1602 = vmatprep.subr.bf16.mxu0 0
        %1603 = vmatpush1.bf16.msra.mxu0 %v1295
        %1604 = vmatprep.subr.bf16.mxu0 0
        %1605 = vmatpush1.bf16.msra.mxu0 %v1294
        %1606 = vmatprep.subr.bf16.mxu0 0
        %1607 = vmatpush1.bf16.msra.mxu0 %v1293
        %1608 = vmatprep.subr.bf16.mxu0 0
        %1609 = vmatpush1.bf16.msra.mxu0 %v1292
        %1610 = vmatprep.subr.bf16.mxu0 0
        %1611 = vmatpush1.bf16.msra.mxu0 %v1291
        %1612 = vmatprep.subr.bf16.mxu0 0
        %1613 = vmatpush1.bf16.msra.mxu0 %v1290
        %1614 = vmatprep.subr.bf16.mxu0 0
        %1615 = vmatpush1.bf16.msra.mxu0 %v1289
        %1616 = vmatprep.subr.bf16.mxu0 0
        %1617 = vmatpush2.bf16.msra.mxu0 %v1304
        %1618 = vmatprep.subr.bf16.mxu0 0
        %1619 = vmatpush2.bf16.msra.mxu0 %v1303
        %1620 = vmatprep.subr.bf16.mxu0 0
        %1621 = vmatpush2.bf16.msra.mxu0 %v1302
        %1622 = vmatprep.subr.bf16.mxu0 0
        %1623 = vmatpush2.bf16.msra.mxu0 %v1301
        %1624 = vmatprep.subr.bf16.mxu0 0
        %1625 = vmatpush2.bf16.msra.mxu0 %v1300
        %1626 = vmatprep.subr.bf16.mxu0 0
        %1627 = vmatpush2.bf16.msra.mxu0 %v1299
        %1628 = vmatprep.subr.bf16.mxu0 0
        %1629 = vmatpush2.bf16.msra.mxu0 %v1298
        %1630 = vmatprep.subr.bf16.mxu0 0
        %1631 = vmatpush2.bf16.msra.mxu0 %v1297
        %1632 = vmatprep.mubr.bf16.mxu0 %v689
        %1633 = vmatmul.mubr.bf16.gmra.mxu0 %v688
        %v1634 = vpop.f32.mrf.mxu0
        %v1635 = vadd.f32 %v1594, %v1634
        %v1636 = vpop.f32.mrf.mxu0
        %v1637 = vpop.f32.mrf.mxu0
        %v1638 = vadd.f32 %v1597, %v1637
        %v1639 = vpop.f32.mrf.mxu0
        %1640 = vdwg.mxu0
        %1641 = vmatprep.subr.bf16.mxu0 0
        %1642 = vmatpush1.bf16.msra.mxu0 %v1312
        %1643 = vmatprep.subr.bf16.mxu0 0
        %1644 = vmatpush1.bf16.msra.mxu0 %v1311
        %1645 = vmatprep.subr.bf16.mxu0 0
        %1646 = vmatpush1.bf16.msra.mxu0 %v1310
        %1647 = vmatprep.subr.bf16.mxu0 0
        %1648 = vmatpush1.bf16.msra.mxu0 %v1309
        %1649 = vmatprep.subr.bf16.mxu0 0
        %1650 = vmatpush1.bf16.msra.mxu0 %v1308
        %1651 = vmatprep.subr.bf16.mxu0 0
        %1652 = vmatpush1.bf16.msra.mxu0 %v1307
        %1653 = vmatprep.subr.bf16.mxu0 0
        %1654 = vmatpush1.bf16.msra.mxu0 %v1306
        %1655 = vmatprep.subr.bf16.mxu0 0
        %1656 = vmatpush1.bf16.msra.mxu0 %v1305
        %1657 = vmatprep.subr.bf16.mxu0 0
        %1658 = vmatpush2.bf16.msra.mxu0 %v1320
        %1659 = vmatprep.subr.bf16.mxu0 0
        %1660 = vmatpush2.bf16.msra.mxu0 %v1319
        %1661 = vmatprep.subr.bf16.mxu0 0
        %1662 = vmatpush2.bf16.msra.mxu0 %v1318
        %1663 = vmatprep.subr.bf16.mxu0 0
        %1664 = vmatpush2.bf16.msra.mxu0 %v1317
        %1665 = vmatprep.subr.bf16.mxu0 0
        %1666 = vmatpush2.bf16.msra.mxu0 %v1316
        %1667 = vmatprep.subr.bf16.mxu0 0
        %1668 = vmatpush2.bf16.msra.mxu0 %v1315
        %1669 = vmatprep.subr.bf16.mxu0 0
        %1670 = vmatpush2.bf16.msra.mxu0 %v1314
        %1671 = vmatprep.subr.bf16.mxu0 0
        %1672 = vmatpush2.bf16.msra.mxu0 %v1313
        %1673 = vmatprep.mubr.bf16.mxu0 %v691
        %1674 = vmatmul.mubr.bf16.gmra.mxu0 %v690
        %v1675 = vpop.f32.mrf.mxu0
        %v1676 = vadd.f32 %v1635, %v1675
        %v1677 = vpop.f32.mrf.mxu0
        %v1678 = vpop.f32.mrf.mxu0
        %v1679 = vadd.f32 %v1638, %v1678
        %v1680 = vpop.f32.mrf.mxu0
        %1681 = vdwg.mxu0
        %1682 = vmatprep.subr.bf16.mxu0 0
        %1683 = vmatpush1.bf16.msra.mxu0 %v1328
        %1684 = vmatprep.subr.bf16.mxu0 0
        %1685 = vmatpush1.bf16.msra.mxu0 %v1327
        %1686 = vmatprep.subr.bf16.mxu0 0
        %1687 = vmatpush1.bf16.msra.mxu0 %v1326
        %1688 = vmatprep.subr.bf16.mxu0 0
        %1689 = vmatpush1.bf16.msra.mxu0 %v1325
        %1690 = vmatprep.subr.bf16.mxu0 0
        %1691 = vmatpush1.bf16.msra.mxu0 %v1324
        %1692 = vmatprep.subr.bf16.mxu0 0
        %1693 = vmatpush1.bf16.msra.mxu0 %v1323
        %1694 = vmatprep.subr.bf16.mxu0 0
        %1695 = vmatpush1.bf16.msra.mxu0 %v1322
        %1696 = vmatprep.subr.bf16.mxu0 0
        %1697 = vmatpush1.bf16.msra.mxu0 %v1321
        %1698 = vmatprep.subr.bf16.mxu0 0
        %1699 = vmatpush2.bf16.msra.mxu0 %v1336
        %1700 = vmatprep.subr.bf16.mxu0 0
        %1701 = vmatpush2.bf16.msra.mxu0 %v1335
        %1702 = vmatprep.subr.bf16.mxu0 0
        %1703 = vmatpush2.bf16.msra.mxu0 %v1334
        %1704 = vmatprep.subr.bf16.mxu0 0
        %1705 = vmatpush2.bf16.msra.mxu0 %v1333
        %1706 = vmatprep.subr.bf16.mxu0 0
        %1707 = vmatpush2.bf16.msra.mxu0 %v1332
        %1708 = vmatprep.subr.bf16.mxu0 0
        %1709 = vmatpush2.bf16.msra.mxu0 %v1331
        %1710 = vmatprep.subr.bf16.mxu0 0
        %1711 = vmatpush2.bf16.msra.mxu0 %v1330
        %1712 = vmatprep.subr.bf16.mxu0 0
        %1713 = vmatpush2.bf16.msra.mxu0 %v1329
        %1714 = vmatprep.mubr.bf16.mxu0 %v693
        %1715 = vmatmul.mubr.bf16.gmra.mxu0 %v692
        %v1716 = vpop.f32.mrf.mxu0
        %v1717 = vadd.f32 %v1676, %v1716
        %v1718 = vpop.f32.mrf.mxu0
        %v1719 = vpop.f32.mrf.mxu0
        %v1720 = vadd.f32 %v1679, %v1719
        %v1721 = vpop.f32.mrf.mxu0
        %1722 = vdwg.mxu0
        %1723 = vmatprep.subr.bf16.mxu0 0
        %1724 = vmatpush1.bf16.msra.mxu0 %v1344
        %1725 = vmatprep.subr.bf16.mxu0 0
        %1726 = vmatpush1.bf16.msra.mxu0 %v1343
        %1727 = vmatprep.subr.bf16.mxu0 0
        %1728 = vmatpush1.bf16.msra.mxu0 %v1342
        %1729 = vmatprep.subr.bf16.mxu0 0
        %1730 = vmatpush1.bf16.msra.mxu0 %v1341
        %1731 = vmatprep.subr.bf16.mxu0 0
        %1732 = vmatpush1.bf16.msra.mxu0 %v1340
        %1733 = vmatprep.subr.bf16.mxu0 0
        %1734 = vmatpush1.bf16.msra.mxu0 %v1339
        %1735 = vmatprep.subr.bf16.mxu0 0
        %1736 = vmatpush1.bf16.msra.mxu0 %v1338
        %1737 = vmatprep.subr.bf16.mxu0 0
        %1738 = vmatpush1.bf16.msra.mxu0 %v1337
        %1739 = vmatprep.subr.bf16.mxu0 0
        %1740 = vmatpush2.bf16.msra.mxu0 %v1352
        %1741 = vmatprep.subr.bf16.mxu0 0
        %1742 = vmatpush2.bf16.msra.mxu0 %v1351
        %1743 = vmatprep.subr.bf16.mxu0 0
        %1744 = vmatpush2.bf16.msra.mxu0 %v1350
        %1745 = vmatprep.subr.bf16.mxu0 0
        %1746 = vmatpush2.bf16.msra.mxu0 %v1349
        %1747 = vmatprep.subr.bf16.mxu0 0
        %1748 = vmatpush2.bf16.msra.mxu0 %v1348
        %1749 = vmatprep.subr.bf16.mxu0 0
        %1750 = vmatpush2.bf16.msra.mxu0 %v1347
        %1751 = vmatprep.subr.bf16.mxu0 0
        %1752 = vmatpush2.bf16.msra.mxu0 %v1346
        %1753 = vmatprep.subr.bf16.mxu0 0
        %1754 = vmatpush2.bf16.msra.mxu0 %v1345
        %1755 = vmatprep.mubr.bf16.mxu0 %v695
        %1756 = vmatmul.mubr.bf16.gmra.mxu0 %v694
        %v1757 = vpop.f32.mrf.mxu0
        %v1758 = vadd.f32 %v1717, %v1757
        %v1759 = vpop.f32.mrf.mxu0
        %v1760 = vpop.f32.mrf.mxu0
        %v1761 = vadd.f32 %v1720, %v1760
        %v1762 = vpop.f32.mrf.mxu0
        %1763 = vdwg.mxu0
        %1764 = vmatprep.subr.bf16.mxu0 0
        %1765 = vmatpush1.bf16.msra.mxu0 %v1360
        %1766 = vmatprep.subr.bf16.mxu0 0
        %1767 = vmatpush1.bf16.msra.mxu0 %v1359
        %1768 = vmatprep.subr.bf16.mxu0 0
        %1769 = vmatpush1.bf16.msra.mxu0 %v1358
        %1770 = vmatprep.subr.bf16.mxu0 0
        %1771 = vmatpush1.bf16.msra.mxu0 %v1357
        %1772 = vmatprep.subr.bf16.mxu0 0
        %1773 = vmatpush1.bf16.msra.mxu0 %v1356
        %1774 = vmatprep.subr.bf16.mxu0 0
        %1775 = vmatpush1.bf16.msra.mxu0 %v1355
        %1776 = vmatprep.subr.bf16.mxu0 0
        %1777 = vmatpush1.bf16.msra.mxu0 %v1354
        %1778 = vmatprep.subr.bf16.mxu0 0
        %1779 = vmatpush1.bf16.msra.mxu0 %v1353
        %1780 = vmatprep.subr.bf16.mxu0 0
        %1781 = vmatpush2.bf16.msra.mxu0 %v1368
        %1782 = vmatprep.subr.bf16.mxu0 0
        %1783 = vmatpush2.bf16.msra.mxu0 %v1367
        %1784 = vmatprep.subr.bf16.mxu0 0
        %1785 = vmatpush2.bf16.msra.mxu0 %v1366
        %1786 = vmatprep.subr.bf16.mxu0 0
        %1787 = vmatpush2.bf16.msra.mxu0 %v1365
        %1788 = vmatprep.subr.bf16.mxu0 0
        %1789 = vmatpush2.bf16.msra.mxu0 %v1364
        %1790 = vmatprep.subr.bf16.mxu0 0
        %1791 = vmatpush2.bf16.msra.mxu0 %v1363
        %1792 = vmatprep.subr.bf16.mxu0 0
        %1793 = vmatpush2.bf16.msra.mxu0 %v1362
        %1794 = vmatprep.subr.bf16.mxu0 0
        %1795 = vmatpush2.bf16.msra.mxu0 %v1361
        %1796 = vmatprep.mubr.bf16.mxu0 %v697
        %1797 = vmatmul.mubr.bf16.gmra.mxu0 %v696
        %v1798 = vpop.f32.mrf.mxu0
        %v1799 = vadd.f32 %v1758, %v1798
        %v1800 = vpop.f32.mrf.mxu0
        %v1801 = vpop.f32.mrf.mxu0
        %v1802 = vadd.f32 %v1761, %v1801
        %v1803 = vpop.f32.mrf.mxu0
        %1804 = vdwg.mxu0
        %1805 = vmatprep.subr.bf16.mxu0 0
        %1806 = vmatpush1.bf16.msra.mxu0 %v1376
        %1807 = vmatprep.subr.bf16.mxu0 0
        %1808 = vmatpush1.bf16.msra.mxu0 %v1375
        %1809 = vmatprep.subr.bf16.mxu0 0
        %1810 = vmatpush1.bf16.msra.mxu0 %v1374
        %1811 = vmatprep.subr.bf16.mxu0 0
        %1812 = vmatpush1.bf16.msra.mxu0 %v1373
        %1813 = vmatprep.subr.bf16.mxu0 0
        %1814 = vmatpush1.bf16.msra.mxu0 %v1372
        %1815 = vmatprep.subr.bf16.mxu0 0
        %1816 = vmatpush1.bf16.msra.mxu0 %v1371
        %1817 = vmatprep.subr.bf16.mxu0 0
        %1818 = vmatpush1.bf16.msra.mxu0 %v1370
        %1819 = vmatprep.subr.bf16.mxu0 0
        %1820 = vmatpush1.bf16.msra.mxu0 %v1369
        %1821 = vmatprep.subr.bf16.mxu0 0
        %1822 = vmatpush2.bf16.msra.mxu0 %v1384
        %1823 = vmatprep.subr.bf16.mxu0 0
        %1824 = vmatpush2.bf16.msra.mxu0 %v1383
        %1825 = vmatprep.subr.bf16.mxu0 0
        %1826 = vmatpush2.bf16.msra.mxu0 %v1382
        %1827 = vmatprep.subr.bf16.mxu0 0
        %1828 = vmatpush2.bf16.msra.mxu0 %v1381
        %1829 = vmatprep.subr.bf16.mxu0 0
        %1830 = vmatpush2.bf16.msra.mxu0 %v1380
        %1831 = vmatprep.subr.bf16.mxu0 0
        %1832 = vmatpush2.bf16.msra.mxu0 %v1379
        %1833 = vmatprep.subr.bf16.mxu0 0
        %1834 = vmatpush2.bf16.msra.mxu0 %v1378
        %1835 = vmatprep.subr.bf16.mxu0 0
        %1836 = vmatpush2.bf16.msra.mxu0 %v1377
        %1837 = vmatprep.mubr.bf16.mxu0 %v699
        %1838 = vmatmul.mubr.bf16.gmra.mxu0 %v698
        %v1839 = vpop.f32.mrf.mxu0
        %v1840 = vadd.f32 %v1799, %v1839
        %v1841 = vpop.f32.mrf.mxu0
        %v1842 = vpop.f32.mrf.mxu0
        %v1843 = vadd.f32 %v1802, %v1842
        %v1844 = vpop.f32.mrf.mxu0
        %1845 = vdwg.mxu0
        %1846 = vmatprep.subr.bf16.mxu0 0
        %1847 = vmatpush1.bf16.msra.mxu0 %v1392
        %1848 = vmatprep.subr.bf16.mxu0 0
        %1849 = vmatpush1.bf16.msra.mxu0 %v1391
        %1850 = vmatprep.subr.bf16.mxu0 0
        %1851 = vmatpush1.bf16.msra.mxu0 %v1390
        %1852 = vmatprep.subr.bf16.mxu0 0
        %1853 = vmatpush1.bf16.msra.mxu0 %v1389
        %1854 = vmatprep.subr.bf16.mxu0 0
        %1855 = vmatpush1.bf16.msra.mxu0 %v1388
        %1856 = vmatprep.subr.bf16.mxu0 0
        %1857 = vmatpush1.bf16.msra.mxu0 %v1387
        %1858 = vmatprep.subr.bf16.mxu0 0
        %1859 = vmatpush1.bf16.msra.mxu0 %v1386
        %1860 = vmatprep.subr.bf16.mxu0 0
        %1861 = vmatpush1.bf16.msra.mxu0 %v1385
        %1862 = vmatprep.subr.bf16.mxu0 0
        %1863 = vmatpush2.bf16.msra.mxu0 %v1400
        %1864 = vmatprep.subr.bf16.mxu0 0
        %1865 = vmatpush2.bf16.msra.mxu0 %v1399
        %1866 = vmatprep.subr.bf16.mxu0 0
        %1867 = vmatpush2.bf16.msra.mxu0 %v1398
        %1868 = vmatprep.subr.bf16.mxu0 0
        %1869 = vmatpush2.bf16.msra.mxu0 %v1397
        %1870 = vmatprep.subr.bf16.mxu0 0
        %1871 = vmatpush2.bf16.msra.mxu0 %v1396
        %1872 = vmatprep.subr.bf16.mxu0 0
        %1873 = vmatpush2.bf16.msra.mxu0 %v1395
        %1874 = vmatprep.subr.bf16.mxu0 0
        %1875 = vmatpush2.bf16.msra.mxu0 %v1394
        %1876 = vmatprep.subr.bf16.mxu0 0
        %1877 = vmatpush2.bf16.msra.mxu0 %v1393
        %1878 = vmatprep.mubr.bf16.mxu0 %v701
        %1879 = vmatmul.mubr.bf16.gmra.mxu0 %v700
        %v1880 = vpop.f32.mrf.mxu0
        %v1881 = vadd.f32 %v1840, %v1880
        %v1882 = vpop.f32.mrf.mxu0
        %v1883 = vpop.f32.mrf.mxu0
        %v1884 = vadd.f32 %v1843, %v1883
        %v1885 = vpop.f32.mrf.mxu0
        %1886 = vdwg.mxu0
        %1887 = vmatprep.subr.bf16.mxu0 0
        %1888 = vmatpush1.bf16.msra.mxu0 %v1408
        %1889 = vmatprep.subr.bf16.mxu0 0
        %1890 = vmatpush1.bf16.msra.mxu0 %v1407
        %1891 = vmatprep.subr.bf16.mxu0 0
        %1892 = vmatpush1.bf16.msra.mxu0 %v1406
        %1893 = vmatprep.subr.bf16.mxu0 0
        %1894 = vmatpush1.bf16.msra.mxu0 %v1405
        %1895 = vmatprep.subr.bf16.mxu0 0
        %1896 = vmatpush1.bf16.msra.mxu0 %v1404
        %1897 = vmatprep.subr.bf16.mxu0 0
        %1898 = vmatpush1.bf16.msra.mxu0 %v1403
        %1899 = vmatprep.subr.bf16.mxu0 0
        %1900 = vmatpush1.bf16.msra.mxu0 %v1402
        %1901 = vmatprep.subr.bf16.mxu0 0
        %1902 = vmatpush1.bf16.msra.mxu0 %v1401
        %1903 = vmatprep.subr.bf16.mxu0 0
        %1904 = vmatpush2.bf16.msra.mxu0 0
        %1905 = vmatprep.subr.bf16.mxu0 0
        %1906 = vmatpush2.bf16.msra.mxu0 0
        %1907 = vmatprep.subr.bf16.mxu0 0
        %1908 = vmatpush2.bf16.msra.mxu0 0
        %1909 = vmatprep.subr.bf16.mxu0 0
        %1910 = vmatpush2.bf16.msra.mxu0 0
        %1911 = vmatprep.subr.bf16.mxu0 0
        %1912 = vmatpush2.bf16.msra.mxu0 0
        %1913 = vmatprep.subr.bf16.mxu0 0
        %1914 = vmatpush2.bf16.msra.mxu0 0
        %1915 = vmatprep.subr.bf16.mxu0 0
        %1916 = vmatpush2.bf16.msra.mxu0 %v1557
        %1917 = vmatprep.subr.bf16.mxu0 0
        %1918 = vmatpush2.bf16.msra.mxu0 %v1409
        %1919 = vmatprep.mubr.bf16.mxu0 %v1550
        %1920 = vmatmul.mubr.bf16.gmra.mxu0 %v702
        %v1921 = vpop.f32.mrf.mxu0
        %v1922 = vadd.f32 %v1881, %v1921
        %v1923 = vpop.f32.mrf.mxu0
        %v1924 = vpop.f32.mrf.mxu0
        %v1925 = vadd.f32 %v1884, %v1924
        %v1926 = vpop.f32.mrf.mxu0
        %1927 = vdwg.mxu0
        %v1928 = vmax.f32 %v1922, 0.0
        %v1929 = vmax.f32 %v1925, 0.0
        %v1931 = vrot.slane %v1928, 1
        %1932 = vrot.lane.b32.xlu0 %v1931, 120
        %v1933 = vpop.permute.xlu0 %1932
        %v1935 = vrot.slane %v1928, 2
        %1936 = vrot.lane.b32.xlu0 %v1935, 112
        %v1937 = vpop.permute.xlu0 %1936
        %v1939 = vrot.slane %v1928, 3
        %1940 = vrot.lane.b32.xlu0 %v1939, 104
        %v1941 = vpop.permute.xlu0 %1940
        %v1943 = vrot.slane %v1928, 4
        %1944 = vrot.lane.b32.xlu0 %v1943, 96
        %v1945 = vpop.permute.xlu0 %1944
        %v1947 = vrot.slane %v1928, 5
        %1948 = vrot.lane.b32.xlu0 %v1947, 88
        %v1949 = vpop.permute.xlu0 %1948
        %v1951 = vrot.slane %v1928, 6
        %1952 = vrot.lane.b32.xlu0 %v1951, 80
        %v1953 = vpop.permute.xlu0 %1952
        %v1955 = vrot.slane %v1928, 7
        %1956 = vrot.lane.b32.xlu0 %v1955, 72
        %v1957 = vpop.permute.xlu0 %1956
        %1960 = vrot.lane.b32.xlu0 %v1929, 64
        %v1961 = vpop.permute.xlu0 %1960
        %v1963 = vrot.slane %v1929, 1
        %1964 = vrot.lane.b32.xlu0 %v1963, 56
        %v1965 = vpop.permute.xlu0 %1964
        %v1967 = vrot.slane %v1929, 2
        %1968 = vrot.lane.b32.xlu0 %v1967, 48
        %v1969 = vpop.permute.xlu0 %1968
        %v1971 = vrot.slane %v1929, 3
        %1972 = vrot.lane.b32.xlu0 %v1971, 40
        %v1973 = vpop.permute.xlu0 %1972
        %v1975 = vrot.slane %v1929, 4
        %1976 = vrot.lane.b32.xlu0 %v1975, 32
        %v1977 = vpop.permute.xlu0 %1976
        %v1979 = vrot.slane %v1929, 5
        %1980 = vrot.lane.b32.xlu0 %v1979, 24
        %v1981 = vpop.permute.xlu0 %1980
        %v1983 = vrot.slane %v1929, 6
        %1984 = vrot.lane.b32.xlu0 %v1983, 16
        %v1985 = vpop.permute.xlu0 %1984
        %vm1987 = vcmask 982016
        %v1988 = vsel %vm1987, %v1928, %v1933
        %vm1989 = vcmask 916480
        %v1990 = vsel %vm1989, %v1933, %v1937
        %vm1991 = vcmask 850944
        %v1992 = vsel %vm1991, %v1937, %v1941
        %vm1993 = vcmask 785408
        %v1994 = vsel %vm1993, %v1941, %v1945
        %vm1995 = vcmask 719872
        %v1996 = vsel %vm1995, %v1945, %v1949
        %vm1997 = vcmask 654336
        %v1998 = vsel %vm1997, %v1949, %v1953
        %vm1999 = vcmask 588800
        %v2000 = vsel %vm1999, %v1953, %v1957
        %vm2001 = vcmask 523264
        %v2002 = vsel %vm2001, %v1957, %v1961
        %vm2003 = vcmask 457728
        %v2004 = vsel %vm2003, %v1961, %v1965
        %vm2005 = vcmask 392192
        %v2006 = vsel %vm2005, %v1965, %v1969
        %vm2007 = vcmask 326656
        %v2008 = vsel %vm2007, %v1969, %v1973
        %vm2009 = vcmask 261120
        %v2010 = vsel %vm2009, %v1973, %v1977
        %vm2011 = vcmask 195584
        %v2012 = vsel %vm2011, %v1977, %v1981
        %vm2013 = vcmask 130048
        %v2014 = vsel %vm2013, %v1981, %v1985
        %v2015 = vpack.c.bf16 %v1988, %v1988
        %v2016 = vpack.c.bf16 %v1990, %v1990
        %v2017 = vpack.c.bf16 %v1992, %v1992
        %v2018 = vpack.c.bf16 %v1994, %v1994
        %v2019 = vpack.c.bf16 %v1996, %v1996
        %v2020 = vpack.c.bf16 %v1998, %v1998
        %v2021 = vpack.c.bf16 %v2000, %v2000
        %v2022 = vpack.c.bf16 %v2002, %v2002
        %v2023 = vpack.c.bf16 %v2004, %v2004
        %v2024 = vpack.c.bf16 %v2006, %v2006
        %v2025 = vpack.c.bf16 %v2008, %v2008
        %v2026 = vpack.c.bf16 %v2010, %v2010
        %v2027 = vpack.c.bf16 %v2012, %v2012
        %v2028 = vpack.c.bf16 %v2014, %v2014
        %v2029 = vpack.c.bf16 %v1985, %v1985
        %v2030 = vld [vmem:[%s3] sm:$0xff]
        %v2031 = vld [vmem:[%s3 + $0x8] sm:$0xff]
        %v2032 = vld [vmem:[%s3 + $0x10] sm:$0xff]
        %v2033 = vld [vmem:[%s3 + $0x18] sm:$0xff]
        %v2034 = vld [vmem:[%s3 + $0x20] sm:$0xff]
        %v2035 = vld [vmem:[%s3 + $0x28] sm:$0xff]
        %v2036 = vld [vmem:[%s3 + $0x30] sm:$0xff]
        %v2037 = vld [vmem:[%s3 + $0x38] sm:$0xff]
        %v2038 = vld [vmem:[%s3 + $0x40] sm:$0xff]
        %v2039 = vld [vmem:[%s3 + $0x48] sm:$0xff]
        %v2040 = vld [vmem:[%s3 + $0x50] sm:$0xff]
        %v2041 = vld [vmem:[%s3 + $0x58] sm:$0xff]
        %v2042 = vld [vmem:[%s3 + $0x60] sm:$0xff]
        %v2043 = vld [vmem:[%s3 + $0x68] sm:$0xff]
        %v2044 = vld [vmem:[%s3 + $0x70] sm:$0xff]
        %v2045 = vld [vmem:[%s3 + $0x78] sm:$0xff]
        %v2046 = vld [vmem:[%s3 + $0x80] sm:$0xff]
        %v2047 = vld [vmem:[%s3 + $0x88] sm:$0xff]
        %v2048 = vld [vmem:[%s3 + $0x90] sm:$0xff]
        %v2049 = vld [vmem:[%s3 + $0x98] sm:$0xff]
        %v2050 = vld [vmem:[%s3 + $0xa0] sm:$0xff]
        %v2051 = vld [vmem:[%s3 + $0xa8] sm:$0xff]
        %v2052 = vld [vmem:[%s3 + $0xb0] sm:$0xff]
        %v2053 = vld [vmem:[%s3 + $0xb8] sm:$0xff]
        %v2054 = vld [vmem:[%s3 + $0xc0] sm:$0xff]
        %v2055 = vld [vmem:[%s3 + $0xc8] sm:$0xff]
        %v2056 = vld [vmem:[%s3 + $0xd0] sm:$0xff]
        %v2057 = vld [vmem:[%s3 + $0xd8] sm:$0xff]
        %v2058 = vld [vmem:[%s3 + $0xe0] sm:$0xff]
        %v2059 = vld [vmem:[%s3 + $0xe8] sm:$0xff]
        %v2060 = vld [vmem:[%s3 + $0xf0] sm:$0xff]
        %v2061 = vld [vmem:[%s3 + $0xf8] sm:$0xff]
        %v2062 = vld [vmem:[%s3 + $0x100] sm:$0xff]
        %v2063 = vld [vmem:[%s3 + $0x108] sm:$0xff]
        %v2064 = vld [vmem:[%s3 + $0x110] sm:$0xff]
        %v2065 = vld [vmem:[%s3 + $0x118] sm:$0xff]
        %v2066 = vld [vmem:[%s3 + $0x120] sm:$0xff]
        %v2067 = vld [vmem:[%s3 + $0x128] sm:$0xff]
        %v2068 = vld [vmem:[%s3 + $0x130] sm:$0xff]
        %v2069 = vld [vmem:[%s3 + $0x138] sm:$0xff]
        %v2070 = vld [vmem:[%s3 + $0x140] sm:$0xff]
        %v2071 = vld [vmem:[%s3 + $0x148] sm:$0xff]
        %v2072 = vld [vmem:[%s3 + $0x150] sm:$0xff]
        %v2073 = vld [vmem:[%s3 + $0x158] sm:$0xff]
        %v2074 = vld [vmem:[%s3 + $0x160] sm:$0xff]
        %v2075 = vld [vmem:[%s3 + $0x168] sm:$0xff]
        %v2076 = vld [vmem:[%s3 + $0x170] sm:$0xff]
        %v2077 = vld [vmem:[%s3 + $0x178] sm:$0xff]
        %v2078 = vld [vmem:[%s3 + $0x180] sm:$0xff]
        %v2079 = vld [vmem:[%s3 + $0x188] sm:$0xff]
        %v2080 = vld [vmem:[%s3 + $0x190] sm:$0xff]
        %v2081 = vld [vmem:[%s3 + $0x198] sm:$0xff]
        %v2082 = vld [vmem:[%s3 + $0x1a0] sm:$0xff]
        %v2083 = vld [vmem:[%s3 + $0x1a8] sm:$0xff]
        %v2084 = vld [vmem:[%s3 + $0x1b0] sm:$0xff]
        %v2085 = vld [vmem:[%s3 + $0x1b8] sm:$0xff]
        %v2086 = vld [vmem:[%s3 + $0x1c0] sm:$0xff]
        %v2087 = vld [vmem:[%s3 + $0x1c8] sm:$0xff]
        %v2088 = vld [vmem:[%s3 + $0x1d0] sm:$0xff]
        %v2089 = vld [vmem:[%s3 + $0x1d8] sm:$0xff]
        %v2090 = vld [vmem:[%s3 + $0x1e0] sm:$0xff]
        %v2091 = vld [vmem:[%s3 + $0x1e8] sm:$0xff]
        %v2092 = vld [vmem:[%s3 + $0x1f0] sm:$0xff]
        %v2093 = vld [vmem:[%s3 + $0x1f8] sm:$0xff]
        %v2094 = vld [vmem:[%s3 + $0x200] sm:$0xff]
        %v2095 = vld [vmem:[%s3 + $0x208] sm:$0xff]
        %v2096 = vld [vmem:[%s3 + $0x210] sm:$0xff]
        %v2097 = vld [vmem:[%s3 + $0x218] sm:$0xff]
        %v2098 = vld [vmem:[%s3 + $0x220] sm:$0xff]
        %v2099 = vld [vmem:[%s3 + $0x228] sm:$0xff]
        %v2100 = vld [vmem:[%s3 + $0x230] sm:$0xff]
        %v2101 = vld [vmem:[%s3 + $0x238] sm:$0xff]
        %v2102 = vld [vmem:[%s3 + $0x240] sm:$0xff]
        %v2103 = vld [vmem:[%s3 + $0x248] sm:$0xff]
        %v2104 = vld [vmem:[%s3 + $0x250] sm:$0xff]
        %v2105 = vld [vmem:[%s3 + $0x258] sm:$0xff]
        %v2106 = vld [vmem:[%s3 + $0x260] sm:$0xff]
        %v2107 = vld [vmem:[%s3 + $0x268] sm:$0xff]
        %v2108 = vld [vmem:[%s3 + $0x270] sm:$0xff]
        %v2109 = vld [vmem:[%s3 + $0x278] sm:$0xff]
        %v2110 = vld [vmem:[%s3 + $0x280] sm:$0xff]
        %v2111 = vld [vmem:[%s3 + $0x288] sm:$0xff]
        %v2112 = vld [vmem:[%s3 + $0x290] sm:$0xff]
        %v2113 = vld [vmem:[%s3 + $0x298] sm:$0xff]
        %v2114 = vld [vmem:[%s3 + $0x2a0] sm:$0xff]
        %v2115 = vld [vmem:[%s3 + $0x2a8] sm:$0xff]
        %v2116 = vld [vmem:[%s3 + $0x2b0] sm:$0xff]
        %v2117 = vld [vmem:[%s3 + $0x2b8] sm:$0xff]
        %v2118 = vld [vmem:[%s3 + $0x2c0] sm:$0xff]
        %v2119 = vld [vmem:[%s3 + $0x2c8] sm:$0xff]
        %v2120 = vld [vmem:[%s3 + $0x2d0] sm:$0xff]
        %v2121 = vld [vmem:[%s3 + $0x2d8] sm:$0xff]
        %v2122 = vld [vmem:[%s3 + $0x2e0] sm:$0xff]
        %v2123 = vld [vmem:[%s3 + $0x2e8] sm:$0xff]
        %v2124 = vld [vmem:[%s3 + $0x2f0] sm:$0xff]
        %v2125 = vld [vmem:[%s3 + $0x2f8] sm:$0xff]
        %v2126 = vld [vmem:[%s3 + $0x300] sm:$0xff]
        %v2127 = vld [vmem:[%s3 + $0x308] sm:$0xff]
        %v2128 = vld [vmem:[%s3 + $0x310] sm:$0xff]
        %v2129 = vld [vmem:[%s3 + $0x318] sm:$0xff]
        %v2130 = vld [vmem:[%s3 + $0x320] sm:$0xff]
        %v2131 = vld [vmem:[%s3 + $0x328] sm:$0xff]
        %v2132 = vld [vmem:[%s3 + $0x330] sm:$0xff]
        %v2133 = vld [vmem:[%s3 + $0x338] sm:$0xff]
        %v2134 = vld [vmem:[%s3 + $0x340] sm:$0xff]
        %v2135 = vld [vmem:[%s3 + $0x348] sm:$0xff]
        %v2136 = vld [vmem:[%s3 + $0x350] sm:$0xff]
        %v2137 = vld [vmem:[%s3 + $0x358] sm:$0xff]
        %v2138 = vld [vmem:[%s3 + $0x360] sm:$0xff]
        %v2139 = vld [vmem:[%s3 + $0x368] sm:$0xff]
        %v2140 = vld [vmem:[%s3 + $0x370] sm:$0xff]
        %v2141 = vld [vmem:[%s3 + $0x378] sm:$0xff]
        %v2142 = vld [vmem:[%s3 + $0x380] sm:$0xff]
        %v2143 = vld [vmem:[%s3 + $0x388] sm:$0xff]
        %v2144 = vld [vmem:[%s3 + $0x390] sm:$0xff]
        %v2145 = vld [vmem:[%s3 + $0x398] sm:$0xff]
        %v2146 = vld [vmem:[%s3 + $0x3a0] sm:$0xff]
        %v2147 = vld [vmem:[%s3 + $0x3a8] sm:$0xff]
        %v2148 = vld [vmem:[%s3 + $0x3b0] sm:$0xff]
        %v2149 = vld [vmem:[%s3 + $0x3b8] sm:$0xff]
        %v2150 = vld [vmem:[%s3 + $0x3c0] sm:$0xff]
        %v2151 = vld [vmem:[%s3 + $0x3c8] sm:$0xff]
        %v2152 = vld [vmem:[%s3 + $0x3d0] sm:$0xff]
        %v2153 = vld [vmem:[%s3 + $0x3d8] sm:$0xff]
        %v2154 = vld [vmem:[%s3 + $0x3e0] sm:$0xff]
        %v2155 = vld [vmem:[%s3 + $0x3e8] sm:$0xff]
        %v2156 = vld [vmem:[%s3 + $0x3f0] sm:$0xff]
        %v2157 = vld [vmem:[%s3 + $0x3f8] sm:$0xff]
        %v2158 = vld [vmem:[%s3 + $0x400] sm:$0xff]
        %v2159 = vld [vmem:[%s3 + $0x408] sm:$0xff]
        %v2160 = vld [vmem:[%s3 + $0x410] sm:$0xff]
        %v2161 = vld [vmem:[%s3 + $0x418] sm:$0xff]
        %v2162 = vld [vmem:[%s3 + $0x420] sm:$0xff]
        %v2163 = vld [vmem:[%s3 + $0x428] sm:$0xff]
        %v2164 = vld [vmem:[%s3 + $0x430] sm:$0xff]
        %v2165 = vld [vmem:[%s3 + $0x438] sm:$0xff]
        %v2166 = vld [vmem:[%s3 + $0x440] sm:$0xff]
        %v2167 = vld [vmem:[%s3 + $0x448] sm:$0xff]
        %v2168 = vld [vmem:[%s3 + $0x450] sm:$0xff]
        %v2169 = vld [vmem:[%s3 + $0x458] sm:$0xff]
        %v2170 = vld [vmem:[%s3 + $0x460] sm:$0xff]
        %v2171 = vld [vmem:[%s3 + $0x468] sm:$0xff]
        %v2172 = vld [vmem:[%s3 + $0x470] sm:$0xff]
        %v2173 = vld [vmem:[%s3 + $0x478] sm:$0xff]
        %v2174 = vld [vmem:[%s3 + $0x480] sm:$0xff]
        %v2175 = vld [vmem:[%s3 + $0x488] sm:$0xff]
        %v2176 = vld [vmem:[%s3 + $0x490] sm:$0xff]
        %v2177 = vld [vmem:[%s3 + $0x498] sm:$0xff]
        %v2178 = vld [vmem:[%s3 + $0x4a0] sm:$0xff]
        %v2179 = vld [vmem:[%s3 + $0x4a8] sm:$0xff]
        %v2180 = vld [vmem:[%s3 + $0x4b0] sm:$0xff]
        %v2181 = vld [vmem:[%s3 + $0x4b8] sm:$0xff]
        %v2182 = vld [vmem:[%s3 + $0x4c0] sm:$0xff]
        %v2183 = vld [vmem:[%s3 + $0x4c8] sm:$0xff]
        %v2184 = vld [vmem:[%s3 + $0x4d0] sm:$0xff]
        %v2185 = vld [vmem:[%s3 + $0x4d8] sm:$0xff]
        %v2186 = vld [vmem:[%s3 + $0x4e0] sm:$0xff]
        %v2187 = vld [vmem:[%s3 + $0x4e8] sm:$0xff]
        %v2188 = vld [vmem:[%s3 + $0x4f0] sm:$0xff]
        %v2189 = vld [vmem:[%s3 + $0x4f8] sm:$0xff]
        %v2190 = vld [vmem:[%s3 + $0x500] sm:$0xff]
        %v2191 = vld [vmem:[%s3 + $0x508] sm:$0xff]
        %v2192 = vld [vmem:[%s3 + $0x510] sm:$0xff]
        %v2193 = vld [vmem:[%s3 + $0x518] sm:$0xff]
        %v2194 = vld [vmem:[%s3 + $0x520] sm:$0xff]
        %v2195 = vld [vmem:[%s3 + $0x528] sm:$0xff]
        %v2196 = vld [vmem:[%s3 + $0x530] sm:$0xff]
        %v2197 = vld [vmem:[%s3 + $0x538] sm:$0xff]
        %v2198 = vld [vmem:[%s3 + $0x540] sm:$0xff]
        %v2199 = vld [vmem:[%s3 + $0x548] sm:$0xff]
        %v2200 = vld [vmem:[%s3 + $0x550] sm:$0xff]
        %v2201 = vld [vmem:[%s3 + $0x558] sm:$0xff]
        %v2202 = vld [vmem:[%s3 + $0x560] sm:$0xff]
        %v2203 = vld [vmem:[%s3 + $0x568] sm:$0xff]
        %v2204 = vld [vmem:[%s3 + $0x570] sm:$0xff]
        %v2205 = vld [vmem:[%s3 + $0x578] sm:$0xff]
        %v2206 = vld [vmem:[%s3 + $0x580] sm:$0xff]
        %v2207 = vld [vmem:[%s3 + $0x588] sm:$0xff]
        %v2208 = vld [vmem:[%s3 + $0x590] sm:$0xff]
        %v2209 = vld [vmem:[%s3 + $0x598] sm:$0xff]
        %v2210 = vld [vmem:[%s3 + $0x5a0] sm:$0xff]
        %v2211 = vld [vmem:[%s3 + $0x5a8] sm:$0xff]
        %v2212 = vld [vmem:[%s3 + $0x5b0] sm:$0xff]
        %v2213 = vld [vmem:[%s3 + $0x5b8] sm:$0xff]
        %v2214 = vld [vmem:[%s3 + $0x5c0] sm:$0xff]
        %v2215 = vld [vmem:[%s3 + $0x5c8] sm:$0xff]
        %v2216 = vld [vmem:[%s3 + $0x5d0] sm:$0xff]
        %v2217 = vld [vmem:[%s3 + $0x5d8] sm:$0xff]
        %v2218 = vld [vmem:[%s3 + $0x5e0] sm:$0xff]
        %v2219 = vld [vmem:[%s3 + $0x5e8] sm:$0xff]
        %v2220 = vld [vmem:[%s3 + $0x5f0] sm:$0xff]
        %v2221 = vld [vmem:[%s3 + $0x5f8] sm:$0xff]
        %v2222 = vld [vmem:[%s3 + $0x600] sm:$0xff]
        %v2223 = vld [vmem:[%s3 + $0x608] sm:$0xff]
        %v2224 = vld [vmem:[%s3 + $0x610] sm:$0xff]
        %v2225 = vld [vmem:[%s3 + $0x618] sm:$0xff]
        %v2226 = vld [vmem:[%s3 + $0x620] sm:$0xff]
        %v2227 = vld [vmem:[%s3 + $0x628] sm:$0xff]
        %v2228 = vld [vmem:[%s3 + $0x630] sm:$0xff]
        %v2229 = vld [vmem:[%s3 + $0x638] sm:$0xff]
        %v2230 = vld [vmem:[%s3 + $0x640] sm:$0xff]
        %v2231 = vld [vmem:[%s3 + $0x648] sm:$0xff]
        %v2232 = vld [vmem:[%s3 + $0x650] sm:$0xff]
        %v2233 = vld [vmem:[%s3 + $0x658] sm:$0xff]
        %v2234 = vld [vmem:[%s3 + $0x660] sm:$0xff]
        %v2235 = vld [vmem:[%s3 + $0x668] sm:$0xff]
        %v2236 = vld [vmem:[%s3 + $0x670] sm:$0xff]
        %v2237 = vld [vmem:[%s3 + $0x678] sm:$0xff]
        %v2238 = vld [vmem:[%s3 + $0x680] sm:$0xff]
        %v2239 = vld [vmem:[%s3 + $0x688] sm:$0xff]
        %v2240 = vld [vmem:[%s3 + $0x690] sm:$0xff]
        %v2241 = vld [vmem:[%s3 + $0x698] sm:$0xff]
        %v2242 = vld [vmem:[%s3 + $0x6a0] sm:$0xff]
        %v2243 = vld [vmem:[%s3 + $0x6a8] sm:$0xff]
        %v2244 = vld [vmem:[%s3 + $0x6b0] sm:$0xff]
        %v2245 = vld [vmem:[%s3 + $0x6b8] sm:$0xff]
        %v2246 = vld [vmem:[%s3 + $0x6c0] sm:$0xff]
        %v2247 = vld [vmem:[%s3 + $0x6c8] sm:$0xff]
        %v2248 = vld [vmem:[%s3 + $0x6d0] sm:$0xff]
        %v2249 = vld [vmem:[%s3 + $0x6d8] sm:$0xff]
        %v2250 = vld [vmem:[%s3 + $0x6e0] sm:$0xff]
        %v2251 = vld [vmem:[%s3 + $0x6e8] sm:$0xff]
        %v2252 = vld [vmem:[%s3 + $0x6f0] sm:$0xff]
        %v2253 = vld [vmem:[%s3 + $0x6f8] sm:$0xff]
        %v2254 = vld [vmem:[%s3 + $0x700] sm:$0xff]
        %v2255 = vld [vmem:[%s3 + $0x708] sm:$0xff]
        %v2256 = vld [vmem:[%s3 + $0x710] sm:$0xff]
        %v2257 = vld [vmem:[%s3 + $0x718] sm:$0xff]
        %v2258 = vld [vmem:[%s3 + $0x720] sm:$0xff]
        %v2259 = vld [vmem:[%s3 + $0x728] sm:$0xff]
        %v2260 = vld [vmem:[%s3 + $0x730] sm:$0xff]
        %v2261 = vld [vmem:[%s3 + $0x738] sm:$0xff]
        %v2262 = vld [vmem:[%s3 + $0x740] sm:$0xff]
        %v2263 = vld [vmem:[%s3 + $0x748] sm:$0xff]
        %v2264 = vld [vmem:[%s3 + $0x750] sm:$0xff]
        %v2265 = vld [vmem:[%s3 + $0x758] sm:$0xff]
        %v2266 = vld [vmem:[%s3 + $0x760] sm:$0xff]
        %v2267 = vld [vmem:[%s3 + $0x768] sm:$0xff]
        %v2268 = vld [vmem:[%s3 + $0x770] sm:$0xff]
        %v2269 = vld [vmem:[%s3 + $0x778] sm:$0xff]
        %v2270 = vld [vmem:[%s3 + $0x780] sm:$0xff]
        %v2271 = vld [vmem:[%s3 + $0x788] sm:$0xff]
        %v2272 = vld [vmem:[%s3 + $0x790] sm:$0xff]
        %v2273 = vld [vmem:[%s3 + $0x798] sm:$0xff]
        %v2274 = vld [vmem:[%s3 + $0x7a0] sm:$0xff]
        %v2275 = vld [vmem:[%s3 + $0x7a8] sm:$0xff]
        %v2276 = vld [vmem:[%s3 + $0x7b0] sm:$0xff]
        %v2277 = vld [vmem:[%s3 + $0x7b8] sm:$0xff]
        %v2278 = vld [vmem:[%s3 + $0x7c0] sm:$0xff]
        %v2279 = vld [vmem:[%s3 + $0x7c8] sm:$0xff]
        %v2280 = vld [vmem:[%s3 + $0x7d0] sm:$0xff]
        %v2281 = vld [vmem:[%s3 + $0x7d8] sm:$0xff]
        %v2282 = vld [vmem:[%s3 + $0x7e0] sm:$0xff]
        %v2283 = vld [vmem:[%s3 + $0x7e8] sm:$0xff]
        %v2284 = vld [vmem:[%s3 + $0x7f0] sm:$0xff]
        %v2285 = vld [vmem:[%s3 + $0x7f8] sm:$0xff]
        %v2286 = vld [vmem:[%s3 + $0x800] sm:$0xff]
        %v2287 = vld [vmem:[%s3 + $0x808] sm:$0xff]
        %v2288 = vld [vmem:[%s3 + $0x810] sm:$0xff]
        %v2289 = vld [vmem:[%s3 + $0x818] sm:$0xff]
        %v2290 = vld [vmem:[%s3 + $0x820] sm:$0xff]
        %v2291 = vld [vmem:[%s3 + $0x828] sm:$0xff]
        %v2292 = vld [vmem:[%s3 + $0x830] sm:$0xff]
        %v2293 = vld [vmem:[%s3 + $0x838] sm:$0xff]
        %v2294 = vld [vmem:[%s3 + $0x840] sm:$0xff]
        %v2295 = vld [vmem:[%s3 + $0x848] sm:$0xff]
        %v2296 = vld [vmem:[%s3 + $0x850] sm:$0xff]
        %v2297 = vld [vmem:[%s3 + $0x858] sm:$0xff]
        %v2298 = vld [vmem:[%s3 + $0x860] sm:$0xff]
        %v2299 = vld [vmem:[%s3 + $0x868] sm:$0xff]
        %v2300 = vld [vmem:[%s3 + $0x870] sm:$0xff]
        %v2301 = vld [vmem:[%s3 + $0x878] sm:$0xff]
        %v2302 = vld [vmem:[%s3 + $0x880] sm:$0xff]
        %v2303 = vld [vmem:[%s3 + $0x888] sm:$0xff]
        %v2304 = vld [vmem:[%s3 + $0x890] sm:$0xff]
        %v2305 = vld [vmem:[%s3 + $0x898] sm:$0xff]
        %v2306 = vld [vmem:[%s3 + $0x8a0] sm:$0xff]
        %v2307 = vld [vmem:[%s3 + $0x8a8] sm:$0xff]
        %v2308 = vld [vmem:[%s3 + $0x8b0] sm:$0xff]
        %v2309 = vld [vmem:[%s3 + $0x8b8] sm:$0xff]
        %v2310 = vld [vmem:[%s3 + $0x8c0] sm:$0xff]
        %v2311 = vld [vmem:[%s3 + $0x8c8] sm:$0xff]
        %v2312 = vld [vmem:[%s3 + $0x8d0] sm:$0xff]
        %v2313 = vld [vmem:[%s3 + $0x8d8] sm:$0xff]
        %v2314 = vld [vmem:[%s3 + $0x8e0] sm:$0xff]
        %v2315 = vld [vmem:[%s3 + $0x8e8] sm:$0xff]
        %v2316 = vld [vmem:[%s3 + $0x8f0] sm:$0xff]
        %v2317 = vld [vmem:[%s3 + $0x8f8] sm:$0xff]
        %v2318 = vld [vmem:[%s3 + $0x900] sm:$0xff]
        %v2319 = vld [vmem:[%s3 + $0x908] sm:$0xff]
        %v2320 = vld [vmem:[%s3 + $0x910] sm:$0xff]
        %v2321 = vld [vmem:[%s3 + $0x918] sm:$0xff]
        %v2322 = vld [vmem:[%s3 + $0x920] sm:$0xff]
        %v2323 = vld [vmem:[%s3 + $0x928] sm:$0xff]
        %v2324 = vld [vmem:[%s3 + $0x930] sm:$0xff]
        %v2325 = vld [vmem:[%s3 + $0x938] sm:$0xff]
        %v2326 = vld [vmem:[%s3 + $0x940] sm:$0xff]
        %v2327 = vld [vmem:[%s3 + $0x948] sm:$0xff]
        %v2328 = vld [vmem:[%s3 + $0x950] sm:$0xff]
        %v2329 = vld [vmem:[%s3 + $0x958] sm:$0xff]
        %v2330 = vld [vmem:[%s3 + $0x960] sm:$0xff]
        %v2331 = vld [vmem:[%s3 + $0x968] sm:$0xff]
        %v2332 = vld [vmem:[%s3 + $0x970] sm:$0xff]
        %v2333 = vld [vmem:[%s3 + $0x978] sm:$0xff]
        %v2334 = vld [vmem:[%s3 + $0x980] sm:$0xff]
        %v2335 = vld [vmem:[%s3 + $0x988] sm:$0xff]
        %v2336 = vld [vmem:[%s3 + $0x990] sm:$0xff]
        %v2337 = vld [vmem:[%s3 + $0x998] sm:$0xff]
        %v2338 = vld [vmem:[%s3 + $0x9a0] sm:$0xff]
        %v2339 = vld [vmem:[%s3 + $0x9a8] sm:$0xff]
        %v2340 = vld [vmem:[%s3 + $0x9b0] sm:$0xff]
        %v2341 = vld [vmem:[%s3 + $0x9b8] sm:$0xff]
        %v2342 = vld [vmem:[%s3 + $0x9c0] sm:$0xff]
        %v2343 = vld [vmem:[%s3 + $0x9c8] sm:$0xff]
        %v2344 = vld [vmem:[%s3 + $0x9d0] sm:$0xff]
        %v2345 = vld [vmem:[%s3 + $0x9d8] sm:$0xff]
        %v2346 = vld [vmem:[%s3 + $0x9e0] sm:$0xff]
        %v2347 = vld [vmem:[%s3 + $0x9e8] sm:$0xff]
        %v2348 = vld [vmem:[%s3 + $0x9f0] sm:$0xff]
        %v2349 = vld [vmem:[%s3 + $0x9f8] sm:$0xff]
        %v2350 = vld [vmem:[%s3 + $0xa00] sm:$0xff]
        %v2351 = vld [vmem:[%s3 + $0xa08] sm:$0xff]
        %v2352 = vld [vmem:[%s3 + $0xa10] sm:$0xff]
        %v2353 = vld [vmem:[%s3 + $0xa18] sm:$0xff]
        %v2354 = vld [vmem:[%s3 + $0xa20] sm:$0xff]
        %v2355 = vld [vmem:[%s3 + $0xa28] sm:$0xff]
        %v2356 = vld [vmem:[%s3 + $0xa30] sm:$0xff]
        %v2357 = vld [vmem:[%s3 + $0xa38] sm:$0xff]
        %v2358 = vld [vmem:[%s3 + $0xa40] sm:$0xff]
        %v2359 = vld [vmem:[%s3 + $0xa48] sm:$0xff]
        %v2360 = vld [vmem:[%s3 + $0xa50] sm:$0xff]
        %v2361 = vld [vmem:[%s3 + $0xa58] sm:$0xff]
        %v2362 = vld [vmem:[%s3 + $0xa60] sm:$0xff]
        %v2363 = vld [vmem:[%s3 + $0xa68] sm:$0xff]
        %v2364 = vld [vmem:[%s3 + $0xa70] sm:$0xff]
        %v2365 = vld [vmem:[%s3 + $0xa78] sm:$0xff]
        %v2366 = vld [vmem:[%s3 + $0xa80] sm:$0xff]
        %v2367 = vld [vmem:[%s3 + $0xa88] sm:$0xff]
        %v2368 = vld [vmem:[%s3 + $0xa90] sm:$0xff]
        %v2369 = vld [vmem:[%s3 + $0xa98] sm:$0xff]
        %v2370 = vld [vmem:[%s3 + $0xaa0] sm:$0xff]
        %v2371 = vld [vmem:[%s3 + $0xaa8] sm:$0xff]
        %v2372 = vld [vmem:[%s3 + $0xab0] sm:$0xff]
        %v2373 = vld [vmem:[%s3 + $0xab8] sm:$0xff]
        %v2374 = vld [vmem:[%s3 + $0xac0] sm:$0xff]
        %v2375 = vld [vmem:[%s3 + $0xac8] sm:$0xff]
        %v2376 = vld [vmem:[%s3 + $0xad0] sm:$0xff]
        %v2377 = vld [vmem:[%s3 + $0xad8] sm:$0xff]
        %v2378 = vld [vmem:[%s3 + $0xae0] sm:$0xff]
        %v2379 = vld [vmem:[%s3 + $0xae8] sm:$0xff]
        %v2380 = vld [vmem:[%s3 + $0xaf0] sm:$0xff]
        %v2381 = vld [vmem:[%s3 + $0xaf8] sm:$0xff]
        %v2382 = vld [vmem:[%s3 + $0xb00] sm:$0xff]
        %v2383 = vld [vmem:[%s3 + $0xb08] sm:$0xff]
        %v2384 = vld [vmem:[%s3 + $0xb10] sm:$0xff]
        %v2385 = vld [vmem:[%s3 + $0xb18] sm:$0xff]
        %v2386 = vld [vmem:[%s3 + $0xb20] sm:$0xff]
        %v2387 = vld [vmem:[%s3 + $0xb28] sm:$0xff]
        %v2388 = vld [vmem:[%s3 + $0xb30] sm:$0xff]
        %v2389 = vld [vmem:[%s3 + $0xb38] sm:$0xff]
        %v2390 = vld [vmem:[%s3 + $0xb40] sm:$0xff]
        %v2391 = vld [vmem:[%s3 + $0xb48] sm:$0xff]
        %v2392 = vld [vmem:[%s3 + $0xb50] sm:$0xff]
        %v2393 = vld [vmem:[%s3 + $0xb58] sm:$0xff]
        %v2394 = vld [vmem:[%s3 + $0xb60] sm:$0xff]
        %v2395 = vld [vmem:[%s3 + $0xb68] sm:$0xff]
        %v2396 = vld [vmem:[%s3 + $0xb70] sm:$0xff]
        %v2397 = vld [vmem:[%s3 + $0xb78] sm:$0xff]
        %v2398 = vld [vmem:[%s3 + $0xb80] sm:$0xff]
        %v2399 = vld [vmem:[%s3 + $0xb88] sm:$0xff]
        %v2400 = vld [vmem:[%s3 + $0xb90] sm:$0xff]
        %v2401 = vld [vmem:[%s3 + $0xb98] sm:$0xff]
        %v2402 = vld [vmem:[%s3 + $0xba0] sm:$0xff]
        %v2403 = vld [vmem:[%s3 + $0xba8] sm:$0xff]
        %v2404 = vld [vmem:[%s3 + $0xbb0] sm:$0xff]
        %v2405 = vld [vmem:[%s3 + $0xbb8] sm:$0xff]
        %v2406 = vld [vmem:[%s3 + $0xbc0] sm:$0xff]
        %v2407 = vld [vmem:[%s3 + $0xbc8] sm:$0xff]
        %v2408 = vld [vmem:[%s3 + $0xbd0] sm:$0xff]
        %v2409 = vld [vmem:[%s3 + $0xbd8] sm:$0xff]
        %v2410 = vld [vmem:[%s3 + $0xbe0] sm:$0xff]
        %v2411 = vld [vmem:[%s3 + $0xbe8] sm:$0xff]
        %v2412 = vld [vmem:[%s3 + $0xbf0] sm:$0xff]
        %v2413 = vld [vmem:[%s3 + $0xbf8] sm:$0xff]
        %v2414 = vld [vmem:[%s3 + $0xc00] sm:$0xff]
        %v2415 = vld [vmem:[%s3 + $0xc08] sm:$0xff]
        %v2416 = vld [vmem:[%s3 + $0xc10] sm:$0xff]
        %v2417 = vld [vmem:[%s3 + $0xc18] sm:$0xff]
        %v2418 = vld [vmem:[%s3 + $0xc20] sm:$0xff]
        %v2419 = vld [vmem:[%s3 + $0xc28] sm:$0xff]
        %v2420 = vld [vmem:[%s3 + $0xc30] sm:$0xff]
        %v2421 = vld [vmem:[%s3 + $0xc38] sm:$0xff]
        %v2422 = vld [vmem:[%s3 + $0xc40] sm:$0xff]
        %v2423 = vld [vmem:[%s3 + $0xc48] sm:$0xff]
        %v2424 = vld [vmem:[%s3 + $0xc50] sm:$0xff]
        %v2425 = vld [vmem:[%s3 + $0xc58] sm:$0xff]
        %v2426 = vld [vmem:[%s3 + $0xc60] sm:$0xff]
        %v2427 = vld [vmem:[%s3 + $0xc68] sm:$0xff]
        %v2428 = vld [vmem:[%s3 + $0xc70] sm:$0xff]
        %v2429 = vld [vmem:[%s3 + $0xc78] sm:$0xff]
        %v2430 = vld [vmem:[%s3 + $0xc80] sm:$0xff]
        %v2431 = vld [vmem:[%s3 + $0xc88] sm:$0xff]
        %v2432 = vld [vmem:[%s3 + $0xc90] sm:$0xff]
        %v2433 = vld [vmem:[%s3 + $0xc98] sm:$0xff]
        %v2434 = vld [vmem:[%s3 + $0xca0] sm:$0xff]
        %v2435 = vld [vmem:[%s3 + $0xca8] sm:$0xff]
        %v2436 = vld [vmem:[%s3 + $0xcb0] sm:$0xff]
        %v2437 = vld [vmem:[%s3 + $0xcb8] sm:$0xff]
        %v2438 = vld [vmem:[%s3 + $0xcc0] sm:$0xff]
        %v2439 = vld [vmem:[%s3 + $0xcc8] sm:$0xff]
        %v2440 = vld [vmem:[%s3 + $0xcd0] sm:$0xff]
        %v2441 = vld [vmem:[%s3 + $0xcd8] sm:$0xff]
        %v2442 = vld [vmem:[%s3 + $0xce0] sm:$0xff]
        %v2443 = vld [vmem:[%s3 + $0xce8] sm:$0xff]
        %v2444 = vld [vmem:[%s3 + $0xcf0] sm:$0xff]
        %v2445 = vld [vmem:[%s3 + $0xcf8] sm:$0xff]
        %v2446 = vld [vmem:[%s3 + $0xd00] sm:$0xff]
        %v2447 = vld [vmem:[%s3 + $0xd08] sm:$0xff]
        %v2448 = vld [vmem:[%s3 + $0xd10] sm:$0xff]
        %v2449 = vld [vmem:[%s3 + $0xd18] sm:$0xff]
        %v2450 = vld [vmem:[%s3 + $0xd20] sm:$0xff]
        %v2451 = vld [vmem:[%s3 + $0xd28] sm:$0xff]
        %v2452 = vld [vmem:[%s3 + $0xd30] sm:$0xff]
        %v2453 = vld [vmem:[%s3 + $0xd38] sm:$0xff]
        %v2454 = vld [vmem:[%s3 + $0xd40] sm:$0xff]
        %v2455 = vld [vmem:[%s3 + $0xd48] sm:$0xff]
        %v2456 = vld [vmem:[%s3 + $0xd50] sm:$0xff]
        %v2457 = vld [vmem:[%s3 + $0xd58] sm:$0xff]
        %v2458 = vld [vmem:[%s3 + $0xd60] sm:$0xff]
        %v2459 = vld [vmem:[%s3 + $0xd68] sm:$0xff]
        %v2460 = vld [vmem:[%s3 + $0xd70] sm:$0xff]
        %v2461 = vld [vmem:[%s3 + $0xd78] sm:$0xff]
        %v2462 = vld [vmem:[%s3 + $0xd80] sm:$0xff]
        %v2463 = vld [vmem:[%s3 + $0xd88] sm:$0xff]
        %v2464 = vld [vmem:[%s3 + $0xd90] sm:$0xff]
        %v2465 = vld [vmem:[%s3 + $0xd98] sm:$0xff]
        %v2466 = vld [vmem:[%s3 + $0xda0] sm:$0xff]
        %v2467 = vld [vmem:[%s3 + $0xda8] sm:$0xff]
        %v2468 = vld [vmem:[%s3 + $0xdb0] sm:$0xff]
        %v2469 = vld [vmem:[%s3 + $0xdb8] sm:$0xff]
        %v2470 = vld [vmem:[%s3 + $0xdc0] sm:$0xff]
        %v2471 = vld [vmem:[%s3 + $0xdc8] sm:$0xff]
        %v2472 = vld [vmem:[%s3 + $0xdd0] sm:$0xff]
        %v2473 = vld [vmem:[%s3 + $0xdd8] sm:$0xff]
        %v2474 = vld [vmem:[%s3 + $0xde0] sm:$0xff]
        %v2475 = vld [vmem:[%s3 + $0xde8] sm:$0xff]
        %v2476 = vld [vmem:[%s3 + $0xdf0] sm:$0xff]
        %v2477 = vld [vmem:[%s3 + $0xdf8] sm:$0xff]
        %v2478 = vld [vmem:[%s3 + $0xe00] sm:$0xff]
        %v2479 = vld [vmem:[%s3 + $0xe08] sm:$0xff]
        %v2480 = vld [vmem:[%s4] sm:$0xf]
        %v2931 = vunpack.c.l.b16 %v2030
        %v2932 = vunpack.c.h.b16 %v2030
        %v2933 = vunpack.c.l.b16 %v2031
        %v2934 = vunpack.c.h.b16 %v2031
        %v2935 = vunpack.c.l.b16 %v2032
        %v2936 = vunpack.c.h.b16 %v2032
        %v2937 = vunpack.c.l.b16 %v2033
        %v2938 = vunpack.c.h.b16 %v2033
        %v2939 = vunpack.c.l.b16 %v2034
        %v2940 = vunpack.c.h.b16 %v2034
        %v2941 = vunpack.c.l.b16 %v2035
        %v2942 = vunpack.c.h.b16 %v2035
        %v2943 = vunpack.c.l.b16 %v2036
        %v2944 = vunpack.c.h.b16 %v2036
        %v2945 = vunpack.c.l.b16 %v2037
        %v2946 = vunpack.c.h.b16 %v2037
        %v2947 = vunpack.c.l.b16 %v2038
        %v2948 = vunpack.c.h.b16 %v2038
        %v2949 = vunpack.c.l.b16 %v2039
        %v2950 = vunpack.c.h.b16 %v2039
        %v2951 = vunpack.c.l.b16 %v2040
        %v2952 = vunpack.c.h.b16 %v2040
        %v2953 = vunpack.c.l.b16 %v2041
        %v2954 = vunpack.c.h.b16 %v2041
        %v2955 = vunpack.c.l.b16 %v2042
        %v2956 = vunpack.c.h.b16 %v2042
        %v2957 = vunpack.c.l.b16 %v2043
        %v2958 = vunpack.c.h.b16 %v2043
        %v2959 = vunpack.c.l.b16 %v2044
        %v2960 = vunpack.c.h.b16 %v2044
        %v2961 = vunpack.c.l.b16 %v2045
        %v2962 = vunpack.c.h.b16 %v2045
        %v2963 = vunpack.c.l.b16 %v2046
        %v2964 = vunpack.c.h.b16 %v2046
        %v2965 = vunpack.c.l.b16 %v2047
        %v2966 = vunpack.c.h.b16 %v2047
        %v2967 = vunpack.c.l.b16 %v2048
        %v2968 = vunpack.c.h.b16 %v2048
        %v2969 = vunpack.c.l.b16 %v2049
        %v2970 = vunpack.c.h.b16 %v2049
        %v2971 = vunpack.c.l.b16 %v2050
        %v2972 = vunpack.c.h.b16 %v2050
        %v2973 = vunpack.c.l.b16 %v2051
        %v2974 = vunpack.c.h.b16 %v2051
        %v2975 = vunpack.c.l.b16 %v2052
        %v2976 = vunpack.c.h.b16 %v2052
        %v2977 = vunpack.c.l.b16 %v2053
        %v2978 = vunpack.c.h.b16 %v2053
        %v2979 = vunpack.c.l.b16 %v2054
        %v2980 = vunpack.c.h.b16 %v2054
        %v2981 = vunpack.c.l.b16 %v2055
        %v2982 = vunpack.c.h.b16 %v2055
        %v2983 = vunpack.c.l.b16 %v2056
        %v2984 = vunpack.c.h.b16 %v2056
        %v2985 = vunpack.c.l.b16 %v2057
        %v2986 = vunpack.c.h.b16 %v2057
        %v2987 = vunpack.c.l.b16 %v2058
        %v2988 = vunpack.c.h.b16 %v2058
        %v2989 = vunpack.c.l.b16 %v2059
        %v2990 = vunpack.c.h.b16 %v2059
        %v2991 = vunpack.c.l.b16 %v2060
        %v2992 = vunpack.c.h.b16 %v2060
        %v2993 = vunpack.c.l.b16 %v2061
        %v2994 = vunpack.c.h.b16 %v2061
        %v2995 = vunpack.c.l.b16 %v2062
        %v2996 = vunpack.c.h.b16 %v2062
        %v2997 = vunpack.c.l.b16 %v2063
        %v2998 = vunpack.c.h.b16 %v2063
        %v2999 = vunpack.c.l.b16 %v2064
        %v3000 = vunpack.c.h.b16 %v2064
        %v3001 = vunpack.c.l.b16 %v2065
        %v3002 = vunpack.c.h.b16 %v2065
        %v3003 = vunpack.c.l.b16 %v2066
        %v3004 = vunpack.c.h.b16 %v2066
        %v3005 = vunpack.c.l.b16 %v2067
        %v3006 = vunpack.c.h.b16 %v2067
        %v3007 = vunpack.c.l.b16 %v2068
        %v3008 = vunpack.c.h.b16 %v2068
        %v3009 = vunpack.c.l.b16 %v2069
        %v3010 = vunpack.c.h.b16 %v2069
        %v3011 = vunpack.c.l.b16 %v2070
        %v3012 = vunpack.c.h.b16 %v2070
        %v3013 = vunpack.c.l.b16 %v2071
        %v3014 = vunpack.c.h.b16 %v2071
        %v3015 = vunpack.c.l.b16 %v2072
        %v3016 = vunpack.c.h.b16 %v2072
        %v3017 = vunpack.c.l.b16 %v2073
        %v3018 = vunpack.c.h.b16 %v2073
        %v3019 = vunpack.c.l.b16 %v2074
        %v3020 = vunpack.c.h.b16 %v2074
        %v3021 = vunpack.c.l.b16 %v2075
        %v3022 = vunpack.c.h.b16 %v2075
        %v3023 = vunpack.c.l.b16 %v2076
        %v3024 = vunpack.c.h.b16 %v2076
        %v3025 = vunpack.c.l.b16 %v2077
        %v3026 = vunpack.c.h.b16 %v2077
        %v3027 = vunpack.c.l.b16 %v2078
        %v3028 = vunpack.c.h.b16 %v2078
        %v3029 = vunpack.c.l.b16 %v2079
        %v3030 = vunpack.c.h.b16 %v2079
        %v3031 = vunpack.c.l.b16 %v2080
        %v3032 = vunpack.c.h.b16 %v2080
        %v3033 = vunpack.c.l.b16 %v2081
        %v3034 = vunpack.c.h.b16 %v2081
        %v3035 = vunpack.c.l.b16 %v2082
        %v3036 = vunpack.c.h.b16 %v2082
        %v3037 = vunpack.c.l.b16 %v2083
        %v3038 = vunpack.c.h.b16 %v2083
        %v3039 = vunpack.c.l.b16 %v2084
        %v3040 = vunpack.c.h.b16 %v2084
        %v3041 = vunpack.c.l.b16 %v2085
        %v3042 = vunpack.c.h.b16 %v2085
        %v3043 = vunpack.c.l.b16 %v2086
        %v3044 = vunpack.c.h.b16 %v2086
        %v3045 = vunpack.c.l.b16 %v2087
        %v3046 = vunpack.c.h.b16 %v2087
        %v3047 = vunpack.c.l.b16 %v2088
        %v3048 = vunpack.c.h.b16 %v2088
        %v3049 = vunpack.c.l.b16 %v2089
        %v3050 = vunpack.c.h.b16 %v2089
        %v3051 = vunpack.c.l.b16 %v2090
        %v3052 = vunpack.c.h.b16 %v2090
        %v3053 = vunpack.c.l.b16 %v2091
        %v3054 = vunpack.c.h.b16 %v2091
        %v3055 = vunpack.c.l.b16 %v2092
        %v3056 = vunpack.c.h.b16 %v2092
        %v3057 = vunpack.c.l.b16 %v2093
        %v3058 = vunpack.c.h.b16 %v2093
        %v3059 = vunpack.c.l.b16 %v2094
        %v3060 = vunpack.c.h.b16 %v2094
        %v3061 = vunpack.c.l.b16 %v2095
        %v3062 = vunpack.c.h.b16 %v2095
        %v3063 = vunpack.c.l.b16 %v2096
        %v3064 = vunpack.c.h.b16 %v2096
        %v3065 = vunpack.c.l.b16 %v2097
        %v3066 = vunpack.c.h.b16 %v2097
        %v3067 = vunpack.c.l.b16 %v2098
        %v3068 = vunpack.c.h.b16 %v2098
        %v3069 = vunpack.c.l.b16 %v2099
        %v3070 = vunpack.c.h.b16 %v2099
        %v3071 = vunpack.c.l.b16 %v2100
        %v3072 = vunpack.c.h.b16 %v2100
        %v3073 = vunpack.c.l.b16 %v2101
        %v3074 = vunpack.c.h.b16 %v2101
        %v3075 = vunpack.c.l.b16 %v2102
        %v3076 = vunpack.c.h.b16 %v2102
        %v3077 = vunpack.c.l.b16 %v2103
        %v3078 = vunpack.c.h.b16 %v2103
        %v3079 = vunpack.c.l.b16 %v2104
        %v3080 = vunpack.c.h.b16 %v2104
        %v3081 = vunpack.c.l.b16 %v2105
        %v3082 = vunpack.c.h.b16 %v2105
        %v3083 = vunpack.c.l.b16 %v2106
        %v3084 = vunpack.c.h.b16 %v2106
        %v3085 = vunpack.c.l.b16 %v2107
        %v3086 = vunpack.c.h.b16 %v2107
        %v3087 = vunpack.c.l.b16 %v2108
        %v3088 = vunpack.c.h.b16 %v2108
        %v3089 = vunpack.c.l.b16 %v2109
        %v3090 = vunpack.c.h.b16 %v2109
        %v3091 = vunpack.c.l.b16 %v2110
        %v3092 = vunpack.c.h.b16 %v2110
        %v3093 = vunpack.c.l.b16 %v2111
        %v3094 = vunpack.c.h.b16 %v2111
        %v3095 = vunpack.c.l.b16 %v2112
        %v3096 = vunpack.c.h.b16 %v2112
        %v3097 = vunpack.c.l.b16 %v2113
        %v3098 = vunpack.c.h.b16 %v2113
        %v3099 = vunpack.c.l.b16 %v2114
        %v3100 = vunpack.c.h.b16 %v2114
        %v3101 = vunpack.c.l.b16 %v2115
        %v3102 = vunpack.c.h.b16 %v2115
        %v3103 = vunpack.c.l.b16 %v2116
        %v3104 = vunpack.c.h.b16 %v2116
        %v3105 = vunpack.c.l.b16 %v2117
        %v3106 = vunpack.c.h.b16 %v2117
        %v3107 = vunpack.c.l.b16 %v2118
        %v3108 = vunpack.c.h.b16 %v2118
        %v3109 = vunpack.c.l.b16 %v2119
        %v3110 = vunpack.c.h.b16 %v2119
        %v3111 = vunpack.c.l.b16 %v2120
        %v3112 = vunpack.c.h.b16 %v2120
        %v3113 = vunpack.c.l.b16 %v2121
        %v3114 = vunpack.c.h.b16 %v2121
        %v3115 = vunpack.c.l.b16 %v2122
        %v3116 = vunpack.c.h.b16 %v2122
        %v3117 = vunpack.c.l.b16 %v2123
        %v3118 = vunpack.c.h.b16 %v2123
        %v3119 = vunpack.c.l.b16 %v2124
        %v3120 = vunpack.c.h.b16 %v2124
        %v3121 = vunpack.c.l.b16 %v2125
        %v3122 = vunpack.c.h.b16 %v2125
        %v3123 = vunpack.c.l.b16 %v2126
        %v3124 = vunpack.c.h.b16 %v2126
        %v3125 = vunpack.c.l.b16 %v2127
        %v3126 = vunpack.c.h.b16 %v2127
        %v3127 = vunpack.c.l.b16 %v2128
        %v3128 = vunpack.c.h.b16 %v2128
        %v3129 = vunpack.c.l.b16 %v2129
        %v3130 = vunpack.c.h.b16 %v2129
        %v3131 = vunpack.c.l.b16 %v2130
        %v3132 = vunpack.c.h.b16 %v2130
        %v3133 = vunpack.c.l.b16 %v2131
        %v3134 = vunpack.c.h.b16 %v2131
        %v3135 = vunpack.c.l.b16 %v2132
        %v3136 = vunpack.c.h.b16 %v2132
        %v3137 = vunpack.c.l.b16 %v2133
        %v3138 = vunpack.c.h.b16 %v2133
        %v3139 = vunpack.c.l.b16 %v2134
        %v3140 = vunpack.c.h.b16 %v2134
        %v3141 = vunpack.c.l.b16 %v2135
        %v3142 = vunpack.c.h.b16 %v2135
        %v3143 = vunpack.c.l.b16 %v2136
        %v3144 = vunpack.c.h.b16 %v2136
        %v3145 = vunpack.c.l.b16 %v2137
        %v3146 = vunpack.c.h.b16 %v2137
        %v3147 = vunpack.c.l.b16 %v2138
        %v3148 = vunpack.c.h.b16 %v2138
        %v3149 = vunpack.c.l.b16 %v2139
        %v3150 = vunpack.c.h.b16 %v2139
        %v3151 = vunpack.c.l.b16 %v2140
        %v3152 = vunpack.c.h.b16 %v2140
        %v3153 = vunpack.c.l.b16 %v2141
        %v3154 = vunpack.c.h.b16 %v2141
        %v3155 = vunpack.c.l.b16 %v2142
        %v3156 = vunpack.c.h.b16 %v2142
        %v3157 = vunpack.c.l.b16 %v2143
        %v3158 = vunpack.c.h.b16 %v2143
        %v3159 = vunpack.c.l.b16 %v2144
        %v3160 = vunpack.c.h.b16 %v2144
        %v3161 = vunpack.c.l.b16 %v2145
        %v3162 = vunpack.c.h.b16 %v2145
        %v3163 = vunpack.c.l.b16 %v2146
        %v3164 = vunpack.c.h.b16 %v2146
        %v3165 = vunpack.c.l.b16 %v2147
        %v3166 = vunpack.c.h.b16 %v2147
        %v3167 = vunpack.c.l.b16 %v2148
        %v3168 = vunpack.c.h.b16 %v2148
        %v3169 = vunpack.c.l.b16 %v2149
        %v3170 = vunpack.c.h.b16 %v2149
        %v3171 = vunpack.c.l.b16 %v2150
        %v3172 = vunpack.c.h.b16 %v2150
        %v3173 = vunpack.c.l.b16 %v2151
        %v3174 = vunpack.c.h.b16 %v2151
        %v3175 = vunpack.c.l.b16 %v2152
        %v3176 = vunpack.c.h.b16 %v2152
        %v3177 = vunpack.c.l.b16 %v2153
        %v3178 = vunpack.c.h.b16 %v2153
        %v3179 = vunpack.c.l.b16 %v2154
        %v3180 = vunpack.c.h.b16 %v2154
        %v3181 = vunpack.c.l.b16 %v2155
        %v3182 = vunpack.c.h.b16 %v2155
        %v3183 = vunpack.c.l.b16 %v2156
        %v3184 = vunpack.c.h.b16 %v2156
        %v3185 = vunpack.c.l.b16 %v2157
        %v3186 = vunpack.c.h.b16 %v2157
        %v3187 = vunpack.c.l.b16 %v2158
        %v3188 = vunpack.c.h.b16 %v2158
        %v3189 = vunpack.c.l.b16 %v2159
        %v3190 = vunpack.c.h.b16 %v2159
        %v3191 = vunpack.c.l.b16 %v2160
        %v3192 = vunpack.c.h.b16 %v2160
        %v3193 = vunpack.c.l.b16 %v2161
        %v3194 = vunpack.c.h.b16 %v2161
        %v3195 = vunpack.c.l.b16 %v2162
        %v3196 = vunpack.c.h.b16 %v2162
        %v3197 = vunpack.c.l.b16 %v2163
        %v3198 = vunpack.c.h.b16 %v2163
        %v3199 = vunpack.c.l.b16 %v2164
        %v3200 = vunpack.c.h.b16 %v2164
        %v3201 = vunpack.c.l.b16 %v2165
        %v3202 = vunpack.c.h.b16 %v2165
        %v3203 = vunpack.c.l.b16 %v2166
        %v3204 = vunpack.c.h.b16 %v2166
        %v3205 = vunpack.c.l.b16 %v2167
        %v3206 = vunpack.c.h.b16 %v2167
        %v3207 = vunpack.c.l.b16 %v2168
        %v3208 = vunpack.c.h.b16 %v2168
        %v3209 = vunpack.c.l.b16 %v2169
        %v3210 = vunpack.c.h.b16 %v2169
        %v3211 = vunpack.c.l.b16 %v2170
        %v3212 = vunpack.c.h.b16 %v2170
        %v3213 = vunpack.c.l.b16 %v2171
        %v3214 = vunpack.c.h.b16 %v2171
        %v3215 = vunpack.c.l.b16 %v2172
        %v3216 = vunpack.c.h.b16 %v2172
        %v3217 = vunpack.c.l.b16 %v2173
        %v3218 = vunpack.c.h.b16 %v2173
        %v3219 = vunpack.c.l.b16 %v2174
        %v3220 = vunpack.c.h.b16 %v2174
        %v3221 = vunpack.c.l.b16 %v2175
        %v3222 = vunpack.c.h.b16 %v2175
        %v3223 = vunpack.c.l.b16 %v2176
        %v3224 = vunpack.c.h.b16 %v2176
        %v3225 = vunpack.c.l.b16 %v2177
        %v3226 = vunpack.c.h.b16 %v2177
        %v3227 = vunpack.c.l.b16 %v2178
        %v3228 = vunpack.c.h.b16 %v2178
        %v3229 = vunpack.c.l.b16 %v2179
        %v3230 = vunpack.c.h.b16 %v2179
        %v3231 = vunpack.c.l.b16 %v2180
        %v3232 = vunpack.c.h.b16 %v2180
        %v3233 = vunpack.c.l.b16 %v2181
        %v3234 = vunpack.c.h.b16 %v2181
        %v3235 = vunpack.c.l.b16 %v2182
        %v3236 = vunpack.c.h.b16 %v2182
        %v3237 = vunpack.c.l.b16 %v2183
        %v3238 = vunpack.c.h.b16 %v2183
        %v3239 = vunpack.c.l.b16 %v2184
        %v3240 = vunpack.c.h.b16 %v2184
        %v3241 = vunpack.c.l.b16 %v2185
        %v3242 = vunpack.c.h.b16 %v2185
        %v3243 = vunpack.c.l.b16 %v2186
        %v3244 = vunpack.c.h.b16 %v2186
        %v3245 = vunpack.c.l.b16 %v2187
        %v3246 = vunpack.c.h.b16 %v2187
        %v3247 = vunpack.c.l.b16 %v2188
        %v3248 = vunpack.c.h.b16 %v2188
        %v3249 = vunpack.c.l.b16 %v2189
        %v3250 = vunpack.c.h.b16 %v2189
        %v3251 = vunpack.c.l.b16 %v2190
        %v3252 = vunpack.c.h.b16 %v2190
        %v3253 = vunpack.c.l.b16 %v2191
        %v3254 = vunpack.c.h.b16 %v2191
        %v3255 = vunpack.c.l.b16 %v2192
        %v3256 = vunpack.c.h.b16 %v2192
        %v3257 = vunpack.c.l.b16 %v2193
        %v3258 = vunpack.c.h.b16 %v2193
        %v3259 = vunpack.c.l.b16 %v2194
        %v3260 = vunpack.c.h.b16 %v2194
        %v3261 = vunpack.c.l.b16 %v2195
        %v3262 = vunpack.c.h.b16 %v2195
        %v3263 = vunpack.c.l.b16 %v2196
        %v3264 = vunpack.c.h.b16 %v2196
        %v3265 = vunpack.c.l.b16 %v2197
        %v3266 = vunpack.c.h.b16 %v2197
        %v3267 = vunpack.c.l.b16 %v2198
        %v3268 = vunpack.c.h.b16 %v2198
        %v3269 = vunpack.c.l.b16 %v2199
        %v3270 = vunpack.c.h.b16 %v2199
        %v3271 = vunpack.c.l.b16 %v2200
        %v3272 = vunpack.c.h.b16 %v2200
        %v3273 = vunpack.c.l.b16 %v2201
        %v3274 = vunpack.c.h.b16 %v2201
        %v3275 = vunpack.c.l.b16 %v2202
        %v3276 = vunpack.c.h.b16 %v2202
        %v3277 = vunpack.c.l.b16 %v2203
        %v3278 = vunpack.c.h.b16 %v2203
        %v3279 = vunpack.c.l.b16 %v2204
        %v3280 = vunpack.c.h.b16 %v2204
        %v3281 = vunpack.c.l.b16 %v2205
        %v3282 = vunpack.c.h.b16 %v2205
        %v3283 = vunpack.c.l.b16 %v2206
        %v3284 = vunpack.c.h.b16 %v2206
        %v3285 = vunpack.c.l.b16 %v2207
        %v3286 = vunpack.c.h.b16 %v2207
        %v3287 = vunpack.c.l.b16 %v2208
        %v3288 = vunpack.c.h.b16 %v2208
        %v3289 = vunpack.c.l.b16 %v2209
        %v3290 = vunpack.c.h.b16 %v2209
        %v3291 = vunpack.c.l.b16 %v2210
        %v3292 = vunpack.c.h.b16 %v2210
        %v3293 = vunpack.c.l.b16 %v2211
        %v3294 = vunpack.c.h.b16 %v2211
        %v3295 = vunpack.c.l.b16 %v2212
        %v3296 = vunpack.c.h.b16 %v2212
        %v3297 = vunpack.c.l.b16 %v2213
        %v3298 = vunpack.c.h.b16 %v2213
        %v3299 = vunpack.c.l.b16 %v2214
        %v3300 = vunpack.c.h.b16 %v2214
        %v3301 = vunpack.c.l.b16 %v2215
        %v3302 = vunpack.c.h.b16 %v2215
        %v3303 = vunpack.c.l.b16 %v2216
        %v3304 = vunpack.c.h.b16 %v2216
        %v3305 = vunpack.c.l.b16 %v2217
        %v3306 = vunpack.c.h.b16 %v2217
        %v3307 = vunpack.c.l.b16 %v2218
        %v3308 = vunpack.c.h.b16 %v2218
        %v3309 = vunpack.c.l.b16 %v2219
        %v3310 = vunpack.c.h.b16 %v2219
        %v3311 = vunpack.c.l.b16 %v2220
        %v3312 = vunpack.c.h.b16 %v2220
        %v3313 = vunpack.c.l.b16 %v2221
        %v3314 = vunpack.c.h.b16 %v2221
        %v3315 = vunpack.c.l.b16 %v2222
        %v3316 = vunpack.c.h.b16 %v2222
        %v3317 = vunpack.c.l.b16 %v2223
        %v3318 = vunpack.c.h.b16 %v2223
        %v3319 = vunpack.c.l.b16 %v2224
        %v3320 = vunpack.c.h.b16 %v2224
        %v3321 = vunpack.c.l.b16 %v2225
        %v3322 = vunpack.c.h.b16 %v2225
        %v3323 = vunpack.c.l.b16 %v2226
        %v3324 = vunpack.c.h.b16 %v2226
        %v3325 = vunpack.c.l.b16 %v2227
        %v3326 = vunpack.c.h.b16 %v2227
        %v3327 = vunpack.c.l.b16 %v2228
        %v3328 = vunpack.c.h.b16 %v2228
        %v3329 = vunpack.c.l.b16 %v2229
        %v3330 = vunpack.c.h.b16 %v2229
        %v3331 = vunpack.c.l.b16 %v2230
        %v3332 = vunpack.c.h.b16 %v2230
        %v3333 = vunpack.c.l.b16 %v2231
        %v3334 = vunpack.c.h.b16 %v2231
        %v3335 = vunpack.c.l.b16 %v2232
        %v3336 = vunpack.c.h.b16 %v2232
        %v3337 = vunpack.c.l.b16 %v2233
        %v3338 = vunpack.c.h.b16 %v2233
        %v3339 = vunpack.c.l.b16 %v2234
        %v3340 = vunpack.c.h.b16 %v2234
        %v3341 = vunpack.c.l.b16 %v2235
        %v3342 = vunpack.c.h.b16 %v2235
        %v3343 = vunpack.c.l.b16 %v2236
        %v3344 = vunpack.c.h.b16 %v2236
        %v3345 = vunpack.c.l.b16 %v2237
        %v3346 = vunpack.c.h.b16 %v2237
        %v3347 = vunpack.c.l.b16 %v2238
        %v3348 = vunpack.c.h.b16 %v2238
        %v3349 = vunpack.c.l.b16 %v2239
        %v3350 = vunpack.c.h.b16 %v2239
        %v3351 = vunpack.c.l.b16 %v2240
        %v3352 = vunpack.c.h.b16 %v2240
        %v3353 = vunpack.c.l.b16 %v2241
        %v3354 = vunpack.c.h.b16 %v2241
        %v3355 = vunpack.c.l.b16 %v2242
        %v3356 = vunpack.c.h.b16 %v2242
        %v3357 = vunpack.c.l.b16 %v2243
        %v3358 = vunpack.c.h.b16 %v2243
        %v3359 = vunpack.c.l.b16 %v2244
        %v3360 = vunpack.c.h.b16 %v2244
        %v3361 = vunpack.c.l.b16 %v2245
        %v3362 = vunpack.c.h.b16 %v2245
        %v3363 = vunpack.c.l.b16 %v2246
        %v3364 = vunpack.c.h.b16 %v2246
        %v3365 = vunpack.c.l.b16 %v2247
        %v3366 = vunpack.c.h.b16 %v2247
        %v3367 = vunpack.c.l.b16 %v2248
        %v3368 = vunpack.c.h.b16 %v2248
        %v3369 = vunpack.c.l.b16 %v2249
        %v3370 = vunpack.c.h.b16 %v2249
        %v3371 = vunpack.c.l.b16 %v2250
        %v3372 = vunpack.c.h.b16 %v2250
        %v3373 = vunpack.c.l.b16 %v2251
        %v3374 = vunpack.c.h.b16 %v2251
        %v3375 = vunpack.c.l.b16 %v2252
        %v3376 = vunpack.c.h.b16 %v2252
        %v3377 = vunpack.c.l.b16 %v2253
        %v3378 = vunpack.c.h.b16 %v2253
        %v3379 = vunpack.c.l.b16 %v2254
        %v3380 = vunpack.c.h.b16 %v2254
        %v3381 = vunpack.c.l.b16 %v2255
        %v3382 = vunpack.c.h.b16 %v2255
        %v3383 = vunpack.c.l.b16 %v2256
        %v3384 = vunpack.c.h.b16 %v2256
        %v3385 = vunpack.c.l.b16 %v2257
        %v3386 = vunpack.c.h.b16 %v2257
        %v3387 = vunpack.c.l.b16 %v2258
        %v3388 = vunpack.c.h.b16 %v2258
        %v3389 = vunpack.c.l.b16 %v2259
        %v3390 = vunpack.c.h.b16 %v2259
        %v3391 = vunpack.c.l.b16 %v2260
        %v3392 = vunpack.c.h.b16 %v2260
        %v3393 = vunpack.c.l.b16 %v2261
        %v3394 = vunpack.c.h.b16 %v2261
        %v3395 = vunpack.c.l.b16 %v2262
        %v3396 = vunpack.c.h.b16 %v2262
        %v3397 = vunpack.c.l.b16 %v2263
        %v3398 = vunpack.c.h.b16 %v2263
        %v3399 = vunpack.c.l.b16 %v2264
        %v3400 = vunpack.c.h.b16 %v2264
        %v3401 = vunpack.c.l.b16 %v2265
        %v3402 = vunpack.c.h.b16 %v2265
        %v3403 = vunpack.c.l.b16 %v2266
        %v3404 = vunpack.c.h.b16 %v2266
        %v3405 = vunpack.c.l.b16 %v2267
        %v3406 = vunpack.c.h.b16 %v2267
        %v3407 = vunpack.c.l.b16 %v2268
        %v3408 = vunpack.c.h.b16 %v2268
        %v3409 = vunpack.c.l.b16 %v2269
        %v3410 = vunpack.c.h.b16 %v2269
        %v3411 = vunpack.c.l.b16 %v2270
        %v3412 = vunpack.c.h.b16 %v2270
        %v3413 = vunpack.c.l.b16 %v2271
        %v3414 = vunpack.c.h.b16 %v2271
        %v3415 = vunpack.c.l.b16 %v2272
        %v3416 = vunpack.c.h.b16 %v2272
        %v3417 = vunpack.c.l.b16 %v2273
        %v3418 = vunpack.c.h.b16 %v2273
        %v3419 = vunpack.c.l.b16 %v2274
        %v3420 = vunpack.c.h.b16 %v2274
        %v3421 = vunpack.c.l.b16 %v2275
        %v3422 = vunpack.c.h.b16 %v2275
        %v3423 = vunpack.c.l.b16 %v2276
        %v3424 = vunpack.c.h.b16 %v2276
        %v3425 = vunpack.c.l.b16 %v2277
        %v3426 = vunpack.c.h.b16 %v2277
        %v3427 = vunpack.c.l.b16 %v2278
        %v3428 = vunpack.c.h.b16 %v2278
        %v3429 = vunpack.c.l.b16 %v2279
        %v3430 = vunpack.c.h.b16 %v2279
        %v3431 = vunpack.c.l.b16 %v2280
        %v3432 = vunpack.c.h.b16 %v2280
        %v3433 = vunpack.c.l.b16 %v2281
        %v3434 = vunpack.c.h.b16 %v2281
        %v3435 = vunpack.c.l.b16 %v2282
        %v3436 = vunpack.c.h.b16 %v2282
        %v3437 = vunpack.c.l.b16 %v2283
        %v3438 = vunpack.c.h.b16 %v2283
        %v3439 = vunpack.c.l.b16 %v2284
        %v3440 = vunpack.c.h.b16 %v2284
        %v3441 = vunpack.c.l.b16 %v2285
        %v3442 = vunpack.c.h.b16 %v2285
        %v3443 = vunpack.c.l.b16 %v2286
        %v3444 = vunpack.c.h.b16 %v2286
        %v3445 = vunpack.c.l.b16 %v2287
        %v3446 = vunpack.c.h.b16 %v2287
        %v3447 = vunpack.c.l.b16 %v2288
        %v3448 = vunpack.c.h.b16 %v2288
        %v3449 = vunpack.c.l.b16 %v2289
        %v3450 = vunpack.c.h.b16 %v2289
        %v3451 = vunpack.c.l.b16 %v2290
        %v3452 = vunpack.c.h.b16 %v2290
        %v3453 = vunpack.c.l.b16 %v2291
        %v3454 = vunpack.c.h.b16 %v2291
        %v3455 = vunpack.c.l.b16 %v2292
        %v3456 = vunpack.c.h.b16 %v2292
        %v3457 = vunpack.c.l.b16 %v2293
        %v3458 = vunpack.c.h.b16 %v2293
        %v3459 = vunpack.c.l.b16 %v2294
        %v3460 = vunpack.c.h.b16 %v2294
        %v3461 = vunpack.c.l.b16 %v2295
        %v3462 = vunpack.c.h.b16 %v2295
        %v3463 = vunpack.c.l.b16 %v2296
        %v3464 = vunpack.c.h.b16 %v2296
        %v3465 = vunpack.c.l.b16 %v2297
        %v3466 = vunpack.c.h.b16 %v2297
        %v3467 = vunpack.c.l.b16 %v2298
        %v3468 = vunpack.c.h.b16 %v2298
        %v3469 = vunpack.c.l.b16 %v2299
        %v3470 = vunpack.c.h.b16 %v2299
        %v3471 = vunpack.c.l.b16 %v2300
        %v3472 = vunpack.c.h.b16 %v2300
        %v3473 = vunpack.c.l.b16 %v2301
        %v3474 = vunpack.c.h.b16 %v2301
        %v3475 = vunpack.c.l.b16 %v2302
        %v3476 = vunpack.c.h.b16 %v2302
        %v3477 = vunpack.c.l.b16 %v2303
        %v3478 = vunpack.c.h.b16 %v2303
        %v3479 = vunpack.c.l.b16 %v2304
        %v3480 = vunpack.c.h.b16 %v2304
        %v3481 = vunpack.c.l.b16 %v2305
        %v3482 = vunpack.c.h.b16 %v2305
        %v3483 = vunpack.c.l.b16 %v2306
        %v3484 = vunpack.c.h.b16 %v2306
        %v3485 = vunpack.c.l.b16 %v2307
        %v3486 = vunpack.c.h.b16 %v2307
        %v3487 = vunpack.c.l.b16 %v2308
        %v3488 = vunpack.c.h.b16 %v2308
        %v3489 = vunpack.c.l.b16 %v2309
        %v3490 = vunpack.c.h.b16 %v2309
        %v3491 = vunpack.c.l.b16 %v2310
        %v3492 = vunpack.c.h.b16 %v2310
        %v3493 = vunpack.c.l.b16 %v2311
        %v3494 = vunpack.c.h.b16 %v2311
        %v3495 = vunpack.c.l.b16 %v2312
        %v3496 = vunpack.c.h.b16 %v2312
        %v3497 = vunpack.c.l.b16 %v2313
        %v3498 = vunpack.c.h.b16 %v2313
        %v3499 = vunpack.c.l.b16 %v2314
        %v3500 = vunpack.c.h.b16 %v2314
        %v3501 = vunpack.c.l.b16 %v2315
        %v3502 = vunpack.c.h.b16 %v2315
        %v3503 = vunpack.c.l.b16 %v2316
        %v3504 = vunpack.c.h.b16 %v2316
        %v3505 = vunpack.c.l.b16 %v2317
        %v3506 = vunpack.c.h.b16 %v2317
        %v3507 = vunpack.c.l.b16 %v2318
        %v3508 = vunpack.c.h.b16 %v2318
        %v3509 = vunpack.c.l.b16 %v2319
        %v3510 = vunpack.c.h.b16 %v2319
        %v3511 = vunpack.c.l.b16 %v2320
        %v3512 = vunpack.c.h.b16 %v2320
        %v3513 = vunpack.c.l.b16 %v2321
        %v3514 = vunpack.c.h.b16 %v2321
        %v3515 = vunpack.c.l.b16 %v2322
        %v3516 = vunpack.c.h.b16 %v2322
        %v3517 = vunpack.c.l.b16 %v2323
        %v3518 = vunpack.c.h.b16 %v2323
        %v3519 = vunpack.c.l.b16 %v2324
        %v3520 = vunpack.c.h.b16 %v2324
        %v3521 = vunpack.c.l.b16 %v2325
        %v3522 = vunpack.c.h.b16 %v2325
        %v3523 = vunpack.c.l.b16 %v2326
        %v3524 = vunpack.c.h.b16 %v2326
        %v3525 = vunpack.c.l.b16 %v2327
        %v3526 = vunpack.c.h.b16 %v2327
        %v3527 = vunpack.c.l.b16 %v2328
        %v3528 = vunpack.c.h.b16 %v2328
        %v3529 = vunpack.c.l.b16 %v2329
        %v3530 = vunpack.c.h.b16 %v2329
        %v3531 = vunpack.c.l.b16 %v2330
        %v3532 = vunpack.c.h.b16 %v2330
        %v3533 = vunpack.c.l.b16 %v2331
        %v3534 = vunpack.c.h.b16 %v2331
        %v3535 = vunpack.c.l.b16 %v2332
        %v3536 = vunpack.c.h.b16 %v2332
        %v3537 = vunpack.c.l.b16 %v2333
        %v3538 = vunpack.c.h.b16 %v2333
        %v3539 = vunpack.c.l.b16 %v2334
        %v3540 = vunpack.c.h.b16 %v2334
        %v3541 = vunpack.c.l.b16 %v2335
        %v3542 = vunpack.c.h.b16 %v2335
        %v3543 = vunpack.c.l.b16 %v2336
        %v3544 = vunpack.c.h.b16 %v2336
        %v3545 = vunpack.c.l.b16 %v2337
        %v3546 = vunpack.c.h.b16 %v2337
        %v3547 = vunpack.c.l.b16 %v2338
        %v3548 = vunpack.c.h.b16 %v2338
        %v3549 = vunpack.c.l.b16 %v2339
        %v3550 = vunpack.c.h.b16 %v2339
        %v3551 = vunpack.c.l.b16 %v2340
        %v3552 = vunpack.c.h.b16 %v2340
        %v3553 = vunpack.c.l.b16 %v2341
        %v3554 = vunpack.c.h.b16 %v2341
        %v3555 = vunpack.c.l.b16 %v2342
        %v3556 = vunpack.c.h.b16 %v2342
        %v3557 = vunpack.c.l.b16 %v2343
        %v3558 = vunpack.c.h.b16 %v2343
        %v3559 = vunpack.c.l.b16 %v2344
        %v3560 = vunpack.c.h.b16 %v2344
        %v3561 = vunpack.c.l.b16 %v2345
        %v3562 = vunpack.c.h.b16 %v2345
        %v3563 = vunpack.c.l.b16 %v2346
        %v3564 = vunpack.c.h.b16 %v2346
        %v3565 = vunpack.c.l.b16 %v2347
        %v3566 = vunpack.c.h.b16 %v2347
        %v3567 = vunpack.c.l.b16 %v2348
        %v3568 = vunpack.c.h.b16 %v2348
        %v3569 = vunpack.c.l.b16 %v2349
        %v3570 = vunpack.c.h.b16 %v2349
        %v3571 = vunpack.c.l.b16 %v2350
        %v3572 = vunpack.c.h.b16 %v2350
        %v3573 = vunpack.c.l.b16 %v2351
        %v3574 = vunpack.c.h.b16 %v2351
        %v3575 = vunpack.c.l.b16 %v2352
        %v3576 = vunpack.c.h.b16 %v2352
        %v3577 = vunpack.c.l.b16 %v2353
        %v3578 = vunpack.c.h.b16 %v2353
        %v3579 = vunpack.c.l.b16 %v2354
        %v3580 = vunpack.c.h.b16 %v2354
        %v3581 = vunpack.c.l.b16 %v2355
        %v3582 = vunpack.c.h.b16 %v2355
        %v3583 = vunpack.c.l.b16 %v2356
        %v3584 = vunpack.c.h.b16 %v2356
        %v3585 = vunpack.c.l.b16 %v2357
        %v3586 = vunpack.c.h.b16 %v2357
        %v3587 = vunpack.c.l.b16 %v2358
        %v3588 = vunpack.c.h.b16 %v2358
        %v3589 = vunpack.c.l.b16 %v2359
        %v3590 = vunpack.c.h.b16 %v2359
        %v3591 = vunpack.c.l.b16 %v2360
        %v3592 = vunpack.c.h.b16 %v2360
        %v3593 = vunpack.c.l.b16 %v2361
        %v3594 = vunpack.c.h.b16 %v2361
        %v3595 = vunpack.c.l.b16 %v2362
        %v3596 = vunpack.c.h.b16 %v2362
        %v3597 = vunpack.c.l.b16 %v2363
        %v3598 = vunpack.c.h.b16 %v2363
        %v3599 = vunpack.c.l.b16 %v2364
        %v3600 = vunpack.c.h.b16 %v2364
        %v3601 = vunpack.c.l.b16 %v2365
        %v3602 = vunpack.c.h.b16 %v2365
        %v3603 = vunpack.c.l.b16 %v2366
        %v3604 = vunpack.c.h.b16 %v2366
        %v3605 = vunpack.c.l.b16 %v2367
        %v3606 = vunpack.c.h.b16 %v2367
        %v3607 = vunpack.c.l.b16 %v2368
        %v3608 = vunpack.c.h.b16 %v2368
        %v3609 = vunpack.c.l.b16 %v2369
        %v3610 = vunpack.c.h.b16 %v2369
        %v3611 = vunpack.c.l.b16 %v2370
        %v3612 = vunpack.c.h.b16 %v2370
        %v3613 = vunpack.c.l.b16 %v2371
        %v3614 = vunpack.c.h.b16 %v2371
        %v3615 = vunpack.c.l.b16 %v2372
        %v3616 = vunpack.c.h.b16 %v2372
        %v3617 = vunpack.c.l.b16 %v2373
        %v3618 = vunpack.c.h.b16 %v2373
        %v3619 = vunpack.c.l.b16 %v2374
        %v3620 = vunpack.c.h.b16 %v2374
        %v3621 = vunpack.c.l.b16 %v2375
        %v3622 = vunpack.c.h.b16 %v2375
        %v3623 = vunpack.c.l.b16 %v2376
        %v3624 = vunpack.c.h.b16 %v2376
        %v3625 = vunpack.c.l.b16 %v2377
        %v3626 = vunpack.c.h.b16 %v2377
        %v3627 = vunpack.c.l.b16 %v2378
        %v3628 = vunpack.c.h.b16 %v2378
        %v3629 = vunpack.c.l.b16 %v2379
        %v3630 = vunpack.c.h.b16 %v2379
        %v3631 = vunpack.c.l.b16 %v2380
        %v3632 = vunpack.c.h.b16 %v2380
        %v3633 = vunpack.c.l.b16 %v2381
        %v3634 = vunpack.c.h.b16 %v2381
        %v3635 = vunpack.c.l.b16 %v2382
        %v3636 = vunpack.c.h.b16 %v2382
        %v3637 = vunpack.c.l.b16 %v2383
        %v3638 = vunpack.c.h.b16 %v2383
        %v3639 = vunpack.c.l.b16 %v2384
        %v3640 = vunpack.c.h.b16 %v2384
        %v3641 = vunpack.c.l.b16 %v2385
        %v3642 = vunpack.c.h.b16 %v2385
        %v3643 = vunpack.c.l.b16 %v2386
        %v3644 = vunpack.c.h.b16 %v2386
        %v3645 = vunpack.c.l.b16 %v2387
        %v3646 = vunpack.c.h.b16 %v2387
        %v3647 = vunpack.c.l.b16 %v2388
        %v3648 = vunpack.c.h.b16 %v2388
        %v3649 = vunpack.c.l.b16 %v2389
        %v3650 = vunpack.c.h.b16 %v2389
        %v3651 = vunpack.c.l.b16 %v2390
        %v3652 = vunpack.c.h.b16 %v2390
        %v3653 = vunpack.c.l.b16 %v2391
        %v3654 = vunpack.c.h.b16 %v2391
        %v3655 = vunpack.c.l.b16 %v2392
        %v3656 = vunpack.c.h.b16 %v2392
        %v3657 = vunpack.c.l.b16 %v2393
        %v3658 = vunpack.c.h.b16 %v2393
        %v3659 = vunpack.c.l.b16 %v2394
        %v3660 = vunpack.c.h.b16 %v2394
        %v3661 = vunpack.c.l.b16 %v2395
        %v3662 = vunpack.c.h.b16 %v2395
        %v3663 = vunpack.c.l.b16 %v2396
        %v3664 = vunpack.c.h.b16 %v2396
        %v3665 = vunpack.c.l.b16 %v2397
        %v3666 = vunpack.c.h.b16 %v2397
        %v3667 = vunpack.c.l.b16 %v2398
        %v3668 = vunpack.c.h.b16 %v2398
        %v3669 = vunpack.c.l.b16 %v2399
        %v3670 = vunpack.c.h.b16 %v2399
        %v3671 = vunpack.c.l.b16 %v2400
        %v3672 = vunpack.c.h.b16 %v2400
        %v3673 = vunpack.c.l.b16 %v2401
        %v3674 = vunpack.c.h.b16 %v2401
        %v3675 = vunpack.c.l.b16 %v2402
        %v3676 = vunpack.c.h.b16 %v2402
        %v3677 = vunpack.c.l.b16 %v2403
        %v3678 = vunpack.c.h.b16 %v2403
        %v3679 = vunpack.c.l.b16 %v2404
        %v3680 = vunpack.c.h.b16 %v2404
        %v3681 = vunpack.c.l.b16 %v2405
        %v3682 = vunpack.c.h.b16 %v2405
        %v3683 = vunpack.c.l.b16 %v2406
        %v3684 = vunpack.c.h.b16 %v2406
        %v3685 = vunpack.c.l.b16 %v2407
        %v3686 = vunpack.c.h.b16 %v2407
        %v3687 = vunpack.c.l.b16 %v2408
        %v3688 = vunpack.c.h.b16 %v2408
        %v3689 = vunpack.c.l.b16 %v2409
        %v3690 = vunpack.c.h.b16 %v2409
        %v3691 = vunpack.c.l.b16 %v2410
        %v3692 = vunpack.c.h.b16 %v2410
        %v3693 = vunpack.c.l.b16 %v2411
        %v3694 = vunpack.c.h.b16 %v2411
        %v3695 = vunpack.c.l.b16 %v2412
        %v3696 = vunpack.c.h.b16 %v2412
        %v3697 = vunpack.c.l.b16 %v2413
        %v3698 = vunpack.c.h.b16 %v2413
        %v3699 = vunpack.c.l.b16 %v2414
        %v3700 = vunpack.c.h.b16 %v2414
        %v3701 = vunpack.c.l.b16 %v2415
        %v3702 = vunpack.c.h.b16 %v2415
        %v3703 = vunpack.c.l.b16 %v2416
        %v3704 = vunpack.c.h.b16 %v2416
        %v3705 = vunpack.c.l.b16 %v2417
        %v3706 = vunpack.c.h.b16 %v2417
        %v3707 = vunpack.c.l.b16 %v2418
        %v3708 = vunpack.c.h.b16 %v2418
        %v3709 = vunpack.c.l.b16 %v2419
        %v3710 = vunpack.c.h.b16 %v2419
        %v3711 = vunpack.c.l.b16 %v2420
        %v3712 = vunpack.c.h.b16 %v2420
        %v3713 = vunpack.c.l.b16 %v2421
        %v3714 = vunpack.c.h.b16 %v2421
        %v3715 = vunpack.c.l.b16 %v2422
        %v3716 = vunpack.c.h.b16 %v2422
        %v3717 = vunpack.c.l.b16 %v2423
        %v3718 = vunpack.c.h.b16 %v2423
        %v3719 = vunpack.c.l.b16 %v2424
        %v3720 = vunpack.c.h.b16 %v2424
        %v3721 = vunpack.c.l.b16 %v2425
        %v3722 = vunpack.c.h.b16 %v2425
        %v3723 = vunpack.c.l.b16 %v2426
        %v3724 = vunpack.c.h.b16 %v2426
        %v3725 = vunpack.c.l.b16 %v2427
        %v3726 = vunpack.c.h.b16 %v2427
        %v3727 = vunpack.c.l.b16 %v2428
        %v3728 = vunpack.c.h.b16 %v2428
        %v3729 = vunpack.c.l.b16 %v2429
        %v3730 = vunpack.c.h.b16 %v2429
        %v3731 = vunpack.c.l.b16 %v2430
        %v3732 = vunpack.c.h.b16 %v2430
        %v3733 = vunpack.c.l.b16 %v2431
        %v3734 = vunpack.c.h.b16 %v2431
        %v3735 = vunpack.c.l.b16 %v2432
        %v3736 = vunpack.c.h.b16 %v2432
        %v3737 = vunpack.c.l.b16 %v2433
        %v3738 = vunpack.c.h.b16 %v2433
        %v3739 = vunpack.c.l.b16 %v2434
        %v3740 = vunpack.c.h.b16 %v2434
        %v3741 = vunpack.c.l.b16 %v2435
        %v3742 = vunpack.c.h.b16 %v2435
        %v3743 = vunpack.c.l.b16 %v2436
        %v3744 = vunpack.c.h.b16 %v2436
        %v3745 = vunpack.c.l.b16 %v2437
        %v3746 = vunpack.c.h.b16 %v2437
        %v3747 = vunpack.c.l.b16 %v2438
        %v3748 = vunpack.c.h.b16 %v2438
        %v3749 = vunpack.c.l.b16 %v2439
        %v3750 = vunpack.c.h.b16 %v2439
        %v3751 = vunpack.c.l.b16 %v2440
        %v3752 = vunpack.c.h.b16 %v2440
        %v3753 = vunpack.c.l.b16 %v2441
        %v3754 = vunpack.c.h.b16 %v2441
        %v3755 = vunpack.c.l.b16 %v2442
        %v3756 = vunpack.c.h.b16 %v2442
        %v3757 = vunpack.c.l.b16 %v2443
        %v3758 = vunpack.c.h.b16 %v2443
        %v3759 = vunpack.c.l.b16 %v2444
        %v3760 = vunpack.c.h.b16 %v2444
        %v3761 = vunpack.c.l.b16 %v2445
        %v3762 = vunpack.c.h.b16 %v2445
        %v3763 = vunpack.c.l.b16 %v2446
        %v3764 = vunpack.c.h.b16 %v2446
        %v3765 = vunpack.c.l.b16 %v2447
        %v3766 = vunpack.c.h.b16 %v2447
        %v3767 = vunpack.c.l.b16 %v2448
        %v3768 = vunpack.c.h.b16 %v2448
        %v3769 = vunpack.c.l.b16 %v2449
        %v3770 = vunpack.c.h.b16 %v2449
        %v3771 = vunpack.c.l.b16 %v2450
        %v3772 = vunpack.c.h.b16 %v2450
        %v3773 = vunpack.c.l.b16 %v2451
        %v3774 = vunpack.c.h.b16 %v2451
        %v3775 = vunpack.c.l.b16 %v2452
        %v3776 = vunpack.c.h.b16 %v2452
        %v3777 = vunpack.c.l.b16 %v2453
        %v3778 = vunpack.c.h.b16 %v2453
        %v3779 = vunpack.c.l.b16 %v2454
        %v3780 = vunpack.c.h.b16 %v2454
        %v3781 = vunpack.c.l.b16 %v2455
        %v3782 = vunpack.c.h.b16 %v2455
        %v3783 = vunpack.c.l.b16 %v2456
        %v3784 = vunpack.c.h.b16 %v2456
        %v3785 = vunpack.c.l.b16 %v2457
        %v3786 = vunpack.c.h.b16 %v2457
        %v3787 = vunpack.c.l.b16 %v2458
        %v3788 = vunpack.c.h.b16 %v2458
        %v3789 = vunpack.c.l.b16 %v2459
        %v3790 = vunpack.c.h.b16 %v2459
        %v3791 = vunpack.c.l.b16 %v2460
        %v3792 = vunpack.c.h.b16 %v2460
        %v3793 = vunpack.c.l.b16 %v2461
        %v3794 = vunpack.c.h.b16 %v2461
        %v3795 = vunpack.c.l.b16 %v2462
        %v3796 = vunpack.c.h.b16 %v2462
        %v3797 = vunpack.c.l.b16 %v2463
        %v3798 = vunpack.c.h.b16 %v2463
        %v3799 = vunpack.c.l.b16 %v2464
        %v3800 = vunpack.c.h.b16 %v2464
        %v3801 = vunpack.c.l.b16 %v2465
        %v3802 = vunpack.c.h.b16 %v2465
        %v3803 = vunpack.c.l.b16 %v2466
        %v3804 = vunpack.c.h.b16 %v2466
        %v3805 = vunpack.c.l.b16 %v2467
        %v3806 = vunpack.c.h.b16 %v2467
        %v3807 = vunpack.c.l.b16 %v2468
        %v3808 = vunpack.c.h.b16 %v2468
        %v3809 = vunpack.c.l.b16 %v2469
        %v3810 = vunpack.c.h.b16 %v2469
        %v3811 = vunpack.c.l.b16 %v2470
        %v3812 = vunpack.c.h.b16 %v2470
        %v3813 = vunpack.c.l.b16 %v2471
        %v3814 = vunpack.c.h.b16 %v2471
        %v3815 = vunpack.c.l.b16 %v2472
        %v3816 = vunpack.c.h.b16 %v2472
        %v3817 = vunpack.c.l.b16 %v2473
        %v3818 = vunpack.c.h.b16 %v2473
        %v3819 = vunpack.c.l.b16 %v2474
        %v3820 = vunpack.c.h.b16 %v2474
        %v3821 = vunpack.c.l.b16 %v2475
        %v3822 = vunpack.c.h.b16 %v2475
        %v3823 = vunpack.c.l.b16 %v2476
        %v3824 = vunpack.c.h.b16 %v2476
        %v3825 = vunpack.c.l.b16 %v2477
        %v3826 = vunpack.c.h.b16 %v2477
        %v3827 = vunpack.c.l.b16 %v2478
        %v3828 = vunpack.c.h.b16 %v2478
        %v3829 = vunpack.c.l.b16 %v2479
        %v3830 = vunpack.c.h.b16 %v2479
        %v3831 = vpack.c.b16 %v2935, %v2931
        %v3832 = vpack.c.b16 %v2936, %v2932
        %v3833 = vpack.c.b16 %v2937, %v2933
        %v3834 = vpack.c.b16 %v2938, %v2934
        %v3835 = vpack.c.b16 %v2943, %v2939
        %v3836 = vpack.c.b16 %v2944, %v2940
        %v3837 = vpack.c.b16 %v2945, %v2941
        %v3838 = vpack.c.b16 %v2946, %v2942
        %v3839 = vpack.c.b16 %v2951, %v2947
        %v3840 = vpack.c.b16 %v2952, %v2948
        %v3841 = vpack.c.b16 %v2953, %v2949
        %v3842 = vpack.c.b16 %v2954, %v2950
        %v3843 = vpack.c.b16 %v2959, %v2955
        %v3844 = vpack.c.b16 %v2960, %v2956
        %v3845 = vpack.c.b16 %v2961, %v2957
        %v3846 = vpack.c.b16 %v2962, %v2958
        %v3847 = vpack.c.b16 %v2967, %v2963
        %v3848 = vpack.c.b16 %v2968, %v2964
        %v3849 = vpack.c.b16 %v2969, %v2965
        %v3850 = vpack.c.b16 %v2970, %v2966
        %v3851 = vpack.c.b16 %v2975, %v2971
        %v3852 = vpack.c.b16 %v2976, %v2972
        %v3853 = vpack.c.b16 %v2977, %v2973
        %v3854 = vpack.c.b16 %v2978, %v2974
        %v3855 = vpack.c.b16 %v2983, %v2979
        %v3856 = vpack.c.b16 %v2984, %v2980
        %v3857 = vpack.c.b16 %v2985, %v2981
        %v3858 = vpack.c.b16 %v2986, %v2982
        %v3859 = vpack.c.b16 %v2991, %v2987
        %v3860 = vpack.c.b16 %v2992, %v2988
        %v3861 = vpack.c.b16 %v2993, %v2989
        %v3862 = vpack.c.b16 %v2994, %v2990
        %v3863 = vpack.c.b16 %v2999, %v2995
        %v3864 = vpack.c.b16 %v3000, %v2996
        %v3865 = vpack.c.b16 %v3001, %v2997
        %v3866 = vpack.c.b16 %v3002, %v2998
        %v3867 = vpack.c.b16 %v3007, %v3003
        %v3868 = vpack.c.b16 %v3008, %v3004
        %v3869 = vpack.c.b16 %v3009, %v3005
        %v3870 = vpack.c.b16 %v3010, %v3006
        %v3871 = vpack.c.b16 %v3015, %v3011
        %v3872 = vpack.c.b16 %v3016, %v3012
        %v3873 = vpack.c.b16 %v3017, %v3013
        %v3874 = vpack.c.b16 %v3018, %v3014
        %v3875 = vpack.c.b16 %v3023, %v3019
        %v3876 = vpack.c.b16 %v3024, %v3020
        %v3877 = vpack.c.b16 %v3025, %v3021
        %v3878 = vpack.c.b16 %v3026, %v3022
        %v3879 = vpack.c.b16 %v3031, %v3027
        %v3880 = vpack.c.b16 %v3032, %v3028
        %v3881 = vpack.c.b16 %v3033, %v3029
        %v3882 = vpack.c.b16 %v3034, %v3030
        %v3883 = vpack.c.b16 %v3039, %v3035
        %v3884 = vpack.c.b16 %v3040, %v3036
        %v3885 = vpack.c.b16 %v3041, %v3037
        %v3886 = vpack.c.b16 %v3042, %v3038
        %v3887 = vpack.c.b16 %v3047, %v3043
        %v3888 = vpack.c.b16 %v3048, %v3044
        %v3889 = vpack.c.b16 %v3049, %v3045
        %v3890 = vpack.c.b16 %v3050, %v3046
        %v3891 = vpack.c.b16 %v3055, %v3051
        %v3892 = vpack.c.b16 %v3056, %v3052
        %v3893 = vpack.c.b16 %v3057, %v3053
        %v3894 = vpack.c.b16 %v3058, %v3054
        %v3895 = vpack.c.b16 %v3063, %v3059
        %v3896 = vpack.c.b16 %v3064, %v3060
        %v3897 = vpack.c.b16 %v3065, %v3061
        %v3898 = vpack.c.b16 %v3066, %v3062
        %v3899 = vpack.c.b16 %v3071, %v3067
        %v3900 = vpack.c.b16 %v3072, %v3068
        %v3901 = vpack.c.b16 %v3073, %v3069
        %v3902 = vpack.c.b16 %v3074, %v3070
        %v3903 = vpack.c.b16 %v3079, %v3075
        %v3904 = vpack.c.b16 %v3080, %v3076
        %v3905 = vpack.c.b16 %v3081, %v3077
        %v3906 = vpack.c.b16 %v3082, %v3078
        %v3907 = vpack.c.b16 %v3087, %v3083
        %v3908 = vpack.c.b16 %v3088, %v3084
        %v3909 = vpack.c.b16 %v3089, %v3085
        %v3910 = vpack.c.b16 %v3090, %v3086
        %v3911 = vpack.c.b16 %v3095, %v3091
        %v3912 = vpack.c.b16 %v3096, %v3092
        %v3913 = vpack.c.b16 %v3097, %v3093
        %v3914 = vpack.c.b16 %v3098, %v3094
        %v3915 = vpack.c.b16 %v3103, %v3099
        %v3916 = vpack.c.b16 %v3104, %v3100
        %v3917 = vpack.c.b16 %v3105, %v3101
        %v3918 = vpack.c.b16 %v3106, %v3102
        %v3919 = vpack.c.b16 %v3111, %v3107
        %v3920 = vpack.c.b16 %v3112, %v3108
        %v3921 = vpack.c.b16 %v3113, %v3109
        %v3922 = vpack.c.b16 %v3114, %v3110
        %v3923 = vpack.c.b16 %v3119, %v3115
        %v3924 = vpack.c.b16 %v3120, %v3116
        %v3925 = vpack.c.b16 %v3121, %v3117
        %v3926 = vpack.c.b16 %v3122, %v3118
        %v3927 = vpack.c.b16 %v3127, %v3123
        %v3928 = vpack.c.b16 %v3128, %v3124
        %v3929 = vpack.c.b16 %v3129, %v3125
        %v3930 = vpack.c.b16 %v3130, %v3126
        %v3931 = vpack.c.b16 %v3135, %v3131
        %v3932 = vpack.c.b16 %v3136, %v3132
        %v3933 = vpack.c.b16 %v3137, %v3133
        %v3934 = vpack.c.b16 %v3138, %v3134
        %v3935 = vpack.c.b16 %v3143, %v3139
        %v3936 = vpack.c.b16 %v3144, %v3140
        %v3937 = vpack.c.b16 %v3145, %v3141
        %v3938 = vpack.c.b16 %v3146, %v3142
        %v3939 = vpack.c.b16 %v3151, %v3147
        %v3940 = vpack.c.b16 %v3152, %v3148
        %v3941 = vpack.c.b16 %v3153, %v3149
        %v3942 = vpack.c.b16 %v3154, %v3150
        %v3943 = vpack.c.b16 %v3159, %v3155
        %v3944 = vpack.c.b16 %v3160, %v3156
        %v3945 = vpack.c.b16 %v3161, %v3157
        %v3946 = vpack.c.b16 %v3162, %v3158
        %v3947 = vpack.c.b16 %v3167, %v3163
        %v3948 = vpack.c.b16 %v3168, %v3164
        %v3949 = vpack.c.b16 %v3169, %v3165
        %v3950 = vpack.c.b16 %v3170, %v3166
        %v3951 = vpack.c.b16 %v3175, %v3171
        %v3952 = vpack.c.b16 %v3176, %v3172
        %v3953 = vpack.c.b16 %v3177, %v3173
        %v3954 = vpack.c.b16 %v3178, %v3174
        %v3955 = vpack.c.b16 %v3183, %v3179
        %v3956 = vpack.c.b16 %v3184, %v3180
        %v3957 = vpack.c.b16 %v3185, %v3181
        %v3958 = vpack.c.b16 %v3186, %v3182
        %v3959 = vpack.c.b16 %v3191, %v3187
        %v3960 = vpack.c.b16 %v3192, %v3188
        %v3961 = vpack.c.b16 %v3193, %v3189
        %v3962 = vpack.c.b16 %v3194, %v3190
        %v3963 = vpack.c.b16 %v3199, %v3195
        %v3964 = vpack.c.b16 %v3200, %v3196
        %v3965 = vpack.c.b16 %v3201, %v3197
        %v3966 = vpack.c.b16 %v3202, %v3198
        %v3967 = vpack.c.b16 %v3207, %v3203
        %v3968 = vpack.c.b16 %v3208, %v3204
        %v3969 = vpack.c.b16 %v3209, %v3205
        %v3970 = vpack.c.b16 %v3210, %v3206
        %v3971 = vpack.c.b16 %v3215, %v3211
        %v3972 = vpack.c.b16 %v3216, %v3212
        %v3973 = vpack.c.b16 %v3217, %v3213
        %v3974 = vpack.c.b16 %v3218, %v3214
        %v3975 = vpack.c.b16 %v3223, %v3219
        %v3976 = vpack.c.b16 %v3224, %v3220
        %v3977 = vpack.c.b16 %v3225, %v3221
        %v3978 = vpack.c.b16 %v3226, %v3222
        %v3979 = vpack.c.b16 %v3231, %v3227
        %v3980 = vpack.c.b16 %v3232, %v3228
        %v3981 = vpack.c.b16 %v3233, %v3229
        %v3982 = vpack.c.b16 %v3234, %v3230
        %v3983 = vpack.c.b16 %v3239, %v3235
        %v3984 = vpack.c.b16 %v3240, %v3236
        %v3985 = vpack.c.b16 %v3241, %v3237
        %v3986 = vpack.c.b16 %v3242, %v3238
        %v3987 = vpack.c.b16 %v3247, %v3243
        %v3988 = vpack.c.b16 %v3248, %v3244
        %v3989 = vpack.c.b16 %v3249, %v3245
        %v3990 = vpack.c.b16 %v3250, %v3246
        %v3991 = vpack.c.b16 %v3255, %v3251
        %v3992 = vpack.c.b16 %v3256, %v3252
        %v3993 = vpack.c.b16 %v3257, %v3253
        %v3994 = vpack.c.b16 %v3258, %v3254
        %v3995 = vpack.c.b16 %v3263, %v3259
        %v3996 = vpack.c.b16 %v3264, %v3260
        %v3997 = vpack.c.b16 %v3265, %v3261
        %v3998 = vpack.c.b16 %v3266, %v3262
        %v3999 = vpack.c.b16 %v3271, %v3267
        %v4000 = vpack.c.b16 %v3272, %v3268
        %v4001 = vpack.c.b16 %v3273, %v3269
        %v4002 = vpack.c.b16 %v3274, %v3270
        %v4003 = vpack.c.b16 %v3279, %v3275
        %v4004 = vpack.c.b16 %v3280, %v3276
        %v4005 = vpack.c.b16 %v3281, %v3277
        %v4006 = vpack.c.b16 %v3282, %v3278
        %v4007 = vpack.c.b16 %v3287, %v3283
        %v4008 = vpack.c.b16 %v3288, %v3284
        %v4009 = vpack.c.b16 %v3289, %v3285
        %v4010 = vpack.c.b16 %v3290, %v3286
        %v4011 = vpack.c.b16 %v3295, %v3291
        %v4012 = vpack.c.b16 %v3296, %v3292
        %v4013 = vpack.c.b16 %v3297, %v3293
        %v4014 = vpack.c.b16 %v3298, %v3294
        %v4015 = vpack.c.b16 %v3303, %v3299
        %v4016 = vpack.c.b16 %v3304, %v3300
        %v4017 = vpack.c.b16 %v3305, %v3301
        %v4018 = vpack.c.b16 %v3306, %v3302
        %v4019 = vpack.c.b16 %v3311, %v3307
        %v4020 = vpack.c.b16 %v3312, %v3308
        %v4021 = vpack.c.b16 %v3313, %v3309
        %v4022 = vpack.c.b16 %v3314, %v3310
        %v4023 = vpack.c.b16 %v3319, %v3315
        %v4024 = vpack.c.b16 %v3320, %v3316
        %v4025 = vpack.c.b16 %v3321, %v3317
        %v4026 = vpack.c.b16 %v3322, %v3318
        %v4027 = vpack.c.b16 %v3327, %v3323
        %v4028 = vpack.c.b16 %v3328, %v3324
        %v4029 = vpack.c.b16 %v3329, %v3325
        %v4030 = vpack.c.b16 %v3330, %v3326
        %v4031 = vpack.c.b16 %v3335, %v3331
        %v4032 = vpack.c.b16 %v3336, %v3332
        %v4033 = vpack.c.b16 %v3337, %v3333
        %v4034 = vpack.c.b16 %v3338, %v3334
        %v4035 = vpack.c.b16 %v3343, %v3339
        %v4036 = vpack.c.b16 %v3344, %v3340
        %v4037 = vpack.c.b16 %v3345, %v3341
        %v4038 = vpack.c.b16 %v3346, %v3342
        %v4039 = vpack.c.b16 %v3351, %v3347
        %v4040 = vpack.c.b16 %v3352, %v3348
        %v4041 = vpack.c.b16 %v3353, %v3349
        %v4042 = vpack.c.b16 %v3354, %v3350
        %v4043 = vpack.c.b16 %v3359, %v3355
        %v4044 = vpack.c.b16 %v3360, %v3356
        %v4045 = vpack.c.b16 %v3361, %v3357
        %v4046 = vpack.c.b16 %v3362, %v3358
        %v4047 = vpack.c.b16 %v3367, %v3363
        %v4048 = vpack.c.b16 %v3368, %v3364
        %v4049 = vpack.c.b16 %v3369, %v3365
        %v4050 = vpack.c.b16 %v3370, %v3366
        %v4051 = vpack.c.b16 %v3375, %v3371
        %v4052 = vpack.c.b16 %v3376, %v3372
        %v4053 = vpack.c.b16 %v3377, %v3373
        %v4054 = vpack.c.b16 %v3378, %v3374
        %v4055 = vpack.c.b16 %v3383, %v3379
        %v4056 = vpack.c.b16 %v3384, %v3380
        %v4057 = vpack.c.b16 %v3385, %v3381
        %v4058 = vpack.c.b16 %v3386, %v3382
        %v4059 = vpack.c.b16 %v3391, %v3387
        %v4060 = vpack.c.b16 %v3392, %v3388
        %v4061 = vpack.c.b16 %v3393, %v3389
        %v4062 = vpack.c.b16 %v3394, %v3390
        %v4063 = vpack.c.b16 %v3399, %v3395
        %v4064 = vpack.c.b16 %v3400, %v3396
        %v4065 = vpack.c.b16 %v3401, %v3397
        %v4066 = vpack.c.b16 %v3402, %v3398
        %v4067 = vpack.c.b16 %v3407, %v3403
        %v4068 = vpack.c.b16 %v3408, %v3404
        %v4069 = vpack.c.b16 %v3409, %v3405
        %v4070 = vpack.c.b16 %v3410, %v3406
        %v4071 = vpack.c.b16 %v3415, %v3411
        %v4072 = vpack.c.b16 %v3416, %v3412
        %v4073 = vpack.c.b16 %v3417, %v3413
        %v4074 = vpack.c.b16 %v3418, %v3414
        %v4075 = vpack.c.b16 %v3423, %v3419
        %v4076 = vpack.c.b16 %v3424, %v3420
        %v4077 = vpack.c.b16 %v3425, %v3421
        %v4078 = vpack.c.b16 %v3426, %v3422
        %v4079 = vpack.c.b16 %v3431, %v3427
        %v4080 = vpack.c.b16 %v3432, %v3428
        %v4081 = vpack.c.b16 %v3433, %v3429
        %v4082 = vpack.c.b16 %v3434, %v3430
        %v4083 = vpack.c.b16 %v3439, %v3435
        %v4084 = vpack.c.b16 %v3440, %v3436
        %v4085 = vpack.c.b16 %v3441, %v3437
        %v4086 = vpack.c.b16 %v3442, %v3438
        %v4087 = vpack.c.b16 %v3447, %v3443
        %v4088 = vpack.c.b16 %v3448, %v3444
        %v4089 = vpack.c.b16 %v3449, %v3445
        %v4090 = vpack.c.b16 %v3450, %v3446
        %v4091 = vpack.c.b16 %v3455, %v3451
        %v4092 = vpack.c.b16 %v3456, %v3452
        %v4093 = vpack.c.b16 %v3457, %v3453
        %v4094 = vpack.c.b16 %v3458, %v3454
        %v4095 = vpack.c.b16 %v3463, %v3459
        %v4096 = vpack.c.b16 %v3464, %v3460
        %v4097 = vpack.c.b16 %v3465, %v3461
        %v4098 = vpack.c.b16 %v3466, %v3462
        %v4099 = vpack.c.b16 %v3471, %v3467
        %v4100 = vpack.c.b16 %v3472, %v3468
        %v4101 = vpack.c.b16 %v3473, %v3469
        %v4102 = vpack.c.b16 %v3474, %v3470
        %v4103 = vpack.c.b16 %v3479, %v3475
        %v4104 = vpack.c.b16 %v3480, %v3476
        %v4105 = vpack.c.b16 %v3481, %v3477
        %v4106 = vpack.c.b16 %v3482, %v3478
        %v4107 = vpack.c.b16 %v3487, %v3483
        %v4108 = vpack.c.b16 %v3488, %v3484
        %v4109 = vpack.c.b16 %v3489, %v3485
        %v4110 = vpack.c.b16 %v3490, %v3486
        %v4111 = vpack.c.b16 %v3495, %v3491
        %v4112 = vpack.c.b16 %v3496, %v3492
        %v4113 = vpack.c.b16 %v3497, %v3493
        %v4114 = vpack.c.b16 %v3498, %v3494
        %v4115 = vpack.c.b16 %v3503, %v3499
        %v4116 = vpack.c.b16 %v3504, %v3500
        %v4117 = vpack.c.b16 %v3505, %v3501
        %v4118 = vpack.c.b16 %v3506, %v3502
        %v4119 = vpack.c.b16 %v3511, %v3507
        %v4120 = vpack.c.b16 %v3512, %v3508
        %v4121 = vpack.c.b16 %v3513, %v3509
        %v4122 = vpack.c.b16 %v3514, %v3510
        %v4123 = vpack.c.b16 %v3519, %v3515
        %v4124 = vpack.c.b16 %v3520, %v3516
        %v4125 = vpack.c.b16 %v3521, %v3517
        %v4126 = vpack.c.b16 %v3522, %v3518
        %v4127 = vpack.c.b16 %v3527, %v3523
        %v4128 = vpack.c.b16 %v3528, %v3524
        %v4129 = vpack.c.b16 %v3529, %v3525
        %v4130 = vpack.c.b16 %v3530, %v3526
        %v4131 = vpack.c.b16 %v3535, %v3531
        %v4132 = vpack.c.b16 %v3536, %v3532
        %v4133 = vpack.c.b16 %v3537, %v3533
        %v4134 = vpack.c.b16 %v3538, %v3534
        %v4135 = vpack.c.b16 %v3543, %v3539
        %v4136 = vpack.c.b16 %v3544, %v3540
        %v4137 = vpack.c.b16 %v3545, %v3541
        %v4138 = vpack.c.b16 %v3546, %v3542
        %v4139 = vpack.c.b16 %v3551, %v3547
        %v4140 = vpack.c.b16 %v3552, %v3548
        %v4141 = vpack.c.b16 %v3553, %v3549
        %v4142 = vpack.c.b16 %v3554, %v3550
        %v4143 = vpack.c.b16 %v3559, %v3555
        %v4144 = vpack.c.b16 %v3560, %v3556
        %v4145 = vpack.c.b16 %v3561, %v3557
        %v4146 = vpack.c.b16 %v3562, %v3558
        %v4147 = vpack.c.b16 %v3567, %v3563
        %v4148 = vpack.c.b16 %v3568, %v3564
        %v4149 = vpack.c.b16 %v3569, %v3565
        %v4150 = vpack.c.b16 %v3570, %v3566
        %v4151 = vpack.c.b16 %v3575, %v3571
        %v4152 = vpack.c.b16 %v3576, %v3572
        %v4153 = vpack.c.b16 %v3577, %v3573
        %v4154 = vpack.c.b16 %v3578, %v3574
        %v4155 = vpack.c.b16 %v3583, %v3579
        %v4156 = vpack.c.b16 %v3584, %v3580
        %v4157 = vpack.c.b16 %v3585, %v3581
        %v4158 = vpack.c.b16 %v3586, %v3582
        %v4159 = vpack.c.b16 %v3591, %v3587
        %v4160 = vpack.c.b16 %v3592, %v3588
        %v4161 = vpack.c.b16 %v3593, %v3589
        %v4162 = vpack.c.b16 %v3594, %v3590
        %v4163 = vpack.c.b16 %v3599, %v3595
        %v4164 = vpack.c.b16 %v3600, %v3596
        %v4165 = vpack.c.b16 %v3601, %v3597
        %v4166 = vpack.c.b16 %v3602, %v3598
        %v4167 = vpack.c.b16 %v3607, %v3603
        %v4168 = vpack.c.b16 %v3608, %v3604
        %v4169 = vpack.c.b16 %v3609, %v3605
        %v4170 = vpack.c.b16 %v3610, %v3606
        %v4171 = vpack.c.b16 %v3615, %v3611
        %v4172 = vpack.c.b16 %v3616, %v3612
        %v4173 = vpack.c.b16 %v3617, %v3613
        %v4174 = vpack.c.b16 %v3618, %v3614
        %v4175 = vpack.c.b16 %v3623, %v3619
        %v4176 = vpack.c.b16 %v3624, %v3620
        %v4177 = vpack.c.b16 %v3625, %v3621
        %v4178 = vpack.c.b16 %v3626, %v3622
        %v4179 = vpack.c.b16 %v3631, %v3627
        %v4180 = vpack.c.b16 %v3632, %v3628
        %v4181 = vpack.c.b16 %v3633, %v3629
        %v4182 = vpack.c.b16 %v3634, %v3630
        %v4183 = vpack.c.b16 %v3639, %v3635
        %v4184 = vpack.c.b16 %v3640, %v3636
        %v4185 = vpack.c.b16 %v3641, %v3637
        %v4186 = vpack.c.b16 %v3642, %v3638
        %v4187 = vpack.c.b16 %v3647, %v3643
        %v4188 = vpack.c.b16 %v3648, %v3644
        %v4189 = vpack.c.b16 %v3649, %v3645
        %v4190 = vpack.c.b16 %v3650, %v3646
        %v4191 = vpack.c.b16 %v3655, %v3651
        %v4192 = vpack.c.b16 %v3656, %v3652
        %v4193 = vpack.c.b16 %v3657, %v3653
        %v4194 = vpack.c.b16 %v3658, %v3654
        %v4195 = vpack.c.b16 %v3663, %v3659
        %v4196 = vpack.c.b16 %v3664, %v3660
        %v4197 = vpack.c.b16 %v3665, %v3661
        %v4198 = vpack.c.b16 %v3666, %v3662
        %v4199 = vpack.c.b16 %v3671, %v3667
        %v4200 = vpack.c.b16 %v3672, %v3668
        %v4201 = vpack.c.b16 %v3673, %v3669
        %v4202 = vpack.c.b16 %v3674, %v3670
        %v4203 = vpack.c.b16 %v3679, %v3675
        %v4204 = vpack.c.b16 %v3680, %v3676
        %v4205 = vpack.c.b16 %v3681, %v3677
        %v4206 = vpack.c.b16 %v3682, %v3678
        %v4207 = vpack.c.b16 %v3687, %v3683
        %v4208 = vpack.c.b16 %v3688, %v3684
        %v4209 = vpack.c.b16 %v3689, %v3685
        %v4210 = vpack.c.b16 %v3690, %v3686
        %v4211 = vpack.c.b16 %v3695, %v3691
        %v4212 = vpack.c.b16 %v3696, %v3692
        %v4213 = vpack.c.b16 %v3697, %v3693
        %v4214 = vpack.c.b16 %v3698, %v3694
        %v4215 = vpack.c.b16 %v3703, %v3699
        %v4216 = vpack.c.b16 %v3704, %v3700
        %v4217 = vpack.c.b16 %v3705, %v3701
        %v4218 = vpack.c.b16 %v3706, %v3702
        %v4219 = vpack.c.b16 %v3711, %v3707
        %v4220 = vpack.c.b16 %v3712, %v3708
        %v4221 = vpack.c.b16 %v3713, %v3709
        %v4222 = vpack.c.b16 %v3714, %v3710
        %v4223 = vpack.c.b16 %v3719, %v3715
        %v4224 = vpack.c.b16 %v3720, %v3716
        %v4225 = vpack.c.b16 %v3721, %v3717
        %v4226 = vpack.c.b16 %v3722, %v3718
        %v4227 = vpack.c.b16 %v3727, %v3723
        %v4228 = vpack.c.b16 %v3728, %v3724
        %v4229 = vpack.c.b16 %v3729, %v3725
        %v4230 = vpack.c.b16 %v3730, %v3726
        %v4231 = vpack.c.b16 %v3735, %v3731
        %v4232 = vpack.c.b16 %v3736, %v3732
        %v4233 = vpack.c.b16 %v3737, %v3733
        %v4234 = vpack.c.b16 %v3738, %v3734
        %v4235 = vpack.c.b16 %v3743, %v3739
        %v4236 = vpack.c.b16 %v3744, %v3740
        %v4237 = vpack.c.b16 %v3745, %v3741
        %v4238 = vpack.c.b16 %v3746, %v3742
        %v4239 = vpack.c.b16 %v3751, %v3747
        %v4240 = vpack.c.b16 %v3752, %v3748
        %v4241 = vpack.c.b16 %v3753, %v3749
        %v4242 = vpack.c.b16 %v3754, %v3750
        %v4243 = vpack.c.b16 %v3759, %v3755
        %v4244 = vpack.c.b16 %v3760, %v3756
        %v4245 = vpack.c.b16 %v3761, %v3757
        %v4246 = vpack.c.b16 %v3762, %v3758
        %v4247 = vpack.c.b16 %v3767, %v3763
        %v4248 = vpack.c.b16 %v3768, %v3764
        %v4249 = vpack.c.b16 %v3769, %v3765
        %v4250 = vpack.c.b16 %v3770, %v3766
        %v4251 = vpack.c.b16 %v3775, %v3771
        %v4252 = vpack.c.b16 %v3776, %v3772
        %v4253 = vpack.c.b16 %v3777, %v3773
        %v4254 = vpack.c.b16 %v3778, %v3774
        %v4255 = vpack.c.b16 %v3783, %v3779
        %v4256 = vpack.c.b16 %v3784, %v3780
        %v4257 = vpack.c.b16 %v3785, %v3781
        %v4258 = vpack.c.b16 %v3786, %v3782
        %v4259 = vpack.c.b16 %v3791, %v3787
        %v4260 = vpack.c.b16 %v3792, %v3788
        %v4261 = vpack.c.b16 %v3793, %v3789
        %v4262 = vpack.c.b16 %v3794, %v3790
        %v4263 = vpack.c.b16 %v3799, %v3795
        %v4264 = vpack.c.b16 %v3800, %v3796
        %v4265 = vpack.c.b16 %v3801, %v3797
        %v4266 = vpack.c.b16 %v3802, %v3798
        %v4267 = vpack.c.b16 %v3807, %v3803
        %v4268 = vpack.c.b16 %v3808, %v3804
        %v4269 = vpack.c.b16 %v3809, %v3805
        %v4270 = vpack.c.b16 %v3810, %v3806
        %v4271 = vpack.c.b16 %v3815, %v3811
        %v4272 = vpack.c.b16 %v3816, %v3812
        %v4273 = vpack.c.b16 %v3817, %v3813
        %v4274 = vpack.c.b16 %v3818, %v3814
        %v4275 = vpack.c.b16 %v3823, %v3819
        %v4276 = vpack.c.b16 %v3824, %v3820
        %v4277 = vpack.c.b16 %v3825, %v3821
        %v4278 = vpack.c.b16 %v3826, %v3822
        %v4279 = vpack.c.b16 %v3827, %v3827
        %v4280 = vpack.c.b16 %v3828, %v3828
        %v4281 = vpack.c.b16 %v3829, %v3829
        %v4282 = vpack.c.b16 %v3830, %v3830
        %v4732 = vlaneseq
        %v4733 = vshrl.u32 %v4732, 7
        %v4734 = vsub.s32 0, %v4733
        %v4735 = vrot.slane %v2480, %v4734
        %v4736 = vlaneseq
        %v4737 = vshrl.u32 %v4736, 7
        %v4738 = vsub.s32 1, %v4737
        %v4739 = vrot.slane %v2480, %v4738
        %v4740 = vlaneseq
        %v4741 = vshrl.u32 %v4740, 7
        %v4742 = vsub.s32 2, %v4741
        %v4743 = vrot.slane %v2480, %v4742
        %v4744 = vlaneseq
        %v4745 = vshrl.u32 %v4744, 7
        %v4746 = vsub.s32 3, %v4745
        %v4747 = vrot.slane %v2480, %v4746
        %vm4752 = vcmask 64512
        %v4754 = vsel %vm4752, %v2029, 0
        %vm4756 = vcmask 1043456
        %v4758 = vsel %vm4756, %v4279, 0
        %v4761 = vsel %vm4756, %v4280, 0
        %v4764 = vsel %vm4756, %v4281, 0
        %v4767 = vsel %vm4756, %v4282, 0
        %4769 = vmatprep.subr.bf16.mxu0 %v3860
        %4770 = vmatpush1.bf16.msra.mxu0 %v3859
        %4771 = vmatprep.subr.bf16.mxu0 %v3856
        %4772 = vmatpush1.bf16.msra.mxu0 %v3855
        %4773 = vmatprep.subr.bf16.mxu0 %v3852
        %4774 = vmatpush1.bf16.msra.mxu0 %v3851
        %4775 = vmatprep.subr.bf16.mxu0 %v3848
        %4776 = vmatpush1.bf16.msra.mxu0 %v3847
        %4777 = vmatprep.subr.bf16.mxu0 %v3844
        %4778 = vmatpush1.bf16.msra.mxu0 %v3843
        %4779 = vmatprep.subr.bf16.mxu0 %v3840
        %4780 = vmatpush1.bf16.msra.mxu0 %v3839
        %4781 = vmatprep.subr.bf16.mxu0 %v3836
        %4782 = vmatpush1.bf16.msra.mxu0 %v3835
        %4783 = vmatprep.subr.bf16.mxu0 %v3832
        %4784 = vmatpush1.bf16.msra.mxu0 %v3831
        %4785 = vmatprep.subr.bf16.mxu0 %v3892
        %4786 = vmatpush2.bf16.msra.mxu0 %v3891
        %4787 = vmatprep.subr.bf16.mxu0 %v3888
        %4788 = vmatpush2.bf16.msra.mxu0 %v3887
        %4789 = vmatprep.subr.bf16.mxu0 %v3884
        %4790 = vmatpush2.bf16.msra.mxu0 %v3883
        %4791 = vmatprep.subr.bf16.mxu0 %v3880
        %4792 = vmatpush2.bf16.msra.mxu0 %v3879
        %4793 = vmatprep.subr.bf16.mxu0 %v3876
        %4794 = vmatpush2.bf16.msra.mxu0 %v3875
        %4795 = vmatprep.subr.bf16.mxu0 %v3872
        %4796 = vmatpush2.bf16.msra.mxu0 %v3871
        %4797 = vmatprep.subr.bf16.mxu0 %v3868
        %4798 = vmatpush2.bf16.msra.mxu0 %v3867
        %4799 = vmatprep.subr.bf16.mxu0 %v3864
        %4800 = vmatpush2.bf16.msra.mxu0 %v3863
        %4801 = vmatprep.mubr.bf16.mxu0 %v2016
        %4802 = vmatmul.mubr.bf16.gmra.mxu0 %v2015
        %v4803 = vpop.f32.mrf.mxu0
        %v4804 = vadd.f32 %v4735, %v4803
        %v4805 = vpop.f32.mrf.mxu0
        %v4806 = vadd.f32 %v4739, %v4805
        %v4807 = vpop.f32.mrf.mxu0
        %v4808 = vpop.f32.mrf.mxu0
        %4809 = vdwg.mxu0
        %4810 = vmatprep.subr.bf16.mxu0 %v3924
        %4811 = vmatpush1.bf16.msra.mxu0 %v3923
        %4812 = vmatprep.subr.bf16.mxu0 %v3920
        %4813 = vmatpush1.bf16.msra.mxu0 %v3919
        %4814 = vmatprep.subr.bf16.mxu0 %v3916
        %4815 = vmatpush1.bf16.msra.mxu0 %v3915
        %4816 = vmatprep.subr.bf16.mxu0 %v3912
        %4817 = vmatpush1.bf16.msra.mxu0 %v3911
        %4818 = vmatprep.subr.bf16.mxu0 %v3908
        %4819 = vmatpush1.bf16.msra.mxu0 %v3907
        %4820 = vmatprep.subr.bf16.mxu0 %v3904
        %4821 = vmatpush1.bf16.msra.mxu0 %v3903
        %4822 = vmatprep.subr.bf16.mxu0 %v3900
        %4823 = vmatpush1.bf16.msra.mxu0 %v3899
        %4824 = vmatprep.subr.bf16.mxu0 %v3896
        %4825 = vmatpush1.bf16.msra.mxu0 %v3895
        %4826 = vmatprep.subr.bf16.mxu0 %v3956
        %4827 = vmatpush2.bf16.msra.mxu0 %v3955
        %4828 = vmatprep.subr.bf16.mxu0 %v3952
        %4829 = vmatpush2.bf16.msra.mxu0 %v3951
        %4830 = vmatprep.subr.bf16.mxu0 %v3948
        %4831 = vmatpush2.bf16.msra.mxu0 %v3947
        %4832 = vmatprep.subr.bf16.mxu0 %v3944
        %4833 = vmatpush2.bf16.msra.mxu0 %v3943
        %4834 = vmatprep.subr.bf16.mxu0 %v3940
        %4835 = vmatpush2.bf16.msra.mxu0 %v3939
        %4836 = vmatprep.subr.bf16.mxu0 %v3936
        %4837 = vmatpush2.bf16.msra.mxu0 %v3935
        %4838 = vmatprep.subr.bf16.mxu0 %v3932
        %4839 = vmatpush2.bf16.msra.mxu0 %v3931
        %4840 = vmatprep.subr.bf16.mxu0 %v3928
        %4841 = vmatpush2.bf16.msra.mxu0 %v3927
        %4842 = vmatprep.mubr.bf16.mxu0 %v2018
        %4843 = vmatmul.mubr.bf16.gmra.mxu0 %v2017
        %v4844 = vpop.f32.mrf.mxu0
        %v4845 = vadd.f32 %v4804, %v4844
        %v4846 = vpop.f32.mrf.mxu0
        %v4847 = vadd.f32 %v4806, %v4846
        %v4848 = vpop.f32.mrf.mxu0
        %v4849 = vpop.f32.mrf.mxu0
        %4850 = vdwg.mxu0
        %4851 = vmatprep.subr.bf16.mxu0 %v3988
        %4852 = vmatpush1.bf16.msra.mxu0 %v3987
        %4853 = vmatprep.subr.bf16.mxu0 %v3984
        %4854 = vmatpush1.bf16.msra.mxu0 %v3983
        %4855 = vmatprep.subr.bf16.mxu0 %v3980
        %4856 = vmatpush1.bf16.msra.mxu0 %v3979
        %4857 = vmatprep.subr.bf16.mxu0 %v3976
        %4858 = vmatpush1.bf16.msra.mxu0 %v3975
        %4859 = vmatprep.subr.bf16.mxu0 %v3972
        %4860 = vmatpush1.bf16.msra.mxu0 %v3971
        %4861 = vmatprep.subr.bf16.mxu0 %v3968
        %4862 = vmatpush1.bf16.msra.mxu0 %v3967
        %4863 = vmatprep.subr.bf16.mxu0 %v3964
        %4864 = vmatpush1.bf16.msra.mxu0 %v3963
        %4865 = vmatprep.subr.bf16.mxu0 %v3960
        %4866 = vmatpush1.bf16.msra.mxu0 %v3959
        %4867 = vmatprep.subr.bf16.mxu0 %v4020
        %4868 = vmatpush2.bf16.msra.mxu0 %v4019
        %4869 = vmatprep.subr.bf16.mxu0 %v4016
        %4870 = vmatpush2.bf16.msra.mxu0 %v4015
        %4871 = vmatprep.subr.bf16.mxu0 %v4012
        %4872 = vmatpush2.bf16.msra.mxu0 %v4011
        %4873 = vmatprep.subr.bf16.mxu0 %v4008
        %4874 = vmatpush2.bf16.msra.mxu0 %v4007
        %4875 = vmatprep.subr.bf16.mxu0 %v4004
        %4876 = vmatpush2.bf16.msra.mxu0 %v4003
        %4877 = vmatprep.subr.bf16.mxu0 %v4000
        %4878 = vmatpush2.bf16.msra.mxu0 %v3999
        %4879 = vmatprep.subr.bf16.mxu0 %v3996
        %4880 = vmatpush2.bf16.msra.mxu0 %v3995
        %4881 = vmatprep.subr.bf16.mxu0 %v3992
        %4882 = vmatpush2.bf16.msra.mxu0 %v3991
        %4883 = vmatprep.mubr.bf16.mxu0 %v2020
        %4884 = vmatmul.mubr.bf16.gmra.mxu0 %v2019
        %v4885 = vpop.f32.mrf.mxu0
        %v4886 = vadd.f32 %v4845, %v4885
        %v4887 = vpop.f32.mrf.mxu0
        %v4888 = vadd.f32 %v4847, %v4887
        %v4889 = vpop.f32.mrf.mxu0
        %v4890 = vpop.f32.mrf.mxu0
        %4891 = vdwg.mxu0
        %4892 = vmatprep.subr.bf16.mxu0 %v4052
        %4893 = vmatpush1.bf16.msra.mxu0 %v4051
        %4894 = vmatprep.subr.bf16.mxu0 %v4048
        %4895 = vmatpush1.bf16.msra.mxu0 %v4047
        %4896 = vmatprep.subr.bf16.mxu0 %v4044
        %4897 = vmatpush1.bf16.msra.mxu0 %v4043
        %4898 = vmatprep.subr.bf16.mxu0 %v4040
        %4899 = vmatpush1.bf16.msra.mxu0 %v4039
        %4900 = vmatprep.subr.bf16.mxu0 %v4036
        %4901 = vmatpush1.bf16.msra.mxu0 %v4035
        %4902 = vmatprep.subr.bf16.mxu0 %v4032
        %4903 = vmatpush1.bf16.msra.mxu0 %v4031
        %4904 = vmatprep.subr.bf16.mxu0 %v4028
        %4905 = vmatpush1.bf16.msra.mxu0 %v4027
        %4906 = vmatprep.subr.bf16.mxu0 %v4024
        %4907 = vmatpush1.bf16.msra.mxu0 %v4023
        %4908 = vmatprep.subr.bf16.mxu0 %v4084
        %4909 = vmatpush2.bf16.msra.mxu0 %v4083
        %4910 = vmatprep.subr.bf16.mxu0 %v4080
        %4911 = vmatpush2.bf16.msra.mxu0 %v4079
        %4912 = vmatprep.subr.bf16.mxu0 %v4076
        %4913 = vmatpush2.bf16.msra.mxu0 %v4075
        %4914 = vmatprep.subr.bf16.mxu0 %v4072
        %4915 = vmatpush2.bf16.msra.mxu0 %v4071
        %4916 = vmatprep.subr.bf16.mxu0 %v4068
        %4917 = vmatpush2.bf16.msra.mxu0 %v4067
        %4918 = vmatprep.subr.bf16.mxu0 %v4064
        %4919 = vmatpush2.bf16.msra.mxu0 %v4063
        %4920 = vmatprep.subr.bf16.mxu0 %v4060
        %4921 = vmatpush2.bf16.msra.mxu0 %v4059
        %4922 = vmatprep.subr.bf16.mxu0 %v4056
        %4923 = vmatpush2.bf16.msra.mxu0 %v4055
        %4924 = vmatprep.mubr.bf16.mxu0 %v2022
        %4925 = vmatmul.mubr.bf16.gmra.mxu0 %v2021
        %v4926 = vpop.f32.mrf.mxu0
        %v4927 = vadd.f32 %v4886, %v4926
        %v4928 = vpop.f32.mrf.mxu0
        %v4929 = vadd.f32 %v4888, %v4928
        %v4930 = vpop.f32.mrf.mxu0
        %v4931 = vpop.f32.mrf.mxu0
        %4932 = vdwg.mxu0
        %4933 = vmatprep.subr.bf16.mxu0 %v4116
        %4934 = vmatpush1.bf16.msra.mxu0 %v4115
        %4935 = vmatprep.subr.bf16.mxu0 %v4112
        %4936 = vmatpush1.bf16.msra.mxu0 %v4111
        %4937 = vmatprep.subr.bf16.mxu0 %v4108
        %4938 = vmatpush1.bf16.msra.mxu0 %v4107
        %4939 = vmatprep.subr.bf16.mxu0 %v4104
        %4940 = vmatpush1.bf16.msra.mxu0 %v4103
        %4941 = vmatprep.subr.bf16.mxu0 %v4100
        %4942 = vmatpush1.bf16.msra.mxu0 %v4099
        %4943 = vmatprep.subr.bf16.mxu0 %v4096
        %4944 = vmatpush1.bf16.msra.mxu0 %v4095
        %4945 = vmatprep.subr.bf16.mxu0 %v4092
        %4946 = vmatpush1.bf16.msra.mxu0 %v4091
        %4947 = vmatprep.subr.bf16.mxu0 %v4088
        %4948 = vmatpush1.bf16.msra.mxu0 %v4087
        %4949 = vmatprep.subr.bf16.mxu0 %v4148
        %4950 = vmatpush2.bf16.msra.mxu0 %v4147
        %4951 = vmatprep.subr.bf16.mxu0 %v4144
        %4952 = vmatpush2.bf16.msra.mxu0 %v4143
        %4953 = vmatprep.subr.bf16.mxu0 %v4140
        %4954 = vmatpush2.bf16.msra.mxu0 %v4139
        %4955 = vmatprep.subr.bf16.mxu0 %v4136
        %4956 = vmatpush2.bf16.msra.mxu0 %v4135
        %4957 = vmatprep.subr.bf16.mxu0 %v4132
        %4958 = vmatpush2.bf16.msra.mxu0 %v4131
        %4959 = vmatprep.subr.bf16.mxu0 %v4128
        %4960 = vmatpush2.bf16.msra.mxu0 %v4127
        %4961 = vmatprep.subr.bf16.mxu0 %v4124
        %4962 = vmatpush2.bf16.msra.mxu0 %v4123
        %4963 = vmatprep.subr.bf16.mxu0 %v4120
        %4964 = vmatpush2.bf16.msra.mxu0 %v4119
        %4965 = vmatprep.mubr.bf16.mxu0 %v2024
        %4966 = vmatmul.mubr.bf16.gmra.mxu0 %v2023
        %v4967 = vpop.f32.mrf.mxu0
        %v4968 = vadd.f32 %v4927, %v4967
        %v4969 = vpop.f32.mrf.mxu0
        %v4970 = vadd.f32 %v4929, %v4969
        %v4971 = vpop.f32.mrf.mxu0
        %v4972 = vpop.f32.mrf.mxu0
        %4973 = vdwg.mxu0
        %4974 = vmatprep.subr.bf16.mxu0 %v4180
        %4975 = vmatpush1.bf16.msra.mxu0 %v4179
        %4976 = vmatprep.subr.bf16.mxu0 %v4176
        %4977 = vmatpush1.bf16.msra.mxu0 %v4175
        %4978 = vmatprep.subr.bf16.mxu0 %v4172
        %4979 = vmatpush1.bf16.msra.mxu0 %v4171
        %4980 = vmatprep.subr.bf16.mxu0 %v4168
        %4981 = vmatpush1.bf16.msra.mxu0 %v4167
        %4982 = vmatprep.subr.bf16.mxu0 %v4164
        %4983 = vmatpush1.bf16.msra.mxu0 %v4163
        %4984 = vmatprep.subr.bf16.mxu0 %v4160
        %4985 = vmatpush1.bf16.msra.mxu0 %v4159
        %4986 = vmatprep.subr.bf16.mxu0 %v4156
        %4987 = vmatpush1.bf16.msra.mxu0 %v4155
        %4988 = vmatprep.subr.bf16.mxu0 %v4152
        %4989 = vmatpush1.bf16.msra.mxu0 %v4151
        %4990 = vmatprep.subr.bf16.mxu0 %v4212
        %4991 = vmatpush2.bf16.msra.mxu0 %v4211
        %4992 = vmatprep.subr.bf16.mxu0 %v4208
        %4993 = vmatpush2.bf16.msra.mxu0 %v4207
        %4994 = vmatprep.subr.bf16.mxu0 %v4204
        %4995 = vmatpush2.bf16.msra.mxu0 %v4203
        %4996 = vmatprep.subr.bf16.mxu0 %v4200
        %4997 = vmatpush2.bf16.msra.mxu0 %v4199
        %4998 = vmatprep.subr.bf16.mxu0 %v4196
        %4999 = vmatpush2.bf16.msra.mxu0 %v4195
        %5000 = vmatprep.subr.bf16.mxu0 %v4192
        %5001 = vmatpush2.bf16.msra.mxu0 %v4191
        %5002 = vmatprep.subr.bf16.mxu0 %v4188
        %5003 = vmatpush2.bf16.msra.mxu0 %v4187
        %5004 = vmatprep.subr.bf16.mxu0 %v4184
        %5005 = vmatpush2.bf16.msra.mxu0 %v4183
        %5006 = vmatprep.mubr.bf16.mxu0 %v2026
        %5007 = vmatmul.mubr.bf16.gmra.mxu0 %v2025
        %v5008 = vpop.f32.mrf.mxu0
        %v5009 = vadd.f32 %v4968, %v5008
        %v5010 = vpop.f32.mrf.mxu0
        %v5011 = vadd.f32 %v4970, %v5010
        %v5012 = vpop.f32.mrf.mxu0
        %v5013 = vpop.f32.mrf.mxu0
        %5014 = vdwg.mxu0
        %5015 = vmatprep.subr.bf16.mxu0 %v4244
        %5016 = vmatpush1.bf16.msra.mxu0 %v4243
        %5017 = vmatprep.subr.bf16.mxu0 %v4240
        %5018 = vmatpush1.bf16.msra.mxu0 %v4239
        %5019 = vmatprep.subr.bf16.mxu0 %v4236
        %5020 = vmatpush1.bf16.msra.mxu0 %v4235
        %5021 = vmatprep.subr.bf16.mxu0 %v4232
        %5022 = vmatpush1.bf16.msra.mxu0 %v4231
        %5023 = vmatprep.subr.bf16.mxu0 %v4228
        %5024 = vmatpush1.bf16.msra.mxu0 %v4227
        %5025 = vmatprep.subr.bf16.mxu0 %v4224
        %5026 = vmatpush1.bf16.msra.mxu0 %v4223
        %5027 = vmatprep.subr.bf16.mxu0 %v4220
        %5028 = vmatpush1.bf16.msra.mxu0 %v4219
        %5029 = vmatprep.subr.bf16.mxu0 %v4216
        %5030 = vmatpush1.bf16.msra.mxu0 %v4215
        %5031 = vmatprep.subr.bf16.mxu0 %v4276
        %5032 = vmatpush2.bf16.msra.mxu0 %v4275
        %5033 = vmatprep.subr.bf16.mxu0 %v4272
        %5034 = vmatpush2.bf16.msra.mxu0 %v4271
        %5035 = vmatprep.subr.bf16.mxu0 %v4268
        %5036 = vmatpush2.bf16.msra.mxu0 %v4267
        %5037 = vmatprep.subr.bf16.mxu0 %v4264
        %5038 = vmatpush2.bf16.msra.mxu0 %v4263
        %5039 = vmatprep.subr.bf16.mxu0 %v4260
        %5040 = vmatpush2.bf16.msra.mxu0 %v4259
        %5041 = vmatprep.subr.bf16.mxu0 %v4256
        %5042 = vmatpush2.bf16.msra.mxu0 %v4255
        %5043 = vmatprep.subr.bf16.mxu0 %v4252
        %5044 = vmatpush2.bf16.msra.mxu0 %v4251
        %5045 = vmatprep.subr.bf16.mxu0 %v4248
        %5046 = vmatpush2.bf16.msra.mxu0 %v4247
        %5047 = vmatprep.mubr.bf16.mxu0 %v2028
        %5048 = vmatmul.mubr.bf16.gmra.mxu0 %v2027
        %v5049 = vpop.f32.mrf.mxu0
        %v5050 = vadd.f32 %v5009, %v5049
        %v5051 = vpop.f32.mrf.mxu0
        %v5052 = vadd.f32 %v5011, %v5051
        %v5053 = vpop.f32.mrf.mxu0
        %v5054 = vpop.f32.mrf.mxu0
        %5055 = vdwg.mxu0
        %5056 = vmatprep.subr.bf16.mxu0 0
        %5057 = vmatpush1.bf16.msra.mxu0 0
        %5058 = vmatprep.subr.bf16.mxu0 0
        %5059 = vmatpush1.bf16.msra.mxu0 0
        %5060 = vmatprep.subr.bf16.mxu0 0
        %5061 = vmatpush1.bf16.msra.mxu0 0
        %5062 = vmatprep.subr.bf16.mxu0 0
        %5063 = vmatpush1.bf16.msra.mxu0 0
        %5064 = vmatprep.subr.bf16.mxu0 0
        %5065 = vmatpush1.bf16.msra.mxu0 0
        %5066 = vmatprep.subr.bf16.mxu0 0
        %5067 = vmatpush1.bf16.msra.mxu0 0
        %5068 = vmatprep.subr.bf16.mxu0 0
        %5069 = vmatpush1.bf16.msra.mxu0 0
        %5070 = vmatprep.subr.bf16.mxu0 %v4761
        %5071 = vmatpush1.bf16.msra.mxu0 %v4758
        %5072 = vmatprep.subr.bf16.mxu0 0
        %5073 = vmatpush2.bf16.msra.mxu0 0
        %5074 = vmatprep.subr.bf16.mxu0 0
        %5075 = vmatpush2.bf16.msra.mxu0 0
        %5076 = vmatprep.subr.bf16.mxu0 0
        %5077 = vmatpush2.bf16.msra.mxu0 0
        %5078 = vmatprep.subr.bf16.mxu0 0
        %5079 = vmatpush2.bf16.msra.mxu0 0
        %5080 = vmatprep.subr.bf16.mxu0 0
        %5081 = vmatpush2.bf16.msra.mxu0 0
        %5082 = vmatprep.subr.bf16.mxu0 0
        %5083 = vmatpush2.bf16.msra.mxu0 0
        %5084 = vmatprep.subr.bf16.mxu0 0
        %5085 = vmatpush2.bf16.msra.mxu0 0
        %5086 = vmatprep.subr.bf16.mxu0 0
        %5087 = vmatpush2.bf16.msra.mxu0 0
        %5088 = vmatprep.mubr.bf16.mxu0 0
        %5089 = vmatmul.mubr.bf16.gmra.mxu0 %v4754
        %v5090 = vpop.f32.mrf.mxu0
        %v5091 = vadd.f32 %v5050, %v5090
        %v5092 = vpop.f32.mrf.mxu0
        %v5093 = vadd.f32 %v5052, %v5092
        %v5094 = vpop.f32.mrf.mxu0
        %v5095 = vpop.f32.mrf.mxu0
        %5096 = vdwg.mxu0
        %5097 = vmatprep.subr.bf16.mxu0 %v3862
        %5098 = vmatpush1.bf16.msra.mxu0 %v3861
        %5099 = vmatprep.subr.bf16.mxu0 %v3858
        %5100 = vmatpush1.bf16.msra.mxu0 %v3857
        %5101 = vmatprep.subr.bf16.mxu0 %v3854
        %5102 = vmatpush1.bf16.msra.mxu0 %v3853
        %5103 = vmatprep.subr.bf16.mxu0 %v3850
        %5104 = vmatpush1.bf16.msra.mxu0 %v3849
        %5105 = vmatprep.subr.bf16.mxu0 %v3846
        %5106 = vmatpush1.bf16.msra.mxu0 %v3845
        %5107 = vmatprep.subr.bf16.mxu0 %v3842
        %5108 = vmatpush1.bf16.msra.mxu0 %v3841
        %5109 = vmatprep.subr.bf16.mxu0 %v3838
        %5110 = vmatpush1.bf16.msra.mxu0 %v3837
        %5111 = vmatprep.subr.bf16.mxu0 %v3834
        %5112 = vmatpush1.bf16.msra.mxu0 %v3833
        %5113 = vmatprep.subr.bf16.mxu0 %v3894
        %5114 = vmatpush2.bf16.msra.mxu0 %v3893
        %5115 = vmatprep.subr.bf16.mxu0 %v3890
        %5116 = vmatpush2.bf16.msra.mxu0 %v3889
        %5117 = vmatprep.subr.bf16.mxu0 %v3886
        %5118 = vmatpush2.bf16.msra.mxu0 %v3885
        %5119 = vmatprep.subr.bf16.mxu0 %v3882
        %5120 = vmatpush2.bf16.msra.mxu0 %v3881
        %5121 = vmatprep.subr.bf16.mxu0 %v3878
        %5122 = vmatpush2.bf16.msra.mxu0 %v3877
        %5123 = vmatprep.subr.bf16.mxu0 %v3874
        %5124 = vmatpush2.bf16.msra.mxu0 %v3873
        %5125 = vmatprep.subr.bf16.mxu0 %v3870
        %5126 = vmatpush2.bf16.msra.mxu0 %v3869
        %5127 = vmatprep.subr.bf16.mxu0 %v3866
        %5128 = vmatpush2.bf16.msra.mxu0 %v3865
        %5129 = vmatprep.mubr.bf16.mxu0 %v2016
        %5130 = vmatmul.mubr.bf16.gmra.mxu0 %v2015
        %v5131 = vpop.f32.mrf.mxu0
        %v5132 = vadd.f32 %v4743, %v5131
        %v5133 = vpop.f32.mrf.mxu0
        %v5134 = vadd.f32 %v4747, %v5133
        %v5135 = vpop.f32.mrf.mxu0
        %v5136 = vpop.f32.mrf.mxu0
        %5137 = vdwg.mxu0
        %5138 = vmatprep.subr.bf16.mxu0 %v3926
        %5139 = vmatpush1.bf16.msra.mxu0 %v3925
        %5140 = vmatprep.subr.bf16.mxu0 %v3922
        %5141 = vmatpush1.bf16.msra.mxu0 %v3921
        %5142 = vmatprep.subr.bf16.mxu0 %v3918
        %5143 = vmatpush1.bf16.msra.mxu0 %v3917
        %5144 = vmatprep.subr.bf16.mxu0 %v3914
        %5145 = vmatpush1.bf16.msra.mxu0 %v3913
        %5146 = vmatprep.subr.bf16.mxu0 %v3910
        %5147 = vmatpush1.bf16.msra.mxu0 %v3909
        %5148 = vmatprep.subr.bf16.mxu0 %v3906
        %5149 = vmatpush1.bf16.msra.mxu0 %v3905
        %5150 = vmatprep.subr.bf16.mxu0 %v3902
        %5151 = vmatpush1.bf16.msra.mxu0 %v3901
        %5152 = vmatprep.subr.bf16.mxu0 %v3898
        %5153 = vmatpush1.bf16.msra.mxu0 %v3897
        %5154 = vmatprep.subr.bf16.mxu0 %v3958
        %5155 = vmatpush2.bf16.msra.mxu0 %v3957
        %5156 = vmatprep.subr.bf16.mxu0 %v3954
        %5157 = vmatpush2.bf16.msra.mxu0 %v3953
        %5158 = vmatprep.subr.bf16.mxu0 %v3950
        %5159 = vmatpush2.bf16.msra.mxu0 %v3949
        %5160 = vmatprep.subr.bf16.mxu0 %v3946
        %5161 = vmatpush2.bf16.msra.mxu0 %v3945
        %5162 = vmatprep.subr.bf16.mxu0 %v3942
        %5163 = vmatpush2.bf16.msra.mxu0 %v3941
        %5164 = vmatprep.subr.bf16.mxu0 %v3938
        %5165 = vmatpush2.bf16.msra.mxu0 %v3937
        %5166 = vmatprep.subr.bf16.mxu0 %v3934
        %5167 = vmatpush2.bf16.msra.mxu0 %v3933
        %5168 = vmatprep.subr.bf16.mxu0 %v3930
        %5169 = vmatpush2.bf16.msra.mxu0 %v3929
        %5170 = vmatprep.mubr.bf16.mxu0 %v2018
        %5171 = vmatmul.mubr.bf16.gmra.mxu0 %v2017
        %v5172 = vpop.f32.mrf.mxu0
        %v5173 = vadd.f32 %v5132, %v5172
        %v5174 = vpop.f32.mrf.mxu0
        %v5175 = vadd.f32 %v5134, %v5174
        %v5176 = vpop.f32.mrf.mxu0
        %v5177 = vpop.f32.mrf.mxu0
        %5178 = vdwg.mxu0
        %5179 = vmatprep.subr.bf16.mxu0 %v3990
        %5180 = vmatpush1.bf16.msra.mxu0 %v3989
        %5181 = vmatprep.subr.bf16.mxu0 %v3986
        %5182 = vmatpush1.bf16.msra.mxu0 %v3985
        %5183 = vmatprep.subr.bf16.mxu0 %v3982
        %5184 = vmatpush1.bf16.msra.mxu0 %v3981
        %5185 = vmatprep.subr.bf16.mxu0 %v3978
        %5186 = vmatpush1.bf16.msra.mxu0 %v3977
        %5187 = vmatprep.subr.bf16.mxu0 %v3974
        %5188 = vmatpush1.bf16.msra.mxu0 %v3973
        %5189 = vmatprep.subr.bf16.mxu0 %v3970
        %5190 = vmatpush1.bf16.msra.mxu0 %v3969
        %5191 = vmatprep.subr.bf16.mxu0 %v3966
        %5192 = vmatpush1.bf16.msra.mxu0 %v3965
        %5193 = vmatprep.subr.bf16.mxu0 %v3962
        %5194 = vmatpush1.bf16.msra.mxu0 %v3961
        %5195 = vmatprep.subr.bf16.mxu0 %v4022
        %5196 = vmatpush2.bf16.msra.mxu0 %v4021
        %5197 = vmatprep.subr.bf16.mxu0 %v4018
        %5198 = vmatpush2.bf16.msra.mxu0 %v4017
        %5199 = vmatprep.subr.bf16.mxu0 %v4014
        %5200 = vmatpush2.bf16.msra.mxu0 %v4013
        %5201 = vmatprep.subr.bf16.mxu0 %v4010
        %5202 = vmatpush2.bf16.msra.mxu0 %v4009
        %5203 = vmatprep.subr.bf16.mxu0 %v4006
        %5204 = vmatpush2.bf16.msra.mxu0 %v4005
        %5205 = vmatprep.subr.bf16.mxu0 %v4002
        %5206 = vmatpush2.bf16.msra.mxu0 %v4001
        %5207 = vmatprep.subr.bf16.mxu0 %v3998
        %5208 = vmatpush2.bf16.msra.mxu0 %v3997
        %5209 = vmatprep.subr.bf16.mxu0 %v3994
        %5210 = vmatpush2.bf16.msra.mxu0 %v3993
        %5211 = vmatprep.mubr.bf16.mxu0 %v2020
        %5212 = vmatmul.mubr.bf16.gmra.mxu0 %v2019
        %v5213 = vpop.f32.mrf.mxu0
        %v5214 = vadd.f32 %v5173, %v5213
        %v5215 = vpop.f32.mrf.mxu0
        %v5216 = vadd.f32 %v5175, %v5215
        %v5217 = vpop.f32.mrf.mxu0
        %v5218 = vpop.f32.mrf.mxu0
        %5219 = vdwg.mxu0
        %5220 = vmatprep.subr.bf16.mxu0 %v4054
        %5221 = vmatpush1.bf16.msra.mxu0 %v4053
        %5222 = vmatprep.subr.bf16.mxu0 %v4050
        %5223 = vmatpush1.bf16.msra.mxu0 %v4049
        %5224 = vmatprep.subr.bf16.mxu0 %v4046
        %5225 = vmatpush1.bf16.msra.mxu0 %v4045
        %5226 = vmatprep.subr.bf16.mxu0 %v4042
        %5227 = vmatpush1.bf16.msra.mxu0 %v4041
        %5228 = vmatprep.subr.bf16.mxu0 %v4038
        %5229 = vmatpush1.bf16.msra.mxu0 %v4037
        %5230 = vmatprep.subr.bf16.mxu0 %v4034
        %5231 = vmatpush1.bf16.msra.mxu0 %v4033
        %5232 = vmatprep.subr.bf16.mxu0 %v4030
        %5233 = vmatpush1.bf16.msra.mxu0 %v4029
        %5234 = vmatprep.subr.bf16.mxu0 %v4026
        %5235 = vmatpush1.bf16.msra.mxu0 %v4025
        %5236 = vmatprep.subr.bf16.mxu0 %v4086
        %5237 = vmatpush2.bf16.msra.mxu0 %v4085
        %5238 = vmatprep.subr.bf16.mxu0 %v4082
        %5239 = vmatpush2.bf16.msra.mxu0 %v4081
        %5240 = vmatprep.subr.bf16.mxu0 %v4078
        %5241 = vmatpush2.bf16.msra.mxu0 %v4077
        %5242 = vmatprep.subr.bf16.mxu0 %v4074
        %5243 = vmatpush2.bf16.msra.mxu0 %v4073
        %5244 = vmatprep.subr.bf16.mxu0 %v4070
        %5245 = vmatpush2.bf16.msra.mxu0 %v4069
        %5246 = vmatprep.subr.bf16.mxu0 %v4066
        %5247 = vmatpush2.bf16.msra.mxu0 %v4065
        %5248 = vmatprep.subr.bf16.mxu0 %v4062
        %5249 = vmatpush2.bf16.msra.mxu0 %v4061
        %5250 = vmatprep.subr.bf16.mxu0 %v4058
        %5251 = vmatpush2.bf16.msra.mxu0 %v4057
        %5252 = vmatprep.mubr.bf16.mxu0 %v2022
        %5253 = vmatmul.mubr.bf16.gmra.mxu0 %v2021
        %v5254 = vpop.f32.mrf.mxu0
        %v5255 = vadd.f32 %v5214, %v5254
        %v5256 = vpop.f32.mrf.mxu0
        %v5257 = vadd.f32 %v5216, %v5256
        %v5258 = vpop.f32.mrf.mxu0
        %v5259 = vpop.f32.mrf.mxu0
        %5260 = vdwg.mxu0
        %5261 = vmatprep.subr.bf16.mxu0 %v4118
        %5262 = vmatpush1.bf16.msra.mxu0 %v4117
        %5263 = vmatprep.subr.bf16.mxu0 %v4114
        %5264 = vmatpush1.bf16.msra.mxu0 %v4113
        %5265 = vmatprep.subr.bf16.mxu0 %v4110
        %5266 = vmatpush1.bf16.msra.mxu0 %v4109
        %5267 = vmatprep.subr.bf16.mxu0 %v4106
        %5268 = vmatpush1.bf16.msra.mxu0 %v4105
        %5269 = vmatprep.subr.bf16.mxu0 %v4102
        %5270 = vmatpush1.bf16.msra.mxu0 %v4101
        %5271 = vmatprep.subr.bf16.mxu0 %v4098
        %5272 = vmatpush1.bf16.msra.mxu0 %v4097
        %5273 = vmatprep.subr.bf16.mxu0 %v4094
        %5274 = vmatpush1.bf16.msra.mxu0 %v4093
        %5275 = vmatprep.subr.bf16.mxu0 %v4090
        %5276 = vmatpush1.bf16.msra.mxu0 %v4089
        %5277 = vmatprep.subr.bf16.mxu0 %v4150
        %5278 = vmatpush2.bf16.msra.mxu0 %v4149
        %5279 = vmatprep.subr.bf16.mxu0 %v4146
        %5280 = vmatpush2.bf16.msra.mxu0 %v4145
        %5281 = vmatprep.subr.bf16.mxu0 %v4142
        %5282 = vmatpush2.bf16.msra.mxu0 %v4141
        %5283 = vmatprep.subr.bf16.mxu0 %v4138
        %5284 = vmatpush2.bf16.msra.mxu0 %v4137
        %5285 = vmatprep.subr.bf16.mxu0 %v4134
        %5286 = vmatpush2.bf16.msra.mxu0 %v4133
        %5287 = vmatprep.subr.bf16.mxu0 %v4130
        %5288 = vmatpush2.bf16.msra.mxu0 %v4129
        %5289 = vmatprep.subr.bf16.mxu0 %v4126
        %5290 = vmatpush2.bf16.msra.mxu0 %v4125
        %5291 = vmatprep.subr.bf16.mxu0 %v4122
        %5292 = vmatpush2.bf16.msra.mxu0 %v4121
        %5293 = vmatprep.mubr.bf16.mxu0 %v2024
        %5294 = vmatmul.mubr.bf16.gmra.mxu0 %v2023
        %v5295 = vpop.f32.mrf.mxu0
        %v5296 = vadd.f32 %v5255, %v5295
        %v5297 = vpop.f32.mrf.mxu0
        %v5298 = vadd.f32 %v5257, %v5297
        %v5299 = vpop.f32.mrf.mxu0
        %v5300 = vpop.f32.mrf.mxu0
        %5301 = vdwg.mxu0
        %5302 = vmatprep.subr.bf16.mxu0 %v4182
        %5303 = vmatpush1.bf16.msra.mxu0 %v4181
        %5304 = vmatprep.subr.bf16.mxu0 %v4178
        %5305 = vmatpush1.bf16.msra.mxu0 %v4177
        %5306 = vmatprep.subr.bf16.mxu0 %v4174
        %5307 = vmatpush1.bf16.msra.mxu0 %v4173
        %5308 = vmatprep.subr.bf16.mxu0 %v4170
        %5309 = vmatpush1.bf16.msra.mxu0 %v4169
        %5310 = vmatprep.subr.bf16.mxu0 %v4166
        %5311 = vmatpush1.bf16.msra.mxu0 %v4165
        %5312 = vmatprep.subr.bf16.mxu0 %v4162
        %5313 = vmatpush1.bf16.msra.mxu0 %v4161
        %5314 = vmatprep.subr.bf16.mxu0 %v4158
        %5315 = vmatpush1.bf16.msra.mxu0 %v4157
        %5316 = vmatprep.subr.bf16.mxu0 %v4154
        %5317 = vmatpush1.bf16.msra.mxu0 %v4153
        %5318 = vmatprep.subr.bf16.mxu0 %v4214
        %5319 = vmatpush2.bf16.msra.mxu0 %v4213
        %5320 = vmatprep.subr.bf16.mxu0 %v4210
        %5321 = vmatpush2.bf16.msra.mxu0 %v4209
        %5322 = vmatprep.subr.bf16.mxu0 %v4206
        %5323 = vmatpush2.bf16.msra.mxu0 %v4205
        %5324 = vmatprep.subr.bf16.mxu0 %v4202
        %5325 = vmatpush2.bf16.msra.mxu0 %v4201
        %5326 = vmatprep.subr.bf16.mxu0 %v4198
        %5327 = vmatpush2.bf16.msra.mxu0 %v4197
        %5328 = vmatprep.subr.bf16.mxu0 %v4194
        %5329 = vmatpush2.bf16.msra.mxu0 %v4193
        %5330 = vmatprep.subr.bf16.mxu0 %v4190
        %5331 = vmatpush2.bf16.msra.mxu0 %v4189
        %5332 = vmatprep.subr.bf16.mxu0 %v4186
        %5333 = vmatpush2.bf16.msra.mxu0 %v4185
        %5334 = vmatprep.mubr.bf16.mxu0 %v2026
        %5335 = vmatmul.mubr.bf16.gmra.mxu0 %v2025
        %v5336 = vpop.f32.mrf.mxu0
        %v5337 = vadd.f32 %v5296, %v5336
        %v5338 = vpop.f32.mrf.mxu0
        %v5339 = vadd.f32 %v5298, %v5338
        %v5340 = vpop.f32.mrf.mxu0
        %v5341 = vpop.f32.mrf.mxu0
        %5342 = vdwg.mxu0
        %5343 = vmatprep.subr.bf16.mxu0 %v4246
        %5344 = vmatpush1.bf16.msra.mxu0 %v4245
        %5345 = vmatprep.subr.bf16.mxu0 %v4242
        %5346 = vmatpush1.bf16.msra.mxu0 %v4241
        %5347 = vmatprep.subr.bf16.mxu0 %v4238
        %5348 = vmatpush1.bf16.msra.mxu0 %v4237
        %5349 = vmatprep.subr.bf16.mxu0 %v4234
        %5350 = vmatpush1.bf16.msra.mxu0 %v4233
        %5351 = vmatprep.subr.bf16.mxu0 %v4230
        %5352 = vmatpush1.bf16.msra.mxu0 %v4229
        %5353 = vmatprep.subr.bf16.mxu0 %v4226
        %5354 = vmatpush1.bf16.msra.mxu0 %v4225
        %5355 = vmatprep.subr.bf16.mxu0 %v4222
        %5356 = vmatpush1.bf16.msra.mxu0 %v4221
        %5357 = vmatprep.subr.bf16.mxu0 %v4218
        %5358 = vmatpush1.bf16.msra.mxu0 %v4217
        %5359 = vmatprep.subr.bf16.mxu0 %v4278
        %5360 = vmatpush2.bf16.msra.mxu0 %v4277
        %5361 = vmatprep.subr.bf16.mxu0 %v4274
        %5362 = vmatpush2.bf16.msra.mxu0 %v4273
        %5363 = vmatprep.subr.bf16.mxu0 %v4270
        %5364 = vmatpush2.bf16.msra.mxu0 %v4269
        %5365 = vmatprep.subr.bf16.mxu0 %v4266
        %5366 = vmatpush2.bf16.msra.mxu0 %v4265
        %5367 = vmatprep.subr.bf16.mxu0 %v4262
        %5368 = vmatpush2.bf16.msra.mxu0 %v4261
        %5369 = vmatprep.subr.bf16.mxu0 %v4258
        %5370 = vmatpush2.bf16.msra.mxu0 %v4257
        %5371 = vmatprep.subr.bf16.mxu0 %v4254
        %5372 = vmatpush2.bf16.msra.mxu0 %v4253
        %5373 = vmatprep.subr.bf16.mxu0 %v4250
        %5374 = vmatpush2.bf16.msra.mxu0 %v4249
        %5375 = vmatprep.mubr.bf16.mxu0 %v2028
        %5376 = vmatmul.mubr.bf16.gmra.mxu0 %v2027
        %v5377 = vpop.f32.mrf.mxu0
        %v5378 = vadd.f32 %v5337, %v5377
        %v5379 = vpop.f32.mrf.mxu0
        %v5380 = vadd.f32 %v5339, %v5379
        %v5381 = vpop.f32.mrf.mxu0
        %v5382 = vpop.f32.mrf.mxu0
        %5383 = vdwg.mxu0
        %5384 = vmatprep.subr.bf16.mxu0 0
        %5385 = vmatpush1.bf16.msra.mxu0 0
        %5386 = vmatprep.subr.bf16.mxu0 0
        %5387 = vmatpush1.bf16.msra.mxu0 0
        %5388 = vmatprep.subr.bf16.mxu0 0
        %5389 = vmatpush1.bf16.msra.mxu0 0
        %5390 = vmatprep.subr.bf16.mxu0 0
        %5391 = vmatpush1.bf16.msra.mxu0 0
        %5392 = vmatprep.subr.bf16.mxu0 0
        %5393 = vmatpush1.bf16.msra.mxu0 0
        %5394 = vmatprep.subr.bf16.mxu0 0
        %5395 = vmatpush1.bf16.msra.mxu0 0
        %5396 = vmatprep.subr.bf16.mxu0 0
        %5397 = vmatpush1.bf16.msra.mxu0 0
        %5398 = vmatprep.subr.bf16.mxu0 %v4767
        %5399 = vmatpush1.bf16.msra.mxu0 %v4764
        %5400 = vmatprep.subr.bf16.mxu0 0
        %5401 = vmatpush2.bf16.msra.mxu0 0
        %5402 = vmatprep.subr.bf16.mxu0 0
        %5403 = vmatpush2.bf16.msra.mxu0 0
        %5404 = vmatprep.subr.bf16.mxu0 0
        %5405 = vmatpush2.bf16.msra.mxu0 0
        %5406 = vmatprep.subr.bf16.mxu0 0
        %5407 = vmatpush2.bf16.msra.mxu0 0
        %5408 = vmatprep.subr.bf16.mxu0 0
        %5409 = vmatpush2.bf16.msra.mxu0 0
        %5410 = vmatprep.subr.bf16.mxu0 0
        %5411 = vmatpush2.bf16.msra.mxu0 0
        %5412 = vmatprep.subr.bf16.mxu0 0
        %5413 = vmatpush2.bf16.msra.mxu0 0
        %5414 = vmatprep.subr.bf16.mxu0 0
        %5415 = vmatpush2.bf16.msra.mxu0 0
        %5416 = vmatprep.mubr.bf16.mxu0 0
        %5417 = vmatmul.mubr.bf16.gmra.mxu0 %v4754
        %v5418 = vpop.f32.mrf.mxu0
        %v5419 = vadd.f32 %v5378, %v5418
        %v5420 = vpop.f32.mrf.mxu0
        %v5421 = vadd.f32 %v5380, %v5420
        %v5422 = vpop.f32.mrf.mxu0
        %v5423 = vpop.f32.mrf.mxu0
        %5424 = vdwg.mxu0
        %v5425 = vmax.f32 %v5091, 0.0
        %v5426 = vmax.f32 %v5093, 0.0
        %v5427 = vmax.f32 %v5419, 0.0
        %v5428 = vmax.f32 %v5421, 0.0
        %v5429 = vpack.c.bf16 %v5425, %v5425
        %v5430 = vpack.c.bf16 %v5426, %v5426
        %v5431 = vpack.c.bf16 %v5427, %v5427
        %v5432 = vpack.c.bf16 %v5428, %v5428
        %v5433 = vld [vmem:[%s5] sm:$0xf]
        %v5434 = vld [vmem:[%s5 + $0x4] sm:$0xf]
        %v5435 = vld [vmem:[%s5 + $0x8] sm:$0xf]
        %v5436 = vld [vmem:[%s5 + $0xc] sm:$0xf]
        %v5437 = vld [vmem:[%s5 + $0x10] sm:$0xf]
        %v5438 = vld [vmem:[%s5 + $0x14] sm:$0xf]
        %v5439 = vld [vmem:[%s5 + $0x18] sm:$0xf]
        %v5440 = vld [vmem:[%s5 + $0x1c] sm:$0xf]
        %v5441 = vld [vmem:[%s5 + $0x20] sm:$0xf]
        %v5442 = vld [vmem:[%s5 + $0x24] sm:$0xf]
        %v5443 = vld [vmem:[%s5 + $0x28] sm:$0xf]
        %v5444 = vld [vmem:[%s5 + $0x2c] sm:$0xf]
        %v5445 = vld [vmem:[%s5 + $0x30] sm:$0xf]
        %v5446 = vld [vmem:[%s5 + $0x34] sm:$0xf]
        %v5447 = vld [vmem:[%s5 + $0x38] sm:$0xf]
        %v5448 = vld [vmem:[%s5 + $0x3c] sm:$0xf]
        %v5449 = vld [vmem:[%s5 + $0x40] sm:$0xf]
        %v5450 = vld [vmem:[%s5 + $0x44] sm:$0xf]
        %v5451 = vld [vmem:[%s5 + $0x48] sm:$0xf]
        %v5452 = vld [vmem:[%s5 + $0x4c] sm:$0xf]
        %v5453 = vld [vmem:[%s5 + $0x50] sm:$0xf]
        %v5454 = vld [vmem:[%s5 + $0x54] sm:$0xf]
        %v5455 = vld [vmem:[%s5 + $0x58] sm:$0xf]
        %v5456 = vld [vmem:[%s5 + $0x5c] sm:$0xf]
        %v5457 = vld [vmem:[%s5 + $0x60] sm:$0xf]
        %v5458 = vld [vmem:[%s5 + $0x64] sm:$0xf]
        %v5459 = vld [vmem:[%s5 + $0x68] sm:$0xf]
        %v5460 = vld [vmem:[%s5 + $0x6c] sm:$0xf]
        %v5461 = vld [vmem:[%s5 + $0x70] sm:$0xf]
        %v5462 = vld [vmem:[%s5 + $0x74] sm:$0xf]
        %v5463 = vld [vmem:[%s5 + $0x78] sm:$0xf]
        %v5464 = vld [vmem:[%s5 + $0x7c] sm:$0xf]
        %v5465 = vld [vmem:[%s5 + $0x80] sm:$0xf]
        %v5466 = vld [vmem:[%s5 + $0x84] sm:$0xf]
        %v5467 = vld [vmem:[%s5 + $0x88] sm:$0xf]
        %v5468 = vld [vmem:[%s5 + $0x8c] sm:$0xf]
        %v5469 = vld [vmem:[%s5 + $0x90] sm:$0xf]
        %v5470 = vld [vmem:[%s5 + $0x94] sm:$0xf]
        %v5471 = vld [vmem:[%s5 + $0x98] sm:$0xf]
        %v5472 = vld [vmem:[%s5 + $0x9c] sm:$0xf]
        %v5473 = vld [vmem:[%s5 + $0xa0] sm:$0xf]
        %v5474 = vld [vmem:[%s5 + $0xa4] sm:$0xf]
        %v5475 = vld [vmem:[%s5 + $0xa8] sm:$0xf]
        %v5476 = vld [vmem:[%s5 + $0xac] sm:$0xf]
        %v5477 = vld [vmem:[%s5 + $0xb0] sm:$0xf]
        %v5478 = vld [vmem:[%s5 + $0xb4] sm:$0xf]
        %v5479 = vld [vmem:[%s5 + $0xb8] sm:$0xf]
        %v5480 = vld [vmem:[%s5 + $0xbc] sm:$0xf]
        %v5481 = vld [vmem:[%s5 + $0xc0] sm:$0xf]
        %v5482 = vld [vmem:[%s5 + $0xc4] sm:$0xf]
        %v5483 = vld [vmem:[%s6] sm:$0x1]
        %v5534 = vunpack.c.l.b16 %v5433
        %v5535 = vunpack.c.l.b16 %v5434
        %v5536 = vunpack.c.l.b16 %v5435
        %v5537 = vunpack.c.l.b16 %v5436
        %v5538 = vunpack.c.l.b16 %v5437
        %v5539 = vunpack.c.l.b16 %v5438
        %v5540 = vunpack.c.l.b16 %v5439
        %v5541 = vunpack.c.l.b16 %v5440
        %v5542 = vunpack.c.l.b16 %v5441
        %v5543 = vunpack.c.l.b16 %v5442
        %v5544 = vunpack.c.l.b16 %v5443
        %v5545 = vunpack.c.l.b16 %v5444
        %v5546 = vunpack.c.l.b16 %v5445
        %v5547 = vunpack.c.l.b16 %v5446
        %v5548 = vunpack.c.l.b16 %v5447
        %v5549 = vunpack.c.l.b16 %v5448
        %v5550 = vunpack.c.l.b16 %v5449
        %v5551 = vunpack.c.l.b16 %v5450
        %v5552 = vunpack.c.l.b16 %v5451
        %v5553 = vunpack.c.l.b16 %v5452
        %v5554 = vunpack.c.l.b16 %v5453
        %v5555 = vunpack.c.l.b16 %v5454
        %v5556 = vunpack.c.l.b16 %v5455
        %v5557 = vunpack.c.l.b16 %v5456
        %v5558 = vunpack.c.l.b16 %v5457
        %v5559 = vunpack.c.l.b16 %v5458
        %v5560 = vunpack.c.l.b16 %v5459
        %v5561 = vunpack.c.l.b16 %v5460
        %v5562 = vunpack.c.l.b16 %v5461
        %v5563 = vunpack.c.l.b16 %v5462
        %v5564 = vunpack.c.l.b16 %v5463
        %v5565 = vunpack.c.l.b16 %v5464
        %v5566 = vunpack.c.l.b16 %v5465
        %v5567 = vunpack.c.l.b16 %v5466
        %v5568 = vunpack.c.l.b16 %v5467
        %v5569 = vunpack.c.l.b16 %v5468
        %v5570 = vunpack.c.l.b16 %v5469
        %v5571 = vunpack.c.l.b16 %v5470
        %v5572 = vunpack.c.l.b16 %v5471
        %v5573 = vunpack.c.l.b16 %v5472
        %v5574 = vunpack.c.l.b16 %v5473
        %v5575 = vunpack.c.l.b16 %v5474
        %v5576 = vunpack.c.l.b16 %v5475
        %v5577 = vunpack.c.l.b16 %v5476
        %v5578 = vunpack.c.l.b16 %v5477
        %v5579 = vunpack.c.l.b16 %v5478
        %v5580 = vunpack.c.l.b16 %v5479
        %v5581 = vunpack.c.l.b16 %v5480
        %v5582 = vunpack.c.l.b16 %v5481
        %v5583 = vunpack.c.l.b16 %v5482
        %v5584 = vpack.c.b16 %v5535, %v5534
        %v5585 = vpack.c.b16 %v5537, %v5536
        %v5586 = vpack.c.b16 %v5539, %v5538
        %v5587 = vpack.c.b16 %v5541, %v5540
        %v5588 = vpack.c.b16 %v5543, %v5542
        %v5589 = vpack.c.b16 %v5545, %v5544
        %v5590 = vpack.c.b16 %v5547, %v5546
        %v5591 = vpack.c.b16 %v5549, %v5548
        %v5592 = vpack.c.b16 %v5551, %v5550
        %v5593 = vpack.c.b16 %v5553, %v5552
        %v5594 = vpack.c.b16 %v5555, %v5554
        %v5595 = vpack.c.b16 %v5557, %v5556
        %v5596 = vpack.c.b16 %v5559, %v5558
        %v5597 = vpack.c.b16 %v5561, %v5560
        %v5598 = vpack.c.b16 %v5563, %v5562
        %v5599 = vpack.c.b16 %v5565, %v5564
        %v5600 = vpack.c.b16 %v5567, %v5566
        %v5601 = vpack.c.b16 %v5569, %v5568
        %v5602 = vpack.c.b16 %v5571, %v5570
        %v5603 = vpack.c.b16 %v5573, %v5572
        %v5604 = vpack.c.b16 %v5575, %v5574
        %v5605 = vpack.c.b16 %v5577, %v5576
        %v5606 = vpack.c.b16 %v5579, %v5578
        %v5607 = vpack.c.b16 %v5581, %v5580
        %v5608 = vpack.c.b16 %v5583, %v5582
        %v5635 = vsel %vm2013, %v5432, 0
        %5637 = vmatprep.subr.bf16.mxu0 0
        %5638 = vmatpush1.bf16.msra.mxu0 %v5591
        %5639 = vmatprep.subr.bf16.mxu0 0
        %5640 = vmatpush1.bf16.msra.mxu0 %v5590
        %5641 = vmatprep.subr.bf16.mxu0 0
        %5642 = vmatpush1.bf16.msra.mxu0 %v5589
        %5643 = vmatprep.subr.bf16.mxu0 0
        %5644 = vmatpush1.bf16.msra.mxu0 %v5588
        %5645 = vmatprep.subr.bf16.mxu0 0
        %5646 = vmatpush1.bf16.msra.mxu0 %v5587
        %5647 = vmatprep.subr.bf16.mxu0 0
        %5648 = vmatpush1.bf16.msra.mxu0 %v5586
        %5649 = vmatprep.subr.bf16.mxu0 0
        %5650 = vmatpush1.bf16.msra.mxu0 %v5585
        %5651 = vmatprep.subr.bf16.mxu0 0
        %5652 = vmatpush1.bf16.msra.mxu0 %v5584
        %5653 = vmatprep.subr.bf16.mxu0 0
        %5654 = vmatpush2.bf16.msra.mxu0 %v5599
        %5655 = vmatprep.subr.bf16.mxu0 0
        %5656 = vmatpush2.bf16.msra.mxu0 %v5598
        %5657 = vmatprep.subr.bf16.mxu0 0
        %5658 = vmatpush2.bf16.msra.mxu0 %v5597
        %5659 = vmatprep.subr.bf16.mxu0 0
        %5660 = vmatpush2.bf16.msra.mxu0 %v5596
        %5661 = vmatprep.subr.bf16.mxu0 0
        %5662 = vmatpush2.bf16.msra.mxu0 %v5595
        %5663 = vmatprep.subr.bf16.mxu0 0
        %5664 = vmatpush2.bf16.msra.mxu0 %v5594
        %5665 = vmatprep.subr.bf16.mxu0 0
        %5666 = vmatpush2.bf16.msra.mxu0 %v5593
        %5667 = vmatprep.subr.bf16.mxu0 0
        %5668 = vmatpush2.bf16.msra.mxu0 %v5592
        %5669 = vmatprep.mubr.bf16.mxu0 %v5430
        %5670 = vmatmul.mubr.bf16.gmra.mxu0 %v5429
        %v5671 = vpop.f32.mrf.mxu0
        %v5672 = vadd.f32 %v5483, %v5671
        %v5673 = vpop.f32.mrf.mxu0
        %v5674 = vpop.f32.mrf.mxu0
        %v5675 = vpop.f32.mrf.mxu0
        %5676 = vdwg.mxu0
        %5677 = vmatprep.subr.bf16.mxu0 0
        %5678 = vmatpush1.bf16.msra.mxu0 %v5607
        %5679 = vmatprep.subr.bf16.mxu0 0
        %5680 = vmatpush1.bf16.msra.mxu0 %v5606
        %5681 = vmatprep.subr.bf16.mxu0 0
        %5682 = vmatpush1.bf16.msra.mxu0 %v5605
        %5683 = vmatprep.subr.bf16.mxu0 0
        %5684 = vmatpush1.bf16.msra.mxu0 %v5604
        %5685 = vmatprep.subr.bf16.mxu0 0
        %5686 = vmatpush1.bf16.msra.mxu0 %v5603
        %5687 = vmatprep.subr.bf16.mxu0 0
        %5688 = vmatpush1.bf16.msra.mxu0 %v5602
        %5689 = vmatprep.subr.bf16.mxu0 0
        %5690 = vmatpush1.bf16.msra.mxu0 %v5601
        %5691 = vmatprep.subr.bf16.mxu0 0
        %5692 = vmatpush1.bf16.msra.mxu0 %v5600
        %5693 = vmatprep.subr.bf16.mxu0 0
        %5694 = vmatpush2.bf16.msra.mxu0 0
        %5695 = vmatprep.subr.bf16.mxu0 0
        %5696 = vmatpush2.bf16.msra.mxu0 0
        %5697 = vmatprep.subr.bf16.mxu0 0
        %5698 = vmatpush2.bf16.msra.mxu0 0
        %5699 = vmatprep.subr.bf16.mxu0 0
        %5700 = vmatpush2.bf16.msra.mxu0 0
        %5701 = vmatprep.subr.bf16.mxu0 0
        %5702 = vmatpush2.bf16.msra.mxu0 0
        %5703 = vmatprep.subr.bf16.mxu0 0
        %5704 = vmatpush2.bf16.msra.mxu0 0
        %5705 = vmatprep.subr.bf16.mxu0 0
        %5706 = vmatpush2.bf16.msra.mxu0 0
        %5707 = vmatprep.subr.bf16.mxu0 0
        %5708 = vmatpush2.bf16.msra.mxu0 %v5608
        %5709 = vmatprep.mubr.bf16.mxu0 %v5635
        %5710 = vmatmul.mubr.bf16.gmra.mxu0 %v5431
        %v5711 = vpop.f32.mrf.mxu0
        %v5712 = vadd.f32 %v5672, %v5711
        %v5713 = vpop.f32.mrf.mxu0
        %v5714 = vpop.f32.mrf.mxu0
        %v5715 = vpop.f32.mrf.mxu0
        %5716 = vdwg.mxu0
        %v5717 = vmax.f32 %v5712, 0.0
        %v5718 = vpack.c.bf16 %v5717, %v5717
        %v5719 = vld [vmem:[%s7] sm:$0xf]
        %v5720 = vld [vmem:[%s7 + $0x4] sm:$0xf]
        %v5721 = vld [vmem:[%s7 + $0x8] sm:$0xf]
        %v5722 = vld [vmem:[%s7 + $0xc] sm:$0xf]
        %v5723 = vld [vmem:[%s7 + $0x10] sm:$0xf]
        %v5724 = vld [vmem:[%s7 + $0x14] sm:$0xf]
        %v5725 = vld [vmem:[%s7 + $0x18] sm:$0xf]
        %v5726 = vld [vmem:[%s7 + $0x1c] sm:$0x3]
        %v5727 = vld [vmem:[%s8] sm:$0x1]
        %v5736 = vunpack.c.l.b16 %v5719
        %v5737 = vunpack.c.l.b16 %v5720
        %v5738 = vunpack.c.l.b16 %v5721
        %v5739 = vunpack.c.l.b16 %v5722
        %v5740 = vunpack.c.l.b16 %v5723
        %v5741 = vunpack.c.l.b16 %v5724
        %v5742 = vunpack.c.l.b16 %v5725
        %v5743 = vunpack.c.l.b16 %v5726
        %v5744 = vpack.c.b16 %v5737, %v5736
        %v5745 = vpack.c.b16 %v5739, %v5738
        %v5746 = vpack.c.b16 %v5741, %v5740
        %v5747 = vpack.c.b16 %v5743, %v5742
        %vm5751 = vcmask 490496
        %v5753 = vsel %vm5751, %v5718, 0
        %v5756 = vsel %vm1552, %v5747, 0
        %5758 = vmatprep.subr.bf16.mxu0 0
        %5759 = vmatpush1.bf16.msra.mxu0 0
        %5760 = vmatprep.subr.bf16.mxu0 0
        %5761 = vmatpush1.bf16.msra.mxu0 0
        %5762 = vmatprep.subr.bf16.mxu0 0
        %5763 = vmatpush1.bf16.msra.mxu0 0
        %5764 = vmatprep.subr.bf16.mxu0 0
        %5765 = vmatpush1.bf16.msra.mxu0 0
        %5766 = vmatprep.subr.bf16.mxu0 0
        %5767 = vmatpush1.bf16.msra.mxu0 %v5756
        %5768 = vmatprep.subr.bf16.mxu0 0
        %5769 = vmatpush1.bf16.msra.mxu0 %v5746
        %5770 = vmatprep.subr.bf16.mxu0 0
        %5771 = vmatpush1.bf16.msra.mxu0 %v5745
        %5772 = vmatprep.subr.bf16.mxu0 0
        %5773 = vmatpush1.bf16.msra.mxu0 %v5744
        %5774 = vmatprep.subr.bf16.mxu0 0
        %5775 = vmatpush2.bf16.msra.mxu0 0
        %5776 = vmatprep.subr.bf16.mxu0 0
        %5777 = vmatpush2.bf16.msra.mxu0 0
        %5778 = vmatprep.subr.bf16.mxu0 0
        %5779 = vmatpush2.bf16.msra.mxu0 0
        %5780 = vmatprep.subr.bf16.mxu0 0
        %5781 = vmatpush2.bf16.msra.mxu0 0
        %5782 = vmatprep.subr.bf16.mxu0 0
        %5783 = vmatpush2.bf16.msra.mxu0 0
        %5784 = vmatprep.subr.bf16.mxu0 0
        %5785 = vmatpush2.bf16.msra.mxu0 0
        %5786 = vmatprep.subr.bf16.mxu0 0
        %5787 = vmatpush2.bf16.msra.mxu0 0
        %5788 = vmatprep.subr.bf16.mxu0 0
        %5789 = vmatpush2.bf16.msra.mxu0 0
        %5790 = vmatprep.mubr.bf16.mxu0 0
        %5791 = vmatmul.mubr.bf16.gmra.mxu0 %v5753
        %v5792 = vpop.f32.mrf.mxu0
        %v5793 = vadd.f32 %v5727, %v5792
        %v5794 = vpop.f32.mrf.mxu0
        %v5795 = vpop.f32.mrf.mxu0
        %v5796 = vpop.f32.mrf.mxu0
        %5797 = vdwg.mxu0
        %vm5798 = vcmask 8192
        %5799 = vst.msk [vmem:[%s324] sm:$0x1] %vm5798, %v5793
        %s5800 = sand.u32 %s225, 1
        %s5801 = scalar_lea.sflag [#allocation3], %s5800
        %s5802 = sand.u32 %s225, 1
        %s5803 = scalar_lea.vmem [#allocation2], %s5802
        // Predicated region
        $region57: #{binarynet_forward.1} parent=55 // pred_check
          %p5804 = pneg %p235
        $region58: #{binarynet_forward.1} parent=55 // pred_check_branch
          %5806 = sbr.rel (%p5804) target = $region60
        $region59: #{binarynet_forward.1} parent=55 // pred_region
          %s5808 = ssub.s32 16, 16
          %5809 = vsyncadd %s5801, %s5808
          %s5810 = smul.addr %s23, 16
          %s5811 = scalar_lea.hbm %s9, %s5810
          %s5813 = sshll.u32 %s5803, 4
          %s5814 = int_to_ptr.vmem [resolvable:$true] %s5813
          %5816 = dma.vmem_to_hbm [thread:$0]  %s5814, 16, %s5811, %s5801
        $region60: #{binarynet_forward.1} parent=55 // pred_fallthru
          _
      $region56: #{binarynet_forward.1} parent=5 // pred_fallthru
        _
      %p5817 = scmp.le.s32.totalorder 2, %s18
      // Predicated region
      $region61: #{binarynet_forward.1} parent=5 // pred_check
        %p5818 = pneg %p5817
      $region62: #{binarynet_forward.1} parent=5 // pred_check_branch
        %5820 = sbr.rel (%p5818) target = $region64
      $region63: #{binarynet_forward.1} parent=5 // pred_region
        %s5821 = ssub.s32 %s18, 2
        // Predicated region
        $region65: #{binarynet_forward.1} parent=63 // pred_check
          %p5822 = pneg %p241
        $region66: #{binarynet_forward.1} parent=63 // pred_check_branch
          %5824 = sbr.rel (%p5822) target = $region68
        $region67: #{binarynet_forward.1} parent=63 // pred_region
          %s5825 = sand.u32 %s226, 1
          %s5826 = scalar_lea.sflag [#allocation3], %s5825
          %s5827 = sand.u32 %s226, 1
          %s5828 = scalar_lea.vmem [#allocation2], %s5827
          %5829 = dma.done %s5826, 16
        $region68: #{binarynet_forward.1} parent=63 // pred_fallthru
          _
      $region64: #{binarynet_forward.1} parent=5 // pred_fallthru
        _
    $region6: #{binarynet_forward.1} parent=1 // loop_footer
      %s22 = sadd.s32 1, %s18
    $region7: #{binarynet_forward.1} parent=1 // loop_footer_branch
      %17 = sbr.rel target = $region3
    $region8: #{binarynet_forward.1} parent=1 // loop_exit
      _
    %5830 = vsyncpa [#allocation3], 1
    %s5831 = scalar_lea.sflag [#allocation3], 1
    %5832 = vsyncpa %s5831, 1

</llo_original>
